<compile_context>
chip_gen: v5e
topology: v5e:2x2
jax: 0.10.0
libtpu: 0.0.40
codegen_flags: <defaults>
</compile_context>

<pallas_src>
import functools

import jax
import jax.numpy as jnp
from jax import lax
from jax.experimental import pallas as pl
from jax.experimental.pallas import tpu as pltpu

NEG_SLOPE = 0.2
_HALO_ROWS = 8                      # halo fetched as one clamped 8-row block

_VMEM_LIMIT_CACHE = None


def _vmem_limit_bytes():
    """~3/4 of physical VMEM: ~96 MiB on v5e/v6e (128 MiB), ~48 MiB on v7x (64 MiB)."""
    global _VMEM_LIMIT_CACHE
    if _VMEM_LIMIT_CACHE is None:
        phys = 64 * 1024 * 1024
        try:
            info = pltpu.get_tpu_info()
            phys = int(getattr(info, "vmem_capacity_bytes", phys))
        except Exception:
            pass
        _VMEM_LIMIT_CACHE = max(32 * 1024 * 1024, (phys * 3) // 4)
    return _VMEM_LIMIT_CACHE


def _pick_row_tile(rows, row_bytes, n_batch, requested=None):
    """Largest multiple of 8 dividing `rows` within a temp-aware VMEM budget.

    In-kernel temporaries (haloed tile, shifted views, f32 accumulators) plus the
    double-buffered BlockSpecs are ~10-12x the raw input row tile, so the tile is
    budgeted at vmem_limit/12.  With N == 1 the tile is capped so the grid keeps
    >= 2 parallel steps for 2-TensorCore chips.
    """
    if requested is None:
        budget = _vmem_limit_bytes() // 12
        requested = budget // max(int(row_bytes), 1)
    requested = int(max(8, min(rows, requested)))
    if n_batch == 1 and rows >= 16:
        requested = max(8, min(requested, rows // 2))
    rt = 8
    for cand in range(8, requested + 1, 8):
        if rows % cand == 0:
            rt = cand
    return rt


def _fold_main_weight(wt):
    """wt: (3, 3, I, O) taps (ky, kx, in, out) -> dense (3, 2I, 2O) folded weight.

    Rows    : [input even lane x[2k] | input odd lane x[2k+1]]
    Columns : [even output pixel 2k  | odd output pixel 2k+1]
    Even output uses taps kx=1 (from x[2k]) and kx=2 (from x[2k+1]);
    odd  output uses taps kx=0 (from x[2k]) and kx=1 (from x[2k+1]).
    The remaining border taps (x[2k-1] -> even, x[2k+2] -> odd) are handled by
    two separate dense (I, O) matmuls; no zero blocks anywhere.
    """
    top = jnp.concatenate([wt[:, 1], wt[:, 0]], axis=-1)   # from x[2k]
    bot = jnp.concatenate([wt[:, 2], wt[:, 1]], axis=-1)   # from x[2k+1]
    return jnp.concatenate([top, bot], axis=-2)


# ---------------------------------------------------------------------------
# Kernel A: conv3x3(Cin->Cin) + bias + leaky_relu + 2x2 mean pool, and pool(x).
# Input is width-folded: xf[n, h, wo, :] = [x[n, h, 2wo, :], x[n, h, 2wo+1, :]].
# Outputs are the (unfolded) pooled tensors (N, H/2, W/2, Cin).
# ---------------------------------------------------------------------------
def _conv1_pool_kernel(xm_ref, xt_ref, xb_ref, wm_ref, wl_ref, wr_ref, b_ref,
                       out_ref, xd_ref, *, RT, THo, Wf, C):
    i = pl.program_id(1)
    nrt = pl.num_programs(1)
    C2 = 2 * C

    xm = xm_ref[0]                                              # (RT, Wf, 2C) bf16
    top = xt_ref[0, _HALO_ROWS - 1]                             # row i*RT - 1
    top = jnp.where(i == 0, jnp.zeros_like(top), top)
    bot = xb_ref[0, 0]                                          # row (i+1)*RT
    bot = jnp.where(i == nrt - 1, jnp.zeros_like(bot), bot)
    full = jnp.concatenate([top[None], xm, bot[None]], axis=0)  # (RT+2, Wf, 2C)

    # Single-pixel width-shifted neighbours (zero at the image border).
    zc = jnp.zeros((RT + 2, 1, C), full.dtype)
    prev_odd = jnp.concatenate([zc, full[:, :Wf - 1, C:]], axis=1)   # x[2wo-1]
    next_even = jnp.concatenate([full[:, 1:, :C], zc], axis=1)       # x[2wo+2]

    full_f = full.reshape((RT + 2) * Wf, C2)
    prev_f = prev_odd.reshape((RT + 2) * Wf, C)
    next_f = next_even.reshape((RT + 2) * Wf, C)

    acc_e = jnp.zeros((RT * Wf, C), jnp.float32)    # even output columns (2wo)
    acc_o = jnp.zeros((RT * Wf, C), jnp.float32)    # odd  output columns (2wo+1)
    for dy in range(3):                              # dense matmuls, no zero blocks
        lo, hi = dy * Wf, (dy + RT) * Wf
        m = jnp.dot(full_f[lo:hi], wm_ref[dy], preferred_element_type=jnp.float32)
        acc_e = acc_e + m[:, :C] + jnp.dot(prev_f[lo:hi], wl_ref[dy],
                                           preferred_element_type=jnp.float32)
        acc_o = acc_o + m[:, C:] + jnp.dot(next_f[lo:hi], wr_ref[dy],
                                           preferred_element_type=jnp.float32)

    b = b_ref[...]                                   # (1, C) f32
    y_e = acc_e + b
    y_e = jnp.where(y_e >= 0, y_e, NEG_SLOPE * y_e)  # leaky_relu(0.2), pre-pool
    y_o = acc_o + b
    y_o = jnp.where(y_o >= 0, y_o, NEG_SLOPE * y_o)

    # 2x2 mean pool: columns 2wo / 2wo+1 are exactly the even/odd pair; rows via
    # a free major-axis split (RT is even).
    ph = (y_e + y_o).reshape(THo, 2, Wf, C)
    pooled = (ph[:, 0] + ph[:, 1]) * 0.25            # (THo, Wf, C)
    out_ref[...] = pooled[None].astype(out_ref.dtype)

    # pool(x) for the skip branch (x already in VMEM — no extra HBM read).
    xh = xm[:, :, :C].astype(jnp.float32) + xm[:, :, C:].astype(jnp.float32)
    xh = xh.reshape(THo, 2, Wf, C)
    xd = (xh[:, 0] + xh[:, 1]) * 0.25
    xd_ref[...] = xd[None].astype(xd_ref.dtype)


def conv1_lrelu_pool(xf, wm, wl, wr, b, *, row_tile=None):
    """xf: width-folded bf16 input (N, H, W/2, 2*Cin).
    Returns (pool(lrelu(conv1(x)+b)), pool(x)), each (N, H/2, W/2, Cin) bf16."""
    N, H, Wf, C2 = xf.shape
    C = C2 // 2
    Ho = H // 2
    RT = _pick_row_tile(H, Wf * C2 * 2, N, row_tile)
    THo = RT // 2
    nrt = H // RT
    RB = RT // _HALO_ROWS
    nhb = H // _HALO_ROWS

    kernel = functools.partial(_conv1_pool_kernel, RT=RT, THo=THo, Wf=Wf, C=C)
    out_sds = jax.ShapeDtypeStruct((N, Ho, Wf, C), jnp.bfloat16)
    flops = 2 * 9 * N * H * (2 * Wf) * C * C
    bytes_acc = int(xf.size * 2 + 2 * N * Ho * Wf * C * 2
                    + (wm.size + wl.size + wr.size) * 2 + b.size * 4)

    return pl.pallas_call(
        kernel,
        out_shape=(out_sds, out_sds),
        grid=(N, nrt),
        in_specs=[
            pl.BlockSpec((1, RT, Wf, C2), lambda n, i: (n, i, 0, 0)),
            pl.BlockSpec((1, _HALO_ROWS, Wf, C2),
                         lambda n, i: (n, jnp.maximum(i * RB - 1, 0), 0, 0)),
            pl.BlockSpec((1, _HALO_ROWS, Wf, C2),
                         lambda n, i: (n, jnp.minimum((i + 1) * RB, nhb - 1), 0, 0)),
            pl.BlockSpec((3, C2, C2), lambda n, i: (0, 0, 0)),
            pl.BlockSpec((3, C, C), lambda n, i: (0, 0, 0)),
            pl.BlockSpec((3, C, C), lambda n, i: (0, 0, 0)),
            pl.BlockSpec((1, C), lambda n, i: (0, 0)),
        ],
        out_specs=(
            pl.BlockSpec((1, THo, Wf, C), lambda n, i: (n, i, 0, 0)),
            pl.BlockSpec((1, THo, Wf, C), lambda n, i: (n, i, 0, 0)),
        ),
        compiler_params=pltpu.CompilerParams(
            dimension_semantics=("parallel", "parallel"),
            vmem_limit_bytes=_vmem_limit_bytes()),
        cost_estimate=pl.CostEstimate(flops=flops, transcendentals=0,
                                      bytes_accessed=bytes_acc),
    )(xf, xf, xf, wm, wl, wr, b)


# ---------------------------------------------------------------------------
# Kernel B: conv3x3(Cin->Cout) + bias + leaky_relu + 1x1 skip conv + add.
# Consumes the width-folded views of kernel A's outputs (free HBM reshape) and
# writes a width-folded, lane-dense (2*Cout) bf16 output.
# ---------------------------------------------------------------------------
def _conv2_skip_kernel(d_ref, dt_ref, db_ref, xd_ref, wm_ref, wl_ref, wr_ref,
                       b_ref, ws_ref, o_ref, *, RT, Wof, C, Co):
    j = pl.program_id(1)
    nrt = pl.num_programs(1)
    C2 = 2 * C

    d = d_ref[0]                                                # (RT, Wof, 2C) bf16
    top = dt_ref[0, _HALO_ROWS - 1]
    top = jnp.where(j == 0, jnp.zeros_like(top), top)
    bot = db_ref[0, 0]
    bot = jnp.where(j == nrt - 1, jnp.zeros_like(bot), bot)
    full = jnp.concatenate([top[None], d, bot[None]], axis=0)   # (RT+2, Wof, 2C)

    zc = jnp.zeros((RT + 2, 1, C), full.dtype)
    prev_odd = jnp.concatenate([zc, full[:, :Wof - 1, C:]], axis=1)
    next_even = jnp.concatenate([full[:, 1:, :C], zc], axis=1)

    full_f = full.reshape((RT + 2) * Wof, C2)
    prev_f = prev_odd.reshape((RT + 2) * Wof, C)
    next_f = next_even.reshape((RT + 2) * Wof, C)

    acc_e = jnp.zeros((RT * Wof, Co), jnp.float32)
    acc_o = jnp.zeros((RT * Wof, Co), jnp.float32)
    for dy in range(3):
        lo, hi = dy * Wof, (dy + RT) * Wof
        m = jnp.dot(full_f[lo:hi], wm_ref[dy], preferred_element_type=jnp.float32)
        acc_e = acc_e + m[:, :Co] + jnp.dot(prev_f[lo:hi], wl_ref[dy],
                                            preferred_element_type=jnp.float32)
        acc_o = acc_o + m[:, Co:] + jnp.dot(next_f[lo:hi], wr_ref[dy],
                                            preferred_element_type=jnp.float32)

    b = b_ref[...]                                               # (1, Co) f32
    y_e = acc_e + b
    y_e = jnp.where(y_e >= 0, y_e, NEG_SLOPE * y_e)
    y_o = acc_o + b
    y_o = jnp.where(y_o >= 0, y_o, NEG_SLOPE * y_o)

    # 1x1 skip conv on pooled x (folded even/odd halves) + residual add.
    xd = xd_ref[0]                                               # (RT, Wof, 2C)
    ws = ws_ref[...]
    skip_e = jnp.dot(xd[:, :, :C].reshape(RT * Wof, C), ws,
                     preferred_element_type=jnp.float32)
    skip_o = jnp.dot(xd[:, :, C:].reshape(RT * Wof, C), ws,
                     preferred_element_type=jnp.float32)

    out_e = (y_e + skip_e).reshape(RT, Wof, Co)
    out_o = (y_o + skip_o).reshape(RT, Wof, Co)
    o_ref[...] = jnp.concatenate([out_e, out_o], axis=-1)[None].astype(o_ref.dtype)


def conv2_lrelu_skip_add(d_f, xd_f, wm2, wl2, wr2, b2, ws, *, row_tile=None):
    """d_f, xd_f: width-folded (N, H/2, W/4, 2*Cin) bf16.
    Returns width-folded (N, H/2, W/4, 2*Cout) bf16."""
    N, Ho, Wof, C2 = d_f.shape
    C = C2 // 2
    Co = ws.shape[-1]
    Co2 = 2 * Co
    RT = _pick_row_tile(Ho, Wof * C2 * 2, N, row_tile)
    nrt = Ho // RT
    RB = RT // _HALO_ROWS
    nhb = Ho // _HALO_ROWS

    kernel = functools.partial(_conv2_skip_kernel, RT=RT, Wof=Wof, C=C, Co=Co)
    flops = 2 * 10 * N * Ho * (2 * Wof) * C * Co          # 9 conv taps + 1x1 skip
    bytes_acc = int(d_f.size * 2 + xd_f.size * 2 + N * Ho * Wof * Co2 * 2
                    + (wm2.size + wl2.size + wr2.size + ws.size) * 2 + b2.size * 4)

    return pl.pallas_call(
        kernel,
        out_shape=jax.ShapeDtypeStruct((N, Ho, Wof, Co2), jnp.bfloat16),
        grid=(N, nrt),
        in_specs=[
            pl.BlockSpec((1, RT, Wof, C2), lambda n, j: (n, j, 0, 0)),
            pl.BlockSpec((1, _HALO_ROWS, Wof, C2),
                         lambda n, j: (n, jnp.maximum(j * RB - 1, 0), 0, 0)),
            pl.BlockSpec((1, _HALO_ROWS, Wof, C2),
                         lambda n, j: (n, jnp.minimum((j + 1) * RB, nhb - 1), 0, 0)),
            pl.BlockSpec((1, RT, Wof, C2), lambda n, j: (n, j, 0, 0)),
            pl.BlockSpec((3, C2, Co2), lambda n, j: (0, 0, 0)),
            pl.BlockSpec((3, C, Co), lambda n, j: (0, 0, 0)),
            pl.BlockSpec((3, C, Co), lambda n, j: (0, 0, 0)),
            pl.BlockSpec((1, Co), lambda n, j: (0, 0)),
            pl.BlockSpec((C, Co), lambda n, j: (0, 0)),
        ],
        out_specs=pl.BlockSpec((1, RT, Wof, Co2), lambda n, j: (n, j, 0, 0)),
        compiler_params=pltpu.CompilerParams(
            dimension_semantics=("parallel", "parallel"),
            vmem_limit_bytes=_vmem_limit_bytes()),
        cost_estimate=pl.CostEstimate(flops=flops, transcendentals=0,
                                      bytes_accessed=bytes_acc),
    )(d_f, d_f, d_f, xd_f, wm2, wl2, wr2, b2, ws)


# ---------------------------------------------------------------------------
# Module wrapper (deterministic synthetic parameters, PyTorch OIHW shapes)
# ---------------------------------------------------------------------------
class ResBlockPallas:
    def __init__(self, in_channels, out_channels, mode='down', key=None,
                 row_tile=None):
        key = jax.random.PRNGKey(0) if key is None else key
        k1, k2, k3, k4, k5 = jax.random.split(key, 5)
        self.in_channels = in_channels
        self.out_channels = out_channels
        self.row_tile = row_tile
        # PyTorch nn.Conv2d parameter shapes (OIHW weights, (O,) bias), f32 masters.
        self.w1 = 0.1 * jax.random.normal(k1, (in_channels, in_channels, 3, 3), jnp.float32)
        self.b1 = 0.1 * jax.random.normal(k2, (in_channels,), jnp.float32)
        self.w2 = 0.1 * jax.random.normal(k3, (out_channels, in_channels, 3, 3), jnp.float32)
        self.b2 = 0.1 * jax.random.normal(k4, (out_channels,), jnp.float32)
        self.wskip = 0.1 * jax.random.normal(k5, (out_channels, in_channels, 1, 1), jnp.float32)

        if mode == 'down':
            self.scale_factor = 0.5
        elif mode == 'up':
            # TODO(synk): bilinear 2x upsampling (align_corners=False) path not implemented.
            raise NotImplementedError("only mode='down' is implemented in Pallas")
        else:
            raise ValueError(mode)

        C, Co = in_channels, out_channels
        w1t = jnp.transpose(self.w1, (2, 3, 1, 0))            # (ky, kx, I, O)
        w2t = jnp.transpose(self.w2, (2, 3, 1, 0))
        # Dense width-folded weights (no structurally-zero blocks).
        self.wm1 = _fold_main_weight(w1t).astype(jnp.bfloat16)   # (3, 2C, 2C)
        self.wl1 = w1t[:, 0].astype(jnp.bfloat16)                 # x[2k-1] -> even out
        self.wr1 = w1t[:, 2].astype(jnp.bfloat16)                 # x[2k+2] -> odd out
        self.b1k = self.b1.reshape(1, C)                          # f32
        self.wm2 = _fold_main_weight(w2t).astype(jnp.bfloat16)   # (3, 2C, 2Co)
        self.wl2 = w2t[:, 0].astype(jnp.bfloat16)
        self.wr2 = w2t[:, 2].astype(jnp.bfloat16)
        self.b2k = self.b2.reshape(1, Co)                         # f32
        self.ws_k = jnp.transpose(self.wskip[:, :, 0, 0], (1, 0)).astype(jnp.bfloat16)

    def __call__(self, x_nchw):
        N, C, H, W = x_nchw.shape
        if C != self.in_channels:
            raise ValueError("channel mismatch")
        if H % 16 != 0 or W % 4 != 0 or W < 8:
            raise ValueError("ResBlockPallas requires H % 16 == 0, W % 4 == 0, W >= 8")
        Co = self.out_channels
        # Boundary glue: bf16 cast before the relayout, then a free width fold.
        x = jnp.transpose(x_nchw.astype(jnp.bfloat16), (0, 2, 3, 1))   # NHWC bf16
        xf = x.reshape(N, H, W // 2, 2 * C)                             # free fold
        out1, xd = conv1_lrelu_pool(xf, self.wm1, self.wl1, self.wr1, self.b1k,
                                    row_tile=self.row_tile)
        # Free (contiguous) folded views of the pooled intermediates.
        out1f = out1.reshape(N, H // 2, W // 4, 2 * C)
        xdf = xd.reshape(N, H // 2, W // 4, 2 * C)
        outf = conv2_lrelu_skip_add(out1f, xdf, self.wm2, self.wl2, self.wr2,
                                    self.b2k, self.ws_k, row_tile=self.row_tile)
        out = outf.reshape(N, H // 2, W // 2, Co)                       # free unfold
        out = jnp.transpose(out, (0, 3, 1, 2))                          # NCHW (bf16)
        return out.astype(jnp.float32)


# ---------------------------------------------------------------------------
# Pure-JAX reference (NCHW, mirrors the PyTorch forward) for validation.
# ---------------------------------------------------------------------------
def ref_resblock(x, w1, b1, w2, b2, wskip):
    def conv(z, w, b=None):
        y = lax.conv_general_dilated(z, w, (1, 1), 'SAME',
                                     dimension_numbers=('NCHW', 'OIHW', 'NCHW'))
        if b is not None:
            y = y + b[None, :, None, None]
        return y

    def lrelu(y):
        return jnp.where(y >= 0, y, NEG_SLOPE * y)

    def down(y):  # bilinear x0.5, align_corners=False == 2x2 mean
        N, C, H, W = y.shape
        return y.reshape(N, C, H // 2, 2, W // 2, 2).mean(axis=(3, 5))

    out = lrelu(conv(x, w1, b1))
    out = down(out)
    out = lrelu(conv(out, w2, b2))
    skip = conv(down(x), wskip)
    return out + skip


if __name__ == "__main__":
    N, Cin, Cout = 2, 4, 8
    q = lambda a: a.astype(jnp.bfloat16).astype(jnp.float32)

    # Case 1: 16x32 spatial, auto row tile (single tile per image).
    x1 = jax.random.normal(jax.random.PRNGKey(0), (N, Cin, 16, 32), jnp.float32)
    blk = ResBlockPallas(Cin, Cout, mode='down', key=jax.random.PRNGKey(42))
    y1 = blk(x1)
    jax.block_until_ready(y1)
    assert y1.shape == (N, Cout, 8, 16), y1.shape
    y1_ref = ref_resblock(q(x1), q(blk.w1), blk.b1, q(blk.w2), blk.b2, q(blk.wskip))
    if not bool(jnp.allclose(y1, y1_ref, atol=3e-2, rtol=3e-2)):
        err = float(jnp.max(jnp.abs(y1 - y1_ref)))
        raise AssertionError(f"Pallas/reference mismatch (16x32): max abs err = {err}")

    # Case 2: 32x32 with forced row_tile=8 to exercise the multi-tile halo path.
    x2 = jax.random.normal(jax.random.PRNGKey(1), (N, Cin, 32, 32), jnp.float32)
    blk8 = ResBlockPallas(Cin, Cout, mode='down', key=jax.random.PRNGKey(42),
                          row_tile=8)
    y2 = blk8(x2)
    jax.block_until_ready(y2)
    assert y2.shape == (N, Cout, 16, 16), y2.shape
    y2_ref = ref_resblock(q(x2), q(blk8.w1), blk8.b1, q(blk8.w2), blk8.b2,
                          q(blk8.wskip))
    if not bool(jnp.allclose(y2, y2_ref, atol=3e-2, rtol=3e-2)):
        err = float(jnp.max(jnp.abs(y2 - y2_ref)))
        raise AssertionError(f"Pallas/reference mismatch (32x32, rt=8): max abs err = {err}")

    print("KERNEL_OK")
</pallas_src>

<mosaic_0001>
module attributes {stable_mosaic.version = 11 : i64} {
  func.func @_conv1_pool_kernel(%arg0: i32, %arg1: i32, %arg2: memref<1x16x16x8xbf16, #tpu.memory_space<vmem>>, %arg3: memref<1x8x16x8xbf16, #tpu.memory_space<vmem>>, %arg4: memref<1x8x16x8xbf16, #tpu.memory_space<vmem>>, %arg5: memref<3x8x8xbf16, #tpu.memory_space<vmem>>, %arg6: memref<3x4x4xbf16, #tpu.memory_space<vmem>>, %arg7: memref<3x4x4xbf16, #tpu.memory_space<vmem>>, %arg8: memref<1x4xf32, #tpu.memory_space<vmem>>, %arg9: memref<1x8x16x4xbf16, #tpu.memory_space<vmem>>, %arg10: memref<1x8x16x4xbf16, #tpu.memory_space<vmem>>) attributes {dimension_semantics = [#tpu.dimension_semantics<parallel>, #tpu.dimension_semantics<parallel>], iteration_bounds = array<i64: 2, 1>, scalar_prefetch = 0 : i64, scratch_operands = 0 : i64, tpu.core_type = #tpu.core_type<tc>, window_params = [{transform_indices = @transform_0, window_bounds = array<i64: 1, 16, 16, 8>}, {transform_indices = @transform_1, window_bounds = array<i64: 1, 8, 16, 8>}, {transform_indices = @transform_2, window_bounds = array<i64: 1, 8, 16, 8>}, {pipeline_mode = #tpu.pipeline_mode<synchronous>, transform_indices = @transform_3, window_bounds = array<i64: 3, 8, 8>}, {pipeline_mode = #tpu.pipeline_mode<synchronous>, transform_indices = @transform_4, window_bounds = array<i64: 3, 4, 4>}, {pipeline_mode = #tpu.pipeline_mode<synchronous>, transform_indices = @transform_5, window_bounds = array<i64: 3, 4, 4>}, {pipeline_mode = #tpu.pipeline_mode<synchronous>, transform_indices = @transform_6, window_bounds = array<i64: 1, 4>}, {transform_indices = @transform_7, window_bounds = array<i64: 1, 8, 16, 4>}, {transform_indices = @transform_8, window_bounds = array<i64: 1, 8, 16, 4>}]} {
    %c0 = arith.constant 0 : index
    %c0_0 = arith.constant 0 : index
    %c0_1 = arith.constant 0 : index
    %c0_2 = arith.constant 0 : index
    %0 = vector.load %arg2[%c0, %c0_0, %c0_1, %c0_2] : memref<1x16x16x8xbf16, #tpu.memory_space<vmem>>, vector<1x16x16x8xbf16>
    %1 = vector.shape_cast %0 : vector<1x16x16x8xbf16> to vector<16x16x8xbf16>
    %c0_3 = arith.constant 0 : index
    %c7 = arith.constant 7 : index
    %c0_4 = arith.constant 0 : index
    %c0_5 = arith.constant 0 : index
    %2 = vector.load %arg3[%c0_3, %c7, %c0_4, %c0_5] : memref<1x8x16x8xbf16, #tpu.memory_space<vmem>>, vector<1x1x16x8xbf16>
    %3 = vector.shape_cast %2 : vector<1x1x16x8xbf16> to vector<16x8xbf16>
    %c0_i32 = arith.constant 0 : i32
    %4 = arith.cmpi eq, %arg1, %c0_i32 : i32
    %cst = arith.constant 0.000000e+00 : bf16
    %5 = vector.broadcast %cst : bf16 to vector<16x8xbf16>
    %6 = arith.select %4, %5, %3 : vector<16x8xbf16>
    %c0_6 = arith.constant 0 : index
    %c0_7 = arith.constant 0 : index
    %c0_8 = arith.constant 0 : index
    %c0_9 = arith.constant 0 : index
    %7 = vector.load %arg4[%c0_6, %c0_7, %c0_8, %c0_9] : memref<1x8x16x8xbf16, #tpu.memory_space<vmem>>, vector<1x1x16x8xbf16>
    %8 = vector.shape_cast %7 : vector<1x1x16x8xbf16> to vector<16x8xbf16>
    %c0_i32_10 = arith.constant 0 : i32
    %9 = arith.cmpi eq, %arg1, %c0_i32_10 : i32
    %cst_11 = arith.constant 0.000000e+00 : bf16
    %10 = vector.broadcast %cst_11 : bf16 to vector<16x8xbf16>
    %11 = arith.select %9, %10, %8 : vector<16x8xbf16>
    %12 = vector.shape_cast %6 : vector<16x8xbf16> to vector<1x16x8xbf16>
    %13 = vector.shape_cast %11 : vector<16x8xbf16> to vector<1x16x8xbf16>
    %14 = tpu.concatenate %12, %1, %13 in 0 : vector<1x16x8xbf16>, vector<16x16x8xbf16>, vector<1x16x8xbf16> -> vector<18x16x8xbf16>
    %cst_12 = arith.constant 0.000000e+00 : bf16
    %15 = vector.broadcast %cst_12 : bf16 to vector<18x1x4xbf16>
    %16 = vector.extract_strided_slice %14 {offsets = [0, 0, 4], sizes = [18, 15, 4], strides = [1, 1, 1]} : vector<18x16x8xbf16> to vector<18x15x4xbf16>
    %17 = tpu.concatenate %15, %16 in 1 : vector<18x1x4xbf16>, vector<18x15x4xbf16> -> vector<18x16x4xbf16>
    %18 = vector.extract_strided_slice %14 {offsets = [0, 1, 0], sizes = [18, 15, 4], strides = [1, 1, 1]} : vector<18x16x8xbf16> to vector<18x15x4xbf16>
    %19 = tpu.concatenate %18, %15 in 1 : vector<18x15x4xbf16>, vector<18x1x4xbf16> -> vector<18x16x4xbf16>
    %20 = vector.shape_cast %14 : vector<18x16x8xbf16> to vector<288x8xbf16>
    %21 = vector.shape_cast %17 : vector<18x16x4xbf16> to vector<288x4xbf16>
    %22 = vector.shape_cast %19 : vector<18x16x4xbf16> to vector<288x4xbf16>
    %cst_13 = arith.constant 0.000000e+00 : f32
    %23 = vector.broadcast %cst_13 : f32 to vector<256x4xf32>
    %cst_14 = arith.constant 0.000000e+00 : f32
    %24 = vector.broadcast %cst_14 : f32 to vector<256x4xf32>
    %25 = vector.extract_strided_slice %20 {offsets = [0, 0], sizes = [256, 8], strides = [1, 1]} : vector<288x8xbf16> to vector<256x8xbf16>
    %c0_15 = arith.constant 0 : index
    %c0_16 = arith.constant 0 : index
    %c0_17 = arith.constant 0 : index
    %26 = vector.load %arg5[%c0_15, %c0_16, %c0_17] : memref<3x8x8xbf16, #tpu.memory_space<vmem>>, vector<1x8x8xbf16>
    %27 = vector.shape_cast %26 : vector<1x8x8xbf16> to vector<8x8xbf16>
    %cst_18 = arith.constant dense<0.000000e+00> : vector<256x8xf32>
    %28 = tpu.matmul %25, %27, %cst_18 {dimension_numbers = #tpu.dot_dimension_numbers<[1], [0], [0], [1], [0, 0, 1, 1], [], []>} : vector<256x8xbf16>, vector<8x8xbf16>, vector<256x8xf32> -> vector<256x8xf32>
    %29 = vector.extract_strided_slice %28 {offsets = [0, 0], sizes = [256, 4], strides = [1, 1]} : vector<256x8xf32> to vector<256x4xf32>
    %30 = arith.addf %23, %29 : vector<256x4xf32>
    %31 = vector.extract_strided_slice %21 {offsets = [0, 0], sizes = [256, 4], strides = [1, 1]} : vector<288x4xbf16> to vector<256x4xbf16>
    %c0_19 = arith.constant 0 : index
    %c0_20 = arith.constant 0 : index
    %c0_21 = arith.constant 0 : index
    %32 = vector.load %arg6[%c0_19, %c0_20, %c0_21] : memref<3x4x4xbf16, #tpu.memory_space<vmem>>, vector<1x4x4xbf16>
    %33 = vector.shape_cast %32 : vector<1x4x4xbf16> to vector<4x4xbf16>
    %cst_22 = arith.constant dense<0.000000e+00> : vector<256x4xf32>
    %34 = tpu.matmul %31, %33, %cst_22 {dimension_numbers = #tpu.dot_dimension_numbers<[1], [0], [0], [1], [0, 0, 1, 1], [], []>} : vector<256x4xbf16>, vector<4x4xbf16>, vector<256x4xf32> -> vector<256x4xf32>
    %35 = arith.addf %30, %34 : vector<256x4xf32>
    %36 = vector.extract_strided_slice %28 {offsets = [0, 4], sizes = [256, 4], strides = [1, 1]} : vector<256x8xf32> to vector<256x4xf32>
    %37 = arith.addf %24, %36 : vector<256x4xf32>
    %38 = vector.extract_strided_slice %22 {offsets = [0, 0], sizes = [256, 4], strides = [1, 1]} : vector<288x4xbf16> to vector<256x4xbf16>
    %c0_23 = arith.constant 0 : index
    %c0_24 = arith.constant 0 : index
    %c0_25 = arith.constant 0 : index
    %39 = vector.load %arg7[%c0_23, %c0_24, %c0_25] : memref<3x4x4xbf16, #tpu.memory_space<vmem>>, vector<1x4x4xbf16>
    %40 = vector.shape_cast %39 : vector<1x4x4xbf16> to vector<4x4xbf16>
    %cst_26 = arith.constant dense<0.000000e+00> : vector<256x4xf32>
    %41 = tpu.matmul %38, %40, %cst_26 {dimension_numbers = #tpu.dot_dimension_numbers<[1], [0], [0], [1], [0, 0, 1, 1], [], []>} : vector<256x4xbf16>, vector<4x4xbf16>, vector<256x4xf32> -> vector<256x4xf32>
    %42 = arith.addf %37, %41 : vector<256x4xf32>
    %43 = vector.extract_strided_slice %20 {offsets = [16, 0], sizes = [256, 8], strides = [1, 1]} : vector<288x8xbf16> to vector<256x8xbf16>
    %c1 = arith.constant 1 : index
    %c0_27 = arith.constant 0 : index
    %c0_28 = arith.constant 0 : index
    %44 = vector.load %arg5[%c1, %c0_27, %c0_28] : memref<3x8x8xbf16, #tpu.memory_space<vmem>>, vector<1x8x8xbf16>
    %45 = vector.shape_cast %44 : vector<1x8x8xbf16> to vector<8x8xbf16>
    %cst_29 = arith.constant dense<0.000000e+00> : vector<256x8xf32>
    %46 = tpu.matmul %43, %45, %cst_29 {dimension_numbers = #tpu.dot_dimension_numbers<[1], [0], [0], [1], [0, 0, 1, 1], [], []>} : vector<256x8xbf16>, vector<8x8xbf16>, vector<256x8xf32> -> vector<256x8xf32>
    %47 = vector.extract_strided_slice %46 {offsets = [0, 0], sizes = [256, 4], strides = [1, 1]} : vector<256x8xf32> to vector<256x4xf32>
    %48 = arith.addf %35, %47 : vector<256x4xf32>
    %49 = vector.extract_strided_slice %21 {offsets = [16, 0], sizes = [256, 4], strides = [1, 1]} : vector<288x4xbf16> to vector<256x4xbf16>
    %c1_30 = arith.constant 1 : index
    %c0_31 = arith.constant 0 : index
    %c0_32 = arith.constant 0 : index
    %50 = vector.load %arg6[%c1_30, %c0_31, %c0_32] : memref<3x4x4xbf16, #tpu.memory_space<vmem>>, vector<1x4x4xbf16>
    %51 = vector.shape_cast %50 : vector<1x4x4xbf16> to vector<4x4xbf16>
    %cst_33 = arith.constant dense<0.000000e+00> : vector<256x4xf32>
    %52 = tpu.matmul %49, %51, %cst_33 {dimension_numbers = #tpu.dot_dimension_numbers<[1], [0], [0], [1], [0, 0, 1, 1], [], []>} : vector<256x4xbf16>, vector<4x4xbf16>, vector<256x4xf32> -> vector<256x4xf32>
    %53 = arith.addf %48, %52 : vector<256x4xf32>
    %54 = vector.extract_strided_slice %46 {offsets = [0, 4], sizes = [256, 4], strides = [1, 1]} : vector<256x8xf32> to vector<256x4xf32>
    %55 = arith.addf %42, %54 : vector<256x4xf32>
    %56 = vector.extract_strided_slice %22 {offsets = [16, 0], sizes = [256, 4], strides = [1, 1]} : vector<288x4xbf16> to vector<256x4xbf16>
    %c1_34 = arith.constant 1 : index
    %c0_35 = arith.constant 0 : index
    %c0_36 = arith.constant 0 : index
    %57 = vector.load %arg7[%c1_34, %c0_35, %c0_36] : memref<3x4x4xbf16, #tpu.memory_space<vmem>>, vector<1x4x4xbf16>
    %58 = vector.shape_cast %57 : vector<1x4x4xbf16> to vector<4x4xbf16>
    %cst_37 = arith.constant dense<0.000000e+00> : vector<256x4xf32>
    %59 = tpu.matmul %56, %58, %cst_37 {dimension_numbers = #tpu.dot_dimension_numbers<[1], [0], [0], [1], [0, 0, 1, 1], [], []>} : vector<256x4xbf16>, vector<4x4xbf16>, vector<256x4xf32> -> vector<256x4xf32>
    %60 = arith.addf %55, %59 : vector<256x4xf32>
    %61 = vector.extract_strided_slice %20 {offsets = [32, 0], sizes = [256, 8], strides = [1, 1]} : vector<288x8xbf16> to vector<256x8xbf16>
    %c2 = arith.constant 2 : index
    %c0_38 = arith.constant 0 : index
    %c0_39 = arith.constant 0 : index
    %62 = vector.load %arg5[%c2, %c0_38, %c0_39] : memref<3x8x8xbf16, #tpu.memory_space<vmem>>, vector<1x8x8xbf16>
    %63 = vector.shape_cast %62 : vector<1x8x8xbf16> to vector<8x8xbf16>
    %cst_40 = arith.constant dense<0.000000e+00> : vector<256x8xf32>
    %64 = tpu.matmul %61, %63, %cst_40 {dimension_numbers = #tpu.dot_dimension_numbers<[1], [0], [0], [1], [0, 0, 1, 1], [], []>} : vector<256x8xbf16>, vector<8x8xbf16>, vector<256x8xf32> -> vector<256x8xf32>
    %65 = vector.extract_strided_slice %64 {offsets = [0, 0], sizes = [256, 4], strides = [1, 1]} : vector<256x8xf32> to vector<256x4xf32>
    %66 = arith.addf %53, %65 : vector<256x4xf32>
    %67 = vector.extract_strided_slice %21 {offsets = [32, 0], sizes = [256, 4], strides = [1, 1]} : vector<288x4xbf16> to vector<256x4xbf16>
    %c2_41 = arith.constant 2 : index
    %c0_42 = arith.constant 0 : index
    %c0_43 = arith.constant 0 : index
    %68 = vector.load %arg6[%c2_41, %c0_42, %c0_43] : memref<3x4x4xbf16, #tpu.memory_space<vmem>>, vector<1x4x4xbf16>
    %69 = vector.shape_cast %68 : vector<1x4x4xbf16> to vector<4x4xbf16>
    %cst_44 = arith.constant dense<0.000000e+00> : vector<256x4xf32>
    %70 = tpu.matmul %67, %69, %cst_44 {dimension_numbers = #tpu.dot_dimension_numbers<[1], [0], [0], [1], [0, 0, 1, 1], [], []>} : vector<256x4xbf16>, vector<4x4xbf16>, vector<256x4xf32> -> vector<256x4xf32>
    %71 = arith.addf %66, %70 : vector<256x4xf32>
    %72 = vector.extract_strided_slice %64 {offsets = [0, 4], sizes = [256, 4], strides = [1, 1]} : vector<256x8xf32> to vector<256x4xf32>
    %73 = arith.addf %60, %72 : vector<256x4xf32>
    %74 = vector.extract_strided_slice %22 {offsets = [32, 0], sizes = [256, 4], strides = [1, 1]} : vector<288x4xbf16> to vector<256x4xbf16>
    %c2_45 = arith.constant 2 : index
    %c0_46 = arith.constant 0 : index
    %c0_47 = arith.constant 0 : index
    %75 = vector.load %arg7[%c2_45, %c0_46, %c0_47] : memref<3x4x4xbf16, #tpu.memory_space<vmem>>, vector<1x4x4xbf16>
    %76 = vector.shape_cast %75 : vector<1x4x4xbf16> to vector<4x4xbf16>
    %cst_48 = arith.constant dense<0.000000e+00> : vector<256x4xf32>
    %77 = tpu.matmul %74, %76, %cst_48 {dimension_numbers = #tpu.dot_dimension_numbers<[1], [0], [0], [1], [0, 0, 1, 1], [], []>} : vector<256x4xbf16>, vector<4x4xbf16>, vector<256x4xf32> -> vector<256x4xf32>
    %78 = arith.addf %73, %77 : vector<256x4xf32>
    %c0_49 = arith.constant 0 : index
    %c0_50 = arith.constant 0 : index
    %79 = vector.load %arg8[%c0_49, %c0_50] : memref<1x4xf32, #tpu.memory_space<vmem>>, vector<1x4xf32>
    %80 = vector.broadcast %79 : vector<1x4xf32> to vector<256x4xf32>
    %81 = arith.addf %71, %80 : vector<256x4xf32>
    %cst_51 = arith.constant 0.000000e+00 : f32
    %82 = vector.broadcast %cst_51 : f32 to vector<256x4xf32>
    %83 = arith.cmpf oge, %81, %82 : vector<256x4xf32>
    %cst_52 = arith.constant 2.000000e-01 : f32
    %84 = vector.broadcast %cst_52 : f32 to vector<256x4xf32>
    %85 = arith.mulf %84, %81 : vector<256x4xf32>
    %86 = arith.select %83, %81, %85 : vector<256x4xi1>, vector<256x4xf32>
    %87 = vector.broadcast %79 : vector<1x4xf32> to vector<256x4xf32>
    %88 = arith.addf %78, %87 : vector<256x4xf32>
    %cst_53 = arith.constant 0.000000e+00 : f32
    %89 = vector.broadcast %cst_53 : f32 to vector<256x4xf32>
    %90 = arith.cmpf oge, %88, %89 : vector<256x4xf32>
    %cst_54 = arith.constant 2.000000e-01 : f32
    %91 = vector.broadcast %cst_54 : f32 to vector<256x4xf32>
    %92 = arith.mulf %91, %88 : vector<256x4xf32>
    %93 = arith.select %90, %88, %92 : vector<256x4xi1>, vector<256x4xf32>
    %94 = arith.addf %86, %93 : vector<256x4xf32>
    %95 = vector.shape_cast %94 : vector<256x4xf32> to vector<8x2x16x4xf32>
    %96 = vector.extract_strided_slice %95 {offsets = [0, 0, 0, 0], sizes = [8, 1, 16, 4], strides = [1, 1, 1, 1]} : vector<8x2x16x4xf32> to vector<8x1x16x4xf32>
    %97 = vector.shape_cast %96 : vector<8x1x16x4xf32> to vector<8x16x4xf32>
    %98 = vector.extract_strided_slice %95 {offsets = [0, 1, 0, 0], sizes = [8, 1, 16, 4], strides = [1, 1, 1, 1]} : vector<8x2x16x4xf32> to vector<8x1x16x4xf32>
    %99 = vector.shape_cast %98 : vector<8x1x16x4xf32> to vector<8x16x4xf32>
    %100 = arith.addf %97, %99 : vector<8x16x4xf32>
    %cst_55 = arith.constant 2.500000e-01 : f32
    %101 = vector.broadcast %cst_55 : f32 to vector<8x16x4xf32>
    %102 = arith.mulf %100, %101 : vector<8x16x4xf32>
    %103 = vector.shape_cast %102 : vector<8x16x4xf32> to vector<1x8x16x4xf32>
    %104 = arith.truncf %103 : vector<1x8x16x4xf32> to vector<1x8x16x4xbf16>
    %c0_56 = arith.constant 0 : index
    %c0_57 = arith.constant 0 : index
    %c0_58 = arith.constant 0 : index
    %c0_59 = arith.constant 0 : index
    %105 = vector.load %arg9[%c0_56, %c0_57, %c0_58, %c0_59] : memref<1x8x16x4xbf16, #tpu.memory_space<vmem>>, vector<1x8x16x4xbf16>
    tpu.vector_store %arg9[%c0_56, %c0_57, %c0_58, %c0_59], %104 {strides = array<i32>} : memref<1x8x16x4xbf16, #tpu.memory_space<vmem>>, vector<1x8x16x4xbf16>,
    %106 = vector.extract_strided_slice %1 {offsets = [0, 0, 0], sizes = [16, 16, 4], strides = [1, 1, 1]} : vector<16x16x8xbf16> to vector<16x16x4xbf16>
    %107 = arith.extf %106 : vector<16x16x4xbf16> to vector<16x16x4xf32>
    %108 = vector.extract_strided_slice %1 {offsets = [0, 0, 4], sizes = [16, 16, 4], strides = [1, 1, 1]} : vector<16x16x8xbf16> to vector<16x16x4xbf16>
    %109 = arith.extf %108 : vector<16x16x4xbf16> to vector<16x16x4xf32>
    %110 = arith.addf %107, %109 : vector<16x16x4xf32>
    %111 = vector.shape_cast %110 : vector<16x16x4xf32> to vector<8x2x16x4xf32>
    %112 = vector.extract_strided_slice %111 {offsets = [0, 0, 0, 0], sizes = [8, 1, 16, 4], strides = [1, 1, 1, 1]} : vector<8x2x16x4xf32> to vector<8x1x16x4xf32>
    %113 = vector.shape_cast %112 : vector<8x1x16x4xf32> to vector<8x16x4xf32>
    %114 = vector.extract_strided_slice %111 {offsets = [0, 1, 0, 0], sizes = [8, 1, 16, 4], strides = [1, 1, 1, 1]} : vector<8x2x16x4xf32> to vector<8x1x16x4xf32>
    %115 = vector.shape_cast %114 : vector<8x1x16x4xf32> to vector<8x16x4xf32>
    %116 = arith.addf %113, %115 : vector<8x16x4xf32>
    %cst_60 = arith.constant 2.500000e-01 : f32
    %117 = vector.broadcast %cst_60 : f32 to vector<8x16x4xf32>
    %118 = arith.mulf %116, %117 : vector<8x16x4xf32>
    %119 = vector.shape_cast %118 : vector<8x16x4xf32> to vector<1x8x16x4xf32>
    %120 = arith.truncf %119 : vector<1x8x16x4xf32> to vector<1x8x16x4xbf16>
    %c0_61 = arith.constant 0 : index
    %c0_62 = arith.constant 0 : index
    %c0_63 = arith.constant 0 : index
    %c0_64 = arith.constant 0 : index
    %121 = vector.load %arg10[%c0_61, %c0_62, %c0_63, %c0_64] : memref<1x8x16x4xbf16, #tpu.memory_space<vmem>>, vector<1x8x16x4xbf16>
    tpu.vector_store %arg10[%c0_61, %c0_62, %c0_63, %c0_64], %120 {strides = array<i32>} : memref<1x8x16x4xbf16, #tpu.memory_space<vmem>>, vector<1x8x16x4xbf16>,
    return
  }
  func.func @transform_0(%arg0: i32, %arg1: i32) -> (i32, i32, i32, i32) {
    %c0_i32 = arith.constant 0 : i32
    %c0_i32_0 = arith.constant 0 : i32
    %c0_i32_1 = arith.constant 0 : i32
    return %arg0, %arg1, %c0_i32, %c0_i32_0 : i32, i32, i32, i32
  }
  func.func @transform_1(%arg0: i32, %arg1: i32) -> (i32, i32, i32, i32) {
    %c2_i32 = arith.constant 2 : i32
    %0 = arith.muli %arg1, %c2_i32 : i32
    %c1_i32 = arith.constant 1 : i32
    %1 = arith.subi %0, %c1_i32 : i32
    %c0_i32 = arith.constant 0 : i32
    %2 = arith.maxsi %1, %c0_i32 : i32
    %c0_i32_0 = arith.constant 0 : i32
    %c0_i32_1 = arith.constant 0 : i32
    %c0_i32_2 = arith.constant 0 : i32
    return %arg0, %2, %c0_i32_0, %c0_i32_1 : i32, i32, i32, i32
  }
  func.func @transform_2(%arg0: i32, %arg1: i32) -> (i32, i32, i32, i32) {
    %c1_i32 = arith.constant 1 : i32
    %0 = arith.addi %arg1, %c1_i32 : i32
    %c2_i32 = arith.constant 2 : i32
    %1 = arith.muli %0, %c2_i32 : i32
    %c1_i32_0 = arith.constant 1 : i32
    %2 = arith.minsi %1, %c1_i32_0 : i32
    %c0_i32 = arith.constant 0 : i32
    %c0_i32_1 = arith.constant 0 : i32
    %c0_i32_2 = arith.constant 0 : i32
    return %arg0, %2, %c0_i32, %c0_i32_1 : i32, i32, i32, i32
  }
  func.func @transform_3(%arg0: i32, %arg1: i32) -> (i32, i32, i32) {
    %c0_i32 = arith.constant 0 : i32
    %c0_i32_0 = arith.constant 0 : i32
    %c0_i32_1 = arith.constant 0 : i32
    %c0_i32_2 = arith.constant 0 : i32
    return %c0_i32, %c0_i32_0, %c0_i32_1 : i32, i32, i32
  }
  func.func @transform_4(%arg0: i32, %arg1: i32) -> (i32, i32, i32) {
    %c0_i32 = arith.constant 0 : i32
    %c0_i32_0 = arith.constant 0 : i32
    %c0_i32_1 = arith.constant 0 : i32
    %c0_i32_2 = arith.constant 0 : i32
    return %c0_i32, %c0_i32_0, %c0_i32_1 : i32, i32, i32
  }
  func.func @transform_5(%arg0: i32, %arg1: i32) -> (i32, i32, i32) {
    %c0_i32 = arith.constant 0 : i32
    %c0_i32_0 = arith.constant 0 : i32
    %c0_i32_1 = arith.constant 0 : i32
    %c0_i32_2 = arith.constant 0 : i32
    return %c0_i32, %c0_i32_0, %c0_i32_1 : i32, i32, i32
  }
  func.func @transform_6(%arg0: i32, %arg1: i32) -> (i32, i32) {
    %c0_i32 = arith.constant 0 : i32
    %c0_i32_0 = arith.constant 0 : i32
    %c0_i32_1 = arith.constant 0 : i32
    return %c0_i32, %c0_i32_0 : i32, i32
  }
  func.func @transform_7(%arg0: i32, %arg1: i32) -> (i32, i32, i32, i32) {
    %c0_i32 = arith.constant 0 : i32
    %c0_i32_0 = arith.constant 0 : i32
    %c0_i32_1 = arith.constant 0 : i32
    return %arg0, %arg1, %c0_i32, %c0_i32_0 : i32, i32, i32, i32
  }
  func.func @transform_8(%arg0: i32, %arg1: i32) -> (i32, i32, i32, i32) {
    %c0_i32 = arith.constant 0 : i32
    %c0_i32_0 = arith.constant 0 : i32
    %c0_i32_1 = arith.constant 0 : i32
    return %arg0, %arg1, %c0_i32, %c0_i32_0 : i32, i32, i32, i32
  }
}

</mosaic_0001>

<llo_original>
// kernel: tpu_custom_call.1
$region0: #{tpu_custom_call.1}
  #allocation0 [shape = 'u32[]', space=smem, size = 0x4, offset = 0x4, fixed_abs, tag = 'smem constant byte address 0x4 - core index']
  #allocation1 [shape = 'u32[72,128]{1,0:T(1,128)}', space=vmem, size = 0x9000, scoped, tag = 'internal scratch']
  %s0 = inlined_call_operand.vmem [shape: bf16[2,16,16,8], index: 0, kind: input, shape index: {}]
  %s1 = inlined_call_operand.vmem [shape: bf16[2,16,16,8], index: 1, kind: input, shape index: {}]
  %s2 = inlined_call_operand.vmem [shape: bf16[2,16,16,8], index: 2, kind: input, shape index: {}]
  %s3 = inlined_call_operand.vmem [shape: bf16[3,8,8], index: 3, kind: input, shape index: {}]
  %s4 = inlined_call_operand.vmem [shape: bf16[3,4,4], index: 4, kind: input, shape index: {}]
  %s5 = inlined_call_operand.vmem [shape: bf16[3,4,4], index: 5, kind: input, shape index: {}]
  %s6 = inlined_call_operand.vmem [shape: f32[1,4], index: 6, kind: input, shape index: {}]
  %s7 = inlined_call_operand.vmem [shape: bf16[2,8,16,4], index: 7, kind: output, shape index: {0}]
  %s8 = inlined_call_operand.vmem [shape: bf16[2,8,16,4], index: 8, kind: output, shape index: {1}]
  %9 = xla_tuple %s7, %s8
  %s10 = sld [smem:[#allocation0]]
  $region69: #{tpu_custom_call.1} parent=0
    _
  %s12 = ssub.s32 1, %s10
  %s13 = scalar_select 0, %s12, %s10
  loop: start=0, step=1, limit=4
  $region2: #{tpu_custom_call.1} parent=0 // loop_pre_header
    _
  $region3: #{tpu_custom_call.1} parent=0 // loop_header
    %s15 = sphi 0, %s19
    %p16 = scmp.ge.s32.totalorder %s15, 4
    %s22 = sphi 0, %s34
    %s23 = sphi 0, %s30
    %s24 = sphi 0, %s22
    %s25 = sphi 0, %s23
    %s26 = sphi 0, %s24
    %s27 = sphi 0, %s25
    %s39 = sphi 0, %s41
    %s42 = sphi 0, %s39
    %s43 = sphi 0, %s42
    %s59 = sphi 0, %s43
    %s75 = sphi 0, %s77
    %s78 = sphi 0, %s75
    %s79 = sphi 0, %s78
    %s95 = sphi 0, %s79
    %s111 = sphi 0, %s113
    %s114 = sphi 0, %s111
    %s115 = sphi 0, %s114
    %s131 = sphi 0, %s115
    %s135 = sphi 0, %s135
    %s137 = sphi 0, %s135
    %s138 = sphi 0, %s137
    %s152 = sphi 0, %s138
    %s156 = sphi 0, %s156
    %s158 = sphi 0, %s156
    %s159 = sphi 0, %s158
    %s173 = sphi 0, %s159
    %s177 = sphi 0, %s177
    %s179 = sphi 0, %s177
    %s180 = sphi 0, %s179
    %s194 = sphi 0, %s180
    %s198 = sphi 0, %s198
    %s200 = sphi 0, %s198
    %s201 = sphi 0, %s200
    %s215 = sphi 0, %s201
    %s223 = sphi 0, %s225
    %s226 = sphi 0, %s223
    %s227 = sphi 0, %s226
    %s243 = sphi 0, %s227
    %s251 = sphi 0, %s253
    %s254 = sphi 0, %s251
    %s255 = sphi 0, %s254
    %s271 = sphi 0, %s255
  $region4: #{tpu_custom_call.1} parent=0 // loop_header_branch
    %18 = sbr.rel (%p16) target = $region8
  $region5: #{tpu_custom_call.1} parent=0 // loop_body
    %s20 = ssub.s32 %s15, 1
    %s21 = ssub.s32 %s15, 2
    %s28 = sadd.s32 1, %s23
    %p29 = scmp.ge.s32.totalorder %s28, 1
    %s30 = scalar_select %p29, 0, %s28
    %s31 = sadd.s32 1, %s22
    %s32 = scalar_select %p29, %s31, %s22
    %p33 = scmp.ge.s32.totalorder %s32, 2
    %s34 = scalar_select %p33, 0, %s32
    %s35 = ssub.s32 %s22, %s34
    %s36 = ssub.s32 %s23, %s30
    %s37 = sor.u32 %s35, %s36
    %p38 = scmp.eq.s32.totalorder %s37, 0
    %s40 = sadd.s32 %s39, 1
    %s41 = scalar_select %p38, %s39, %s40
    %p44 = pneg %p38
    %p45 = scmp.eq.s32.totalorder %s15, 1
    %p46 = por %p44, %p45
    %p47 = scmp.ne.s32.totalorder %s39, %s42
    %p48 = scmp.eq.s32.totalorder %s15, 0
    %p49 = por %p47, %p48
    %p50 = scmp.ne.s32.totalorder %s39, %s42
    %p51 = scmp.eq.s32.totalorder %s20, 1
    %p52 = por %p50, %p51
    %p53 = scmp.ne.s32.totalorder %s42, %s43
    %p54 = scmp.eq.s32.totalorder %s20, 0
    %p55 = por %p53, %p54
    %p56 = scmp.ne.s32.totalorder %s42, %s43
    %p57 = scmp.eq.s32.totalorder %s21, 1
    %p58 = por %p56, %p57
    %p60 = scmp.ne.s32.totalorder %s43, %s59
    %p61 = scmp.eq.s32.totalorder %s21, 0
    %p62 = por %p60, %p61
    %s63 = smul.u32 %s23, 2
    %s64 = ssub.s32 %s63, 1
    %p65 = scmp.gt.s32.totalorder %s64, 0
    %s66 = scalar_select %p65, %s64, 0
    %s67 = smul.u32 %s30, 2
    %s68 = ssub.s32 %s67, 1
    %p69 = scmp.gt.s32.totalorder %s68, 0
    %s70 = scalar_select %p69, %s68, 0
    %s71 = ssub.s32 %s22, %s34
    %s72 = ssub.s32 %s66, %s70
    %s73 = sor.u32 %s71, %s72
    %p74 = scmp.eq.s32.totalorder %s73, 0
    %s76 = sadd.s32 %s75, 1
    %s77 = scalar_select %p74, %s75, %s76
    %p80 = pneg %p74
    %p81 = scmp.eq.s32.totalorder %s15, 1
    %p82 = por %p80, %p81
    %p83 = scmp.ne.s32.totalorder %s75, %s78
    %p84 = scmp.eq.s32.totalorder %s15, 0
    %p85 = por %p83, %p84
    %p86 = scmp.ne.s32.totalorder %s75, %s78
    %p87 = scmp.eq.s32.totalorder %s20, 1
    %p88 = por %p86, %p87
    %p89 = scmp.ne.s32.totalorder %s78, %s79
    %p90 = scmp.eq.s32.totalorder %s20, 0
    %p91 = por %p89, %p90
    %p92 = scmp.ne.s32.totalorder %s78, %s79
    %p93 = scmp.eq.s32.totalorder %s21, 1
    %p94 = por %p92, %p93
    %p96 = scmp.ne.s32.totalorder %s79, %s95
    %p97 = scmp.eq.s32.totalorder %s21, 0
    %p98 = por %p96, %p97
    %s99 = sadd.s32 %s23, 1
    %s100 = smul.u32 %s99, 2
    %p101 = scmp.lt.s32.totalorder %s100, 1
    %s102 = scalar_select %p101, %s100, 1
    %s103 = sadd.s32 %s30, 1
    %s104 = smul.u32 %s103, 2
    %p105 = scmp.lt.s32.totalorder %s104, 1
    %s106 = scalar_select %p105, %s104, 1
    %s107 = ssub.s32 %s22, %s34
    %s108 = ssub.s32 %s102, %s106
    %s109 = sor.u32 %s107, %s108
    %p110 = scmp.eq.s32.totalorder %s109, 0
    %s112 = sadd.s32 %s111, 1
    %s113 = scalar_select %p110, %s111, %s112
    %p116 = pneg %p110
    %p117 = scmp.eq.s32.totalorder %s15, 1
    %p118 = por %p116, %p117
    %p119 = scmp.ne.s32.totalorder %s111, %s114
    %p120 = scmp.eq.s32.totalorder %s15, 0
    %p121 = por %p119, %p120
    %p122 = scmp.ne.s32.totalorder %s111, %s114
    %p123 = scmp.eq.s32.totalorder %s20, 1
    %p124 = por %p122, %p123
    %p125 = scmp.ne.s32.totalorder %s114, %s115
    %p126 = scmp.eq.s32.totalorder %s20, 0
    %p127 = por %p125, %p126
    %p128 = scmp.ne.s32.totalorder %s114, %s115
    %p129 = scmp.eq.s32.totalorder %s21, 1
    %p130 = por %p128, %p129
    %p132 = scmp.ne.s32.totalorder %s115, %s131
    %p133 = scmp.eq.s32.totalorder %s21, 0
    %p134 = por %p132, %p133
    %s136 = sadd.s32 %s135, 1
    %p139 = scmp.eq.s32.totalorder %s15, 1
    %p140 = scmp.ne.s32.totalorder %s135, %s137
    %p141 = scmp.eq.s32.totalorder %s15, 0
    %p142 = por %p140, %p141
    %p143 = scmp.ne.s32.totalorder %s135, %s137
    %p144 = scmp.eq.s32.totalorder %s20, 1
    %p145 = por %p143, %p144
    %p146 = scmp.ne.s32.totalorder %s137, %s138
    %p147 = scmp.eq.s32.totalorder %s20, 0
    %p148 = por %p146, %p147
    %p149 = scmp.ne.s32.totalorder %s137, %s138
    %p150 = scmp.eq.s32.totalorder %s21, 1
    %p151 = por %p149, %p150
    %p153 = scmp.ne.s32.totalorder %s138, %s152
    %p154 = scmp.eq.s32.totalorder %s21, 0
    %p155 = por %p153, %p154
    %s157 = sadd.s32 %s156, 1
    %p160 = scmp.eq.s32.totalorder %s15, 1
    %p161 = scmp.ne.s32.totalorder %s156, %s158
    %p162 = scmp.eq.s32.totalorder %s15, 0
    %p163 = por %p161, %p162
    %p164 = scmp.ne.s32.totalorder %s156, %s158
    %p165 = scmp.eq.s32.totalorder %s20, 1
    %p166 = por %p164, %p165
    %p167 = scmp.ne.s32.totalorder %s158, %s159
    %p168 = scmp.eq.s32.totalorder %s20, 0
    %p169 = por %p167, %p168
    %p170 = scmp.ne.s32.totalorder %s158, %s159
    %p171 = scmp.eq.s32.totalorder %s21, 1
    %p172 = por %p170, %p171
    %p174 = scmp.ne.s32.totalorder %s159, %s173
    %p175 = scmp.eq.s32.totalorder %s21, 0
    %p176 = por %p174, %p175
    %s178 = sadd.s32 %s177, 1
    %p181 = scmp.eq.s32.totalorder %s15, 1
    %p182 = scmp.ne.s32.totalorder %s177, %s179
    %p183 = scmp.eq.s32.totalorder %s15, 0
    %p184 = por %p182, %p183
    %p185 = scmp.ne.s32.totalorder %s177, %s179
    %p186 = scmp.eq.s32.totalorder %s20, 1
    %p187 = por %p185, %p186
    %p188 = scmp.ne.s32.totalorder %s179, %s180
    %p189 = scmp.eq.s32.totalorder %s20, 0
    %p190 = por %p188, %p189
    %p191 = scmp.ne.s32.totalorder %s179, %s180
    %p192 = scmp.eq.s32.totalorder %s21, 1
    %p193 = por %p191, %p192
    %p195 = scmp.ne.s32.totalorder %s180, %s194
    %p196 = scmp.eq.s32.totalorder %s21, 0
    %p197 = por %p195, %p196
    %s199 = sadd.s32 %s198, 1
    %p202 = scmp.eq.s32.totalorder %s15, 1
    %p203 = scmp.ne.s32.totalorder %s198, %s200
    %p204 = scmp.eq.s32.totalorder %s15, 0
    %p205 = por %p203, %p204
    %p206 = scmp.ne.s32.totalorder %s198, %s200
    %p207 = scmp.eq.s32.totalorder %s20, 1
    %p208 = por %p206, %p207
    %p209 = scmp.ne.s32.totalorder %s200, %s201
    %p210 = scmp.eq.s32.totalorder %s20, 0
    %p211 = por %p209, %p210
    %p212 = scmp.ne.s32.totalorder %s200, %s201
    %p213 = scmp.eq.s32.totalorder %s21, 1
    %p214 = por %p212, %p213
    %p216 = scmp.ne.s32.totalorder %s201, %s215
    %p217 = scmp.eq.s32.totalorder %s21, 0
    %p218 = por %p216, %p217
    %s219 = ssub.s32 %s22, %s34
    %s220 = ssub.s32 %s23, %s30
    %s221 = sor.u32 %s219, %s220
    %p222 = scmp.eq.s32.totalorder %s221, 0
    %s224 = sadd.s32 %s223, 1
    %s225 = scalar_select %p222, %s223, %s224
    %p228 = pneg %p222
    %p229 = scmp.eq.s32.totalorder %s15, 1
    %p230 = por %p228, %p229
    %p231 = scmp.ne.s32.totalorder %s223, %s226
    %p232 = scmp.eq.s32.totalorder %s15, 0
    %p233 = por %p231, %p232
    %p234 = scmp.ne.s32.totalorder %s223, %s226
    %p235 = scmp.eq.s32.totalorder %s20, 1
    %p236 = por %p234, %p235
    %p237 = scmp.ne.s32.totalorder %s226, %s227
    %p238 = scmp.eq.s32.totalorder %s20, 0
    %p239 = por %p237, %p238
    %p240 = scmp.ne.s32.totalorder %s226, %s227
    %p241 = scmp.eq.s32.totalorder %s21, 1
    %p242 = por %p240, %p241
    %p244 = scmp.ne.s32.totalorder %s227, %s243
    %p245 = scmp.eq.s32.totalorder %s21, 0
    %p246 = por %p244, %p245
    %s247 = ssub.s32 %s22, %s34
    %s248 = ssub.s32 %s23, %s30
    %s249 = sor.u32 %s247, %s248
    %p250 = scmp.eq.s32.totalorder %s249, 0
    %s252 = sadd.s32 %s251, 1
    %s253 = scalar_select %p250, %s251, %s252
    %p256 = pneg %p250
    %p257 = scmp.eq.s32.totalorder %s15, 1
    %p258 = por %p256, %p257
    %p259 = scmp.ne.s32.totalorder %s251, %s254
    %p260 = scmp.eq.s32.totalorder %s15, 0
    %p261 = por %p259, %p260
    %p262 = scmp.ne.s32.totalorder %s251, %s254
    %p263 = scmp.eq.s32.totalorder %s20, 1
    %p264 = por %p262, %p263
    %p265 = scmp.ne.s32.totalorder %s254, %s255
    %p266 = scmp.eq.s32.totalorder %s20, 0
    %p267 = por %p265, %p266
    %p268 = scmp.ne.s32.totalorder %s254, %s255
    %p269 = scmp.eq.s32.totalorder %s21, 1
    %p270 = por %p268, %p269
    %p272 = scmp.ne.s32.totalorder %s255, %s271
    %p273 = scmp.eq.s32.totalorder %s21, 0
    %p274 = por %p272, %p273
    %p275 = scmp.le.s32.totalorder 1, %s15
    %p276 = scmp.lt.s32.totalorder %s15, 3
    %p277 = pnand %p275, %p276
    %p278 = pneg %p277
    // Predicated region
    $region9: #{tpu_custom_call.1} parent=5 // pred_check
      _
    $region10: #{tpu_custom_call.1} parent=5 // pred_check_branch
      %280 = sbr.rel (%p277) target = $region12
    $region11: #{tpu_custom_call.1} parent=5 // pred_region
      %s281 = ssub.s32 %s15, 1
      // Predicated region
      $region13: #{tpu_custom_call.1} parent=11 // pred_check
        %p282 = pneg %p148
      $region14: #{tpu_custom_call.1} parent=11 // pred_check_branch
        %284 = sbr.rel (%p282) target = $region16
      $region15: #{tpu_custom_call.1} parent=11 // pred_region
        _
      $region16: #{tpu_custom_call.1} parent=11 // pred_fallthru
        _
      // Predicated region
      $region17: #{tpu_custom_call.1} parent=11 // pred_check
        %p285 = pneg %p169
      $region18: #{tpu_custom_call.1} parent=11 // pred_check_branch
        %287 = sbr.rel (%p285) target = $region20
      $region19: #{tpu_custom_call.1} parent=11 // pred_region
        _
      $region20: #{tpu_custom_call.1} parent=11 // pred_fallthru
        _
      // Predicated region
      $region21: #{tpu_custom_call.1} parent=11 // pred_check
        %p288 = pneg %p190
      $region22: #{tpu_custom_call.1} parent=11 // pred_check_branch
        %290 = sbr.rel (%p288) target = $region24
      $region23: #{tpu_custom_call.1} parent=11 // pred_region
        _
      $region24: #{tpu_custom_call.1} parent=11 // pred_fallthru
        _
      // Predicated region
      $region25: #{tpu_custom_call.1} parent=11 // pred_check
        %p291 = pneg %p211
      $region26: #{tpu_custom_call.1} parent=11 // pred_check_branch
        %293 = sbr.rel (%p291) target = $region28
      $region27: #{tpu_custom_call.1} parent=11 // pred_region
        _
      $region28: #{tpu_custom_call.1} parent=11 // pred_fallthru
        _
    $region12: #{tpu_custom_call.1} parent=5 // pred_fallthru
      _
    %p294 = scmp.lt.s32.totalorder %s15, 2
    // Predicated region
    $region29: #{tpu_custom_call.1} parent=5 // pred_check
      %p295 = pneg %p294
    $region30: #{tpu_custom_call.1} parent=5 // pred_check_branch
      %297 = sbr.rel (%p295) target = $region32
    $region31: #{tpu_custom_call.1} parent=5 // pred_region
      // Predicated region
      $region33: #{tpu_custom_call.1} parent=31 // pred_check
        %p298 = pneg %p49
      $region34: #{tpu_custom_call.1} parent=31 // pred_check_branch
        %300 = sbr.rel (%p298) target = $region36
      $region35: #{tpu_custom_call.1} parent=31 // pred_region
        %s301 = smul.u32 16, %s23
        %p302 = scmp.lt.s32.totalorder %s22, 1
        %s303 = scalar_select %p302, %s22, 1
        %p304 = scmp.lt.s32.totalorder %s301, 15
        %s305 = scalar_select %p304, %s301, 15
        %s306 = smul.addr %s305, 2
        %s307 = smul.addr %s303, 32
        %s308 = sadd.s32 %s306, %s307
        %s309 = smul.addr %s308, 4
        %s310 = scalar_lea.vmem %s0, %s309
        %s311 = smul.u32 16, %s23
      $region36: #{tpu_custom_call.1} parent=31 // pred_fallthru
        _
      // Predicated region
      $region37: #{tpu_custom_call.1} parent=31 // pred_check
        %p312 = pneg %p85
      $region38: #{tpu_custom_call.1} parent=31 // pred_check_branch
        %314 = sbr.rel (%p312) target = $region40
      $region39: #{tpu_custom_call.1} parent=31 // pred_region
        %s315 = smul.u32 %s23, 2
        %s316 = ssub.s32 %s315, 1
        %p317 = scmp.gt.s32.totalorder %s316, 0
        %s318 = scalar_select %p317, %s316, 0
        %s319 = smul.u32 8, %s318
        %p320 = scmp.lt.s32.totalorder %s22, 1
        %s321 = scalar_select %p320, %s22, 1
        %p322 = scmp.lt.s32.totalorder %s319, 15
        %s323 = scalar_select %p322, %s319, 15
        %s324 = smul.addr %s323, 2
        %s325 = smul.addr %s321, 32
        %s326 = sadd.s32 %s324, %s325
        %s327 = smul.addr %s326, 4
        %s328 = scalar_lea.vmem %s1, %s327
        %s329 = smul.u32 %s23, 2
        %s330 = ssub.s32 %s329, 1
        %p331 = scmp.gt.s32.totalorder %s330, 0
        %s332 = scalar_select %p331, %s330, 0
        %s333 = smul.u32 8, %s332
      $region40: #{tpu_custom_call.1} parent=31 // pred_fallthru
        _
      // Predicated region
      $region41: #{tpu_custom_call.1} parent=31 // pred_check
        %p334 = pneg %p121
      $region42: #{tpu_custom_call.1} parent=31 // pred_check_branch
        %336 = sbr.rel (%p334) target = $region44
      $region43: #{tpu_custom_call.1} parent=31 // pred_region
        %s337 = sadd.s32 %s23, 1
        %s338 = smul.u32 %s337, 2
        %p339 = scmp.lt.s32.totalorder %s338, 1
        %s340 = scalar_select %p339, %s338, 1
        %s341 = smul.u32 8, %s340
        %p342 = scmp.lt.s32.totalorder %s22, 1
        %s343 = scalar_select %p342, %s22, 1
        %p344 = scmp.lt.s32.totalorder %s341, 15
        %s345 = scalar_select %p344, %s341, 15
        %s346 = smul.addr %s345, 2
        %s347 = smul.addr %s343, 32
        %s348 = sadd.s32 %s346, %s347
        %s349 = smul.addr %s348, 4
        %s350 = scalar_lea.vmem %s2, %s349
        %s351 = sadd.s32 %s23, 1
        %s352 = smul.u32 %s351, 2
        %p353 = scmp.lt.s32.totalorder %s352, 1
        %s354 = scalar_select %p353, %s352, 1
        %s355 = smul.u32 8, %s354
      $region44: #{tpu_custom_call.1} parent=31 // pred_fallthru
        _
    $region32: #{tpu_custom_call.1} parent=5 // pred_fallthru
      _
    %p356 = scmp.le.s32.totalorder 1, %s15
    %p357 = scmp.lt.s32.totalorder %s15, 3
    %p358 = pnand %p356, %p357
    %p359 = pneg %p358
    // Predicated region
    $region45: #{tpu_custom_call.1} parent=5 // pred_check
      _
    $region46: #{tpu_custom_call.1} parent=5 // pred_check_branch
      %361 = sbr.rel (%p358) target = $region48
    $region47: #{tpu_custom_call.1} parent=5 // pred_region
      %s362 = ssub.s32 %s15, 1
      %s363 = smul.u32 16, %s25
      %p364 = scmp.lt.s32.totalorder %s24, 1
      %s365 = scalar_select %p364, %s24, 1
      %p366 = scmp.lt.s32.totalorder %s363, 15
      %s367 = scalar_select %p366, %s363, 15
      %s368 = smul.addr %s367, 2
      %s369 = smul.addr %s365, 32
      %s370 = sadd.s32 %s368, %s369
      %s371 = smul.addr %s370, 4
      %s372 = scalar_lea.vmem %s0, %s371
      %p373 = pneg %p55
      %p374 = pneg %p52
      %s375 = smul.u32 %s25, 2
      %s376 = ssub.s32 %s375, 1
      %p377 = scmp.gt.s32.totalorder %s376, 0
      %s378 = scalar_select %p377, %s376, 0
      %s379 = smul.u32 8, %s378
      %p380 = scmp.lt.s32.totalorder %s24, 1
      %s381 = scalar_select %p380, %s24, 1
      %p382 = scmp.lt.s32.totalorder %s379, 15
      %s383 = scalar_select %p382, %s379, 15
      %s384 = smul.addr %s383, 2
      %s385 = smul.addr %s381, 32
      %s386 = sadd.s32 %s384, %s385
      %s387 = smul.addr %s386, 4
      %s388 = scalar_lea.vmem %s1, %s387
      %p389 = pneg %p91
      %p390 = pneg %p88
      %s391 = sadd.s32 %s25, 1
      %s392 = smul.u32 %s391, 2
      %p393 = scmp.lt.s32.totalorder %s392, 1
      %s394 = scalar_select %p393, %s392, 1
      %s395 = smul.u32 8, %s394
      %p396 = scmp.lt.s32.totalorder %s24, 1
      %s397 = scalar_select %p396, %s24, 1
      %p398 = scmp.lt.s32.totalorder %s395, 15
      %s399 = scalar_select %p398, %s395, 15
      %s400 = smul.addr %s399, 2
      %s401 = smul.addr %s397, 32
      %s402 = sadd.s32 %s400, %s401
      %s403 = smul.addr %s402, 4
      %s404 = scalar_lea.vmem %s2, %s403
      %p405 = pneg %p127
      %p406 = pneg %p124
      %p407 = pneg %p148
      %p408 = pneg %p145
      %p409 = pneg %p169
      %p410 = pneg %p166
      %p411 = pneg %p190
      %p412 = pneg %p187
      %p413 = pneg %p211
      %p414 = pneg %p208
      %p415 = pneg %p239
      %p416 = pneg %p236
      %s417 = smul.u32 8, %s25
      %p418 = scmp.lt.s32.totalorder %s24, 1
      %s419 = scalar_select %p418, %s24, 1
      %p420 = scmp.lt.s32.totalorder %s417, 7
      %s421 = scalar_select %p420, %s417, 7
      %s422 = smul.addr %s421, 2
      %s423 = smul.addr %s419, 16
      %s424 = sadd.s32 %s422, %s423
      %s425 = smul.addr %s424, 4
      %s426 = scalar_lea.vmem %s7, %s425
      %p427 = pneg %p267
      %p428 = pneg %p264
      %s429 = smul.u32 8, %s25
      %p430 = scmp.lt.s32.totalorder %s24, 1
      %s431 = scalar_select %p430, %s24, 1
      %p432 = scmp.lt.s32.totalorder %s429, 7
      %s433 = scalar_select %p432, %s429, 7
      %s434 = smul.addr %s433, 2
      %s435 = smul.addr %s431, 16
      %s436 = sadd.s32 %s434, %s435
      %s437 = smul.addr %s436, 4
      %s438 = scalar_lea.vmem %s8, %s437
      %s439 = smul.u32 16, %s25
      %p440 = scmp.lt.s32.totalorder %s24, 1
      %s441 = scalar_select %p440, %s24, 1
      %p442 = scmp.lt.s32.totalorder %s439, 15
      %s443 = scalar_select %p442, %s439, 15
      %s444 = smul.addr %s443, 2
      %s445 = smul.addr %s441, 32
      %s446 = sadd.s32 %s444, %s445
      %s447 = smul.addr %s446, 4
      %s448 = scalar_lea.vmem %s0, %s447
      %s449 = smul.u32 16, %s25
      %s450 = smul.u32 %s25, 2
      %s451 = ssub.s32 %s450, 1
      %p452 = scmp.gt.s32.totalorder %s451, 0
      %s453 = scalar_select %p452, %s451, 0
      %s454 = smul.u32 8, %s453
      %p455 = scmp.lt.s32.totalorder %s24, 1
      %s456 = scalar_select %p455, %s24, 1
      %p457 = scmp.lt.s32.totalorder %s454, 15
      %s458 = scalar_select %p457, %s454, 15
      %s459 = smul.addr %s458, 2
      %s460 = smul.addr %s456, 32
      %s461 = sadd.s32 %s459, %s460
      %s462 = smul.addr %s461, 4
      %s463 = scalar_lea.vmem %s1, %s462
      %s464 = smul.u32 %s25, 2
      %s465 = ssub.s32 %s464, 1
      %p466 = scmp.gt.s32.totalorder %s465, 0
      %s467 = scalar_select %p466, %s465, 0
      %s468 = smul.u32 8, %s467
      %s469 = sadd.s32 %s25, 1
      %s470 = smul.u32 %s469, 2
      %p471 = scmp.lt.s32.totalorder %s470, 1
      %s472 = scalar_select %p471, %s470, 1
      %s473 = smul.u32 8, %s472
      %p474 = scmp.lt.s32.totalorder %s24, 1
      %s475 = scalar_select %p474, %s24, 1
      %p476 = scmp.lt.s32.totalorder %s473, 15
      %s477 = scalar_select %p476, %s473, 15
      %s478 = smul.addr %s477, 2
      %s479 = smul.addr %s475, 32
      %s480 = sadd.s32 %s478, %s479
      %s481 = smul.addr %s480, 4
      %s482 = scalar_lea.vmem %s2, %s481
      %s483 = sadd.s32 %s25, 1
      %s484 = smul.u32 %s483, 2
      %p485 = scmp.lt.s32.totalorder %s484, 1
      %s486 = scalar_select %p485, %s484, 1
      %s487 = smul.u32 8, %s486
      %s488 = smul.u32 8, %s25
      %p489 = scmp.lt.s32.totalorder %s24, 1
      %s490 = scalar_select %p489, %s24, 1
      %p491 = scmp.lt.s32.totalorder %s488, 7
      %s492 = scalar_select %p491, %s488, 7
      %s493 = smul.addr %s492, 2
      %s494 = smul.addr %s490, 16
      %s495 = sadd.s32 %s493, %s494
      %s496 = smul.addr %s495, 4
      %s497 = scalar_lea.vmem %s7, %s496
      %s498 = smul.u32 8, %s25
      %s499 = smul.u32 8, %s25
      %p500 = scmp.lt.s32.totalorder %s24, 1
      %s501 = scalar_select %p500, %s24, 1
      %p502 = scmp.lt.s32.totalorder %s499, 7
      %s503 = scalar_select %p502, %s499, 7
      %s504 = smul.addr %s503, 2
      %s505 = smul.addr %s501, 16
      %s506 = sadd.s32 %s504, %s505
      %s507 = smul.addr %s506, 4
      %s508 = scalar_lea.vmem %s8, %s507
      %s509 = smul.u32 8, %s25
      %v511 = vld [vmem:[%s448] sm:$0xf]
      %v512 = vld [vmem:[%s448 + $0x4] sm:$0xf]
      %v513 = vld [vmem:[%s448 + $0x8] sm:$0xf]
      %v514 = vld [vmem:[%s448 + $0xc] sm:$0xf]
      %v515 = vld [vmem:[%s448 + $0x10] sm:$0xf]
      %v516 = vld [vmem:[%s448 + $0x14] sm:$0xf]
      %v517 = vld [vmem:[%s448 + $0x18] sm:$0xf]
      %v518 = vld [vmem:[%s448 + $0x1c] sm:$0xf]
      %v519 = vld [vmem:[%s448 + $0x20] sm:$0xf]
      %v520 = vld [vmem:[%s448 + $0x24] sm:$0xf]
      %v521 = vld [vmem:[%s448 + $0x28] sm:$0xf]
      %v522 = vld [vmem:[%s448 + $0x2c] sm:$0xf]
      %v523 = vld [vmem:[%s448 + $0x30] sm:$0xf]
      %v524 = vld [vmem:[%s448 + $0x34] sm:$0xf]
      %v525 = vld [vmem:[%s448 + $0x38] sm:$0xf]
      %v526 = vld [vmem:[%s448 + $0x3c] sm:$0xf]
      %v527 = vld [vmem:[%s448 + $0x40] sm:$0xf]
      %v528 = vld [vmem:[%s448 + $0x44] sm:$0xf]
      %v529 = vld [vmem:[%s448 + $0x48] sm:$0xf]
      %v530 = vld [vmem:[%s448 + $0x4c] sm:$0xf]
      %v531 = vld [vmem:[%s448 + $0x50] sm:$0xf]
      %v532 = vld [vmem:[%s448 + $0x54] sm:$0xf]
      %v533 = vld [vmem:[%s448 + $0x58] sm:$0xf]
      %v534 = vld [vmem:[%s448 + $0x5c] sm:$0xf]
      %v535 = vld [vmem:[%s448 + $0x60] sm:$0xf]
      %v536 = vld [vmem:[%s448 + $0x64] sm:$0xf]
      %v537 = vld [vmem:[%s448 + $0x68] sm:$0xf]
      %v538 = vld [vmem:[%s448 + $0x6c] sm:$0xf]
      %v539 = vld [vmem:[%s448 + $0x70] sm:$0xf]
      %v540 = vld [vmem:[%s448 + $0x74] sm:$0xf]
      %v541 = vld [vmem:[%s448 + $0x78] sm:$0xf]
      %v542 = vld [vmem:[%s448 + $0x7c] sm:$0xf]
      %s543 = scalar_lea.vmem %s463, 56
      %v544 = vld [vmem:[%s543] sm:$0xf]
      %v545 = vld [vmem:[%s543 + $0x4] sm:$0xf]
      %p546 = scmp.eq.s32.totalorder %s25, 0
      %s547 = scalar_select %p546, 1, 0
      %v548 = vstv %s547
      %vm549 = vcmp.eq.s32.totalorder %v548, 1
      %v550 = vsel %vm549, 0, %v544
      %v551 = vsel %vm549, 0, %v545
      %v552 = vld [vmem:[%s482] sm:$0xf]
      %v553 = vld [vmem:[%s482 + $0x4] sm:$0xf]
      %v554 = vsel %vm549, 0, %v552
      %v555 = vsel %vm549, 0, %v553
      %v592 = vunpack.c.l.b16 %v550
      %v593 = vunpack.c.l.b16 %v551
      %v594 = vunpack.c.l.b16 %v511
      %v595 = vunpack.c.l.b16 %v512
      %v596 = vunpack.c.l.b16 %v513
      %v597 = vunpack.c.l.b16 %v514
      %v598 = vunpack.c.l.b16 %v515
      %v599 = vunpack.c.l.b16 %v516
      %v600 = vunpack.c.l.b16 %v517
      %v601 = vunpack.c.l.b16 %v518
      %v602 = vunpack.c.l.b16 %v519
      %v603 = vunpack.c.l.b16 %v520
      %v604 = vunpack.c.l.b16 %v521
      %v605 = vunpack.c.l.b16 %v522
      %v606 = vunpack.c.l.b16 %v523
      %v607 = vunpack.c.l.b16 %v524
      %v608 = vunpack.c.l.b16 %v525
      %v609 = vunpack.c.l.b16 %v526
      %v610 = vunpack.c.l.b16 %v527
      %v611 = vunpack.c.l.b16 %v528
      %v612 = vunpack.c.l.b16 %v529
      %v613 = vunpack.c.l.b16 %v530
      %v614 = vunpack.c.l.b16 %v531
      %v615 = vunpack.c.l.b16 %v532
      %v616 = vunpack.c.l.b16 %v533
      %v617 = vunpack.c.l.b16 %v534
      %v618 = vunpack.c.l.b16 %v535
      %v619 = vunpack.c.l.b16 %v536
      %v620 = vunpack.c.l.b16 %v537
      %v621 = vunpack.c.l.b16 %v538
      %v622 = vunpack.c.l.b16 %v539
      %v623 = vunpack.c.l.b16 %v540
      %v624 = vunpack.c.l.b16 %v541
      %v625 = vunpack.c.l.b16 %v542
      %v626 = vunpack.c.l.b16 %v554
      %v627 = vunpack.c.l.b16 %v555
      %v628 = vpack.c.b16 %v593, %v592
      %v629 = vpack.c.b16 %v595, %v594
      %v630 = vpack.c.b16 %v597, %v596
      %v631 = vpack.c.b16 %v599, %v598
      %v632 = vpack.c.b16 %v601, %v600
      %v633 = vpack.c.b16 %v603, %v602
      %v634 = vpack.c.b16 %v605, %v604
      %v635 = vpack.c.b16 %v607, %v606
      %v636 = vpack.c.b16 %v609, %v608
      %v637 = vpack.c.b16 %v611, %v610
      %v638 = vpack.c.b16 %v613, %v612
      %v639 = vpack.c.b16 %v615, %v614
      %v640 = vpack.c.b16 %v617, %v616
      %v641 = vpack.c.b16 %v619, %v618
      %v642 = vpack.c.b16 %v621, %v620
      %v643 = vpack.c.b16 %v623, %v622
      %v644 = vpack.c.b16 %v625, %v624
      %v645 = vpack.c.b16 %v627, %v626
      %v647 = vshrl.u32 %v628, 16
      %v649 = vrot.slane %v647, 7
      %v650 = vshll.u32 %v628, 16
      %v652 = vor.u32 %v649, %v650
      %v654 = vshrl.u32 %v629, 16
      %v656 = vrot.slane %v654, 7
      %v657 = vshll.u32 %v629, 16
      %v659 = vor.u32 %v656, %v657
      %v661 = vshrl.u32 %v630, 16
      %v663 = vrot.slane %v661, 7
      %v664 = vshll.u32 %v630, 16
      %v666 = vor.u32 %v663, %v664
      %v668 = vshrl.u32 %v631, 16
      %v670 = vrot.slane %v668, 7
      %v671 = vshll.u32 %v631, 16
      %v673 = vor.u32 %v670, %v671
      %v675 = vshrl.u32 %v632, 16
      %v677 = vrot.slane %v675, 7
      %v678 = vshll.u32 %v632, 16
      %v680 = vor.u32 %v677, %v678
      %v682 = vshrl.u32 %v633, 16
      %v684 = vrot.slane %v682, 7
      %v685 = vshll.u32 %v633, 16
      %v687 = vor.u32 %v684, %v685
      %v689 = vshrl.u32 %v634, 16
      %v691 = vrot.slane %v689, 7
      %v692 = vshll.u32 %v634, 16
      %v694 = vor.u32 %v691, %v692
      %v696 = vshrl.u32 %v635, 16
      %v698 = vrot.slane %v696, 7
      %v699 = vshll.u32 %v635, 16
      %v701 = vor.u32 %v698, %v699
      %v703 = vshrl.u32 %v636, 16
      %v705 = vrot.slane %v703, 7
      %v706 = vshll.u32 %v636, 16
      %v708 = vor.u32 %v705, %v706
      %v710 = vshrl.u32 %v637, 16
      %v712 = vrot.slane %v710, 7
      %v713 = vshll.u32 %v637, 16
      %v715 = vor.u32 %v712, %v713
      %v717 = vshrl.u32 %v638, 16
      %v719 = vrot.slane %v717, 7
      %v720 = vshll.u32 %v638, 16
      %v722 = vor.u32 %v719, %v720
      %v724 = vshrl.u32 %v639, 16
      %v726 = vrot.slane %v724, 7
      %v727 = vshll.u32 %v639, 16
      %v729 = vor.u32 %v726, %v727
      %v731 = vshrl.u32 %v640, 16
      %v733 = vrot.slane %v731, 7
      %v734 = vshll.u32 %v640, 16
      %v736 = vor.u32 %v733, %v734
      %v738 = vshrl.u32 %v641, 16
      %v740 = vrot.slane %v738, 7
      %v741 = vshll.u32 %v641, 16
      %v743 = vor.u32 %v740, %v741
      %v745 = vshrl.u32 %v642, 16
      %v747 = vrot.slane %v745, 7
      %v748 = vshll.u32 %v642, 16
      %v750 = vor.u32 %v747, %v748
      %v752 = vshrl.u32 %v643, 16
      %v754 = vrot.slane %v752, 7
      %v755 = vshll.u32 %v643, 16
      %v757 = vor.u32 %v754, %v755
      %v759 = vshrl.u32 %v644, 16
      %v761 = vrot.slane %v759, 7
      %v762 = vshll.u32 %v644, 16
      %v764 = vor.u32 %v761, %v762
      %v766 = vshrl.u32 %v645, 16
      %v768 = vrot.slane %v766, 7
      %v769 = vshll.u32 %v645, 16
      %v771 = vor.u32 %v768, %v769
      %772 = vrot.lane.b32.xlu0 %v652, 124
      %v773 = vpop.permute.xlu0 %772
      %774 = vrot.lane.b32.xlu0 %v659, 124
      %v775 = vpop.permute.xlu0 %774
      %776 = vrot.lane.b32.xlu0 %v666, 124
      %v777 = vpop.permute.xlu0 %776
      %778 = vrot.lane.b32.xlu0 %v673, 124
      %v779 = vpop.permute.xlu0 %778
      %780 = vrot.lane.b32.xlu0 %v680, 124
      %v781 = vpop.permute.xlu0 %780
      %782 = vrot.lane.b32.xlu0 %v687, 124
      %v783 = vpop.permute.xlu0 %782
      %784 = vrot.lane.b32.xlu0 %v694, 124
      %v785 = vpop.permute.xlu0 %784
      %786 = vrot.lane.b32.xlu0 %v701, 124
      %v787 = vpop.permute.xlu0 %786
      %788 = vrot.lane.b32.xlu0 %v708, 124
      %v789 = vpop.permute.xlu0 %788
      %790 = vrot.lane.b32.xlu0 %v715, 124
      %v791 = vpop.permute.xlu0 %790
      %792 = vrot.lane.b32.xlu0 %v722, 124
      %v793 = vpop.permute.xlu0 %792
      %794 = vrot.lane.b32.xlu0 %v729, 124
      %v795 = vpop.permute.xlu0 %794
      %796 = vrot.lane.b32.xlu0 %v736, 124
      %v797 = vpop.permute.xlu0 %796
      %798 = vrot.lane.b32.xlu0 %v743, 124
      %v799 = vpop.permute.xlu0 %798
      %800 = vrot.lane.b32.xlu0 %v750, 124
      %v801 = vpop.permute.xlu0 %800
      %802 = vrot.lane.b32.xlu0 %v757, 124
      %v803 = vpop.permute.xlu0 %802
      %804 = vrot.lane.b32.xlu0 %v764, 124
      %v805 = vpop.permute.xlu0 %804
      %806 = vrot.lane.b32.xlu0 %v771, 124
      %v807 = vpop.permute.xlu0 %806
      %vm826 = vcmask 1040384
      %vm827 = vsmask.f32 256
      %vm828 = vmand %vm826, %vm827
      %v829 = vsel %vm828, 0, %v773
      %v830 = vsel %vm828, 0, %v775
      %v831 = vsel %vm828, 0, %v777
      %v832 = vsel %vm828, 0, %v779
      %v833 = vsel %vm828, 0, %v781
      %v834 = vsel %vm828, 0, %v783
      %v835 = vsel %vm828, 0, %v785
      %v836 = vsel %vm828, 0, %v787
      %v837 = vsel %vm828, 0, %v789
      %v838 = vsel %vm828, 0, %v791
      %v839 = vsel %vm828, 0, %v793
      %v840 = vsel %vm828, 0, %v795
      %v841 = vsel %vm828, 0, %v797
      %v842 = vsel %vm828, 0, %v799
      %v843 = vsel %vm828, 0, %v801
      %v844 = vsel %vm828, 0, %v803
      %v845 = vsel %vm828, 0, %v805
      %v846 = vsel %vm828, 0, %v807
      %v847 = vrot.slane %v650, 1
      %v848 = vor.u32 %v647, %v847
      %v849 = vrot.slane %v657, 1
      %v850 = vor.u32 %v654, %v849
      %v851 = vrot.slane %v664, 1
      %v852 = vor.u32 %v661, %v851
      %v853 = vrot.slane %v671, 1
      %v854 = vor.u32 %v668, %v853
      %v855 = vrot.slane %v678, 1
      %v856 = vor.u32 %v675, %v855
      %v857 = vrot.slane %v685, 1
      %v858 = vor.u32 %v682, %v857
      %v859 = vrot.slane %v692, 1
      %v860 = vor.u32 %v689, %v859
      %v861 = vrot.slane %v699, 1
      %v862 = vor.u32 %v696, %v861
      %v863 = vrot.slane %v706, 1
      %v864 = vor.u32 %v703, %v863
      %v865 = vrot.slane %v713, 1
      %v866 = vor.u32 %v710, %v865
      %v867 = vrot.slane %v720, 1
      %v868 = vor.u32 %v717, %v867
      %v869 = vrot.slane %v727, 1
      %v870 = vor.u32 %v724, %v869
      %v871 = vrot.slane %v734, 1
      %v872 = vor.u32 %v731, %v871
      %v873 = vrot.slane %v741, 1
      %v874 = vor.u32 %v738, %v873
      %v875 = vrot.slane %v748, 1
      %v876 = vor.u32 %v745, %v875
      %v877 = vrot.slane %v755, 1
      %v878 = vor.u32 %v752, %v877
      %v879 = vrot.slane %v762, 1
      %v880 = vor.u32 %v759, %v879
      %v881 = vrot.slane %v769, 1
      %v882 = vor.u32 %v766, %v881
      %vm901 = vcmask 1047552
      %vm902 = vsmask.f32 7424
      %vm903 = vmand %vm901, %vm902
      %v904 = vsel %vm903, %v848, 0
      %v905 = vsel %vm903, %v850, 0
      %v906 = vsel %vm903, %v852, 0
      %v907 = vsel %vm903, %v854, 0
      %v908 = vsel %vm903, %v856, 0
      %v909 = vsel %vm903, %v858, 0
      %v910 = vsel %vm903, %v860, 0
      %v911 = vsel %vm903, %v862, 0
      %v912 = vsel %vm903, %v864, 0
      %v913 = vsel %vm903, %v866, 0
      %v914 = vsel %vm903, %v868, 0
      %v915 = vsel %vm903, %v870, 0
      %v916 = vsel %vm903, %v872, 0
      %v917 = vsel %vm903, %v874, 0
      %v918 = vsel %vm903, %v876, 0
      %v919 = vsel %vm903, %v878, 0
      %v920 = vsel %vm903, %v880, 0
      %v921 = vsel %vm903, %v882, 0
      %v922 = vld [vmem:[%s3] sm:$0xf]
      %vm923 = vcmask 64512
      %v924 = vsel %vm923, %v628, 0
      %v926 = vsel %vm923, %v629, 0
      %v928 = vsel %vm923, %v630, 0
      %v930 = vsel %vm923, %v631, 0
      %v932 = vsel %vm923, %v632, 0
      %v934 = vsel %vm923, %v633, 0
      %v936 = vsel %vm923, %v634, 0
      %v938 = vsel %vm923, %v635, 0
      %v940 = vsel %vm923, %v636, 0
      %v942 = vsel %vm923, %v637, 0
      %v944 = vsel %vm923, %v638, 0
      %v946 = vsel %vm923, %v639, 0
      %v948 = vsel %vm923, %v640, 0
      %v950 = vsel %vm923, %v641, 0
      %v952 = vsel %vm923, %v642, 0
      %v954 = vsel %vm923, %v643, 0
      %vm956 = vcmask 1043456
      %v958 = vsel %vm956, %v922, 0
      %960 = vmatpush.bf16.msra.mxu0 0
      %961 = vmatpush.bf16.msra.mxu0 0
      %962 = vmatpush.bf16.msra.mxu0 0
      %963 = vmatpush.bf16.msra.mxu0 0
      %964 = vmatpush.bf16.msra.mxu0 0
      %965 = vmatpush.bf16.msra.mxu0 0
      %966 = vmatpush.bf16.msra.mxu0 0
      %967 = vmatpush.bf16.msra.mxu0 %v958
      %968 = vmatmul.bf16.gmra.mxu0 %v924
      %v969 = vpop.f32.mrf.mxu0
      %v970 = vadd.f32 0.0, %v969
      %v971 = vpop.f32.mrf.mxu0
      %v972 = vadd.f32 0.0, %v971
      %973 = vmatmul.bf16.gmra.mxu0 %v926
      %v974 = vpop.f32.mrf.mxu0
      %v975 = vadd.f32 0.0, %v974
      %v976 = vpop.f32.mrf.mxu0
      %v977 = vadd.f32 0.0, %v976
      %978 = vmatmul.bf16.gmra.mxu0 %v928
      %v979 = vpop.f32.mrf.mxu0
      %v980 = vadd.f32 0.0, %v979
      %v981 = vpop.f32.mrf.mxu0
      %v982 = vadd.f32 0.0, %v981
      %983 = vmatmul.bf16.gmra.mxu0 %v930
      %v984 = vpop.f32.mrf.mxu0
      %v985 = vadd.f32 0.0, %v984
      %v986 = vpop.f32.mrf.mxu0
      %v987 = vadd.f32 0.0, %v986
      %988 = vmatmul.bf16.gmra.mxu0 %v932
      %v989 = vpop.f32.mrf.mxu0
      %v990 = vadd.f32 0.0, %v989
      %v991 = vpop.f32.mrf.mxu0
      %v992 = vadd.f32 0.0, %v991
      %993 = vmatmul.bf16.gmra.mxu0 %v934
      %v994 = vpop.f32.mrf.mxu0
      %v995 = vadd.f32 0.0, %v994
      %v996 = vpop.f32.mrf.mxu0
      %v997 = vadd.f32 0.0, %v996
      %998 = vmatmul.bf16.gmra.mxu0 %v936
      %v999 = vpop.f32.mrf.mxu0
      %v1000 = vadd.f32 0.0, %v999
      %v1001 = vpop.f32.mrf.mxu0
      %v1002 = vadd.f32 0.0, %v1001
      %1003 = vmatmul.bf16.gmra.mxu0 %v938
      %v1004 = vpop.f32.mrf.mxu0
      %v1005 = vadd.f32 0.0, %v1004
      %v1006 = vpop.f32.mrf.mxu0
      %v1007 = vadd.f32 0.0, %v1006
      %1008 = vmatmul.bf16.gmra.mxu0 %v940
      %v1009 = vpop.f32.mrf.mxu0
      %v1010 = vadd.f32 0.0, %v1009
      %v1011 = vpop.f32.mrf.mxu0
      %v1012 = vadd.f32 0.0, %v1011
      %1013 = vmatmul.bf16.gmra.mxu0 %v942
      %v1014 = vpop.f32.mrf.mxu0
      %v1015 = vadd.f32 0.0, %v1014
      %v1016 = vpop.f32.mrf.mxu0
      %v1017 = vadd.f32 0.0, %v1016
      %1018 = vmatmul.bf16.gmra.mxu0 %v944
      %v1019 = vpop.f32.mrf.mxu0
      %v1020 = vadd.f32 0.0, %v1019
      %v1021 = vpop.f32.mrf.mxu0
      %v1022 = vadd.f32 0.0, %v1021
      %1023 = vmatmul.bf16.gmra.mxu0 %v946
      %v1024 = vpop.f32.mrf.mxu0
      %v1025 = vadd.f32 0.0, %v1024
      %v1026 = vpop.f32.mrf.mxu0
      %v1027 = vadd.f32 0.0, %v1026
      %1028 = vmatmul.bf16.gmra.mxu0 %v948
      %v1029 = vpop.f32.mrf.mxu0
      %v1030 = vadd.f32 0.0, %v1029
      %v1031 = vpop.f32.mrf.mxu0
      %v1032 = vadd.f32 0.0, %v1031
      %1033 = vmatmul.bf16.gmra.mxu0 %v950
      %v1034 = vpop.f32.mrf.mxu0
      %v1035 = vadd.f32 0.0, %v1034
      %v1036 = vpop.f32.mrf.mxu0
      %v1037 = vadd.f32 0.0, %v1036
      %1038 = vmatmul.bf16.gmra.mxu0 %v952
      %v1039 = vpop.f32.mrf.mxu0
      %v1040 = vadd.f32 0.0, %v1039
      %v1041 = vpop.f32.mrf.mxu0
      %v1042 = vadd.f32 0.0, %v1041
      %1043 = vmatmul.bf16.gmra.mxu0 %v954
      %v1044 = vpop.f32.mrf.mxu0
      %v1045 = vadd.f32 0.0, %v1044
      %v1046 = vpop.f32.mrf.mxu0
      %v1047 = vadd.f32 0.0, %v1046
      %1048 = vdwg.mxu0
      %v1049 = vadd.f32 %v970, 0.0
      %v1050 = vadd.f32 %v972, 0.0
      %v1051 = vadd.f32 %v975, 0.0
      %v1052 = vadd.f32 %v977, 0.0
      %v1053 = vadd.f32 %v980, 0.0
      %v1054 = vadd.f32 %v982, 0.0
      %v1055 = vadd.f32 %v985, 0.0
      %v1056 = vadd.f32 %v987, 0.0
      %v1057 = vadd.f32 %v990, 0.0
      %v1058 = vadd.f32 %v992, 0.0
      %v1059 = vadd.f32 %v995, 0.0
      %v1060 = vadd.f32 %v997, 0.0
      %v1061 = vadd.f32 %v1000, 0.0
      %v1062 = vadd.f32 %v1002, 0.0
      %v1063 = vadd.f32 %v1005, 0.0
      %v1064 = vadd.f32 %v1007, 0.0
      %v1065 = vadd.f32 %v1010, 0.0
      %v1066 = vadd.f32 %v1012, 0.0
      %v1067 = vadd.f32 %v1015, 0.0
      %v1068 = vadd.f32 %v1017, 0.0
      %v1069 = vadd.f32 %v1020, 0.0
      %v1070 = vadd.f32 %v1022, 0.0
      %v1071 = vadd.f32 %v1025, 0.0
      %v1072 = vadd.f32 %v1027, 0.0
      %v1073 = vadd.f32 %v1030, 0.0
      %v1074 = vadd.f32 %v1032, 0.0
      %v1075 = vadd.f32 %v1035, 0.0
      %v1076 = vadd.f32 %v1037, 0.0
      %v1077 = vadd.f32 %v1040, 0.0
      %v1078 = vadd.f32 %v1042, 0.0
      %v1079 = vadd.f32 %v1045, 0.0
      %v1080 = vadd.f32 %v1047, 0.0
      %v1081 = vld [vmem:[%s4] sm:$0x3]
      %vm1082 = vcmask 31744
      %v1084 = vsel %vm1082, %v829, 0
      %v1087 = vsel %vm1082, %v830, 0
      %v1090 = vsel %vm1082, %v831, 0
      %v1093 = vsel %vm1082, %v832, 0
      %v1096 = vsel %vm1082, %v833, 0
      %v1099 = vsel %vm1082, %v834, 0
      %v1102 = vsel %vm1082, %v835, 0
      %v1105 = vsel %vm1082, %v836, 0
      %v1108 = vsel %vm1082, %v837, 0
      %v1111 = vsel %vm1082, %v838, 0
      %v1114 = vsel %vm1082, %v839, 0
      %v1117 = vsel %vm1082, %v840, 0
      %v1120 = vsel %vm1082, %v841, 0
      %v1123 = vsel %vm1082, %v842, 0
      %v1126 = vsel %vm1082, %v843, 0
      %v1129 = vsel %vm1082, %v844, 0
      %vm1131 = vcmask 1041408
      %v1133 = vsel %vm1131, %v1081, 0
      %1135 = vmatpush.bf16.msra.mxu0 0
      %1136 = vmatpush.bf16.msra.mxu0 0
      %1137 = vmatpush.bf16.msra.mxu0 0
      %1138 = vmatpush.bf16.msra.mxu0 0
      %1139 = vmatpush.bf16.msra.mxu0 0
      %1140 = vmatpush.bf16.msra.mxu0 0
      %1141 = vmatpush.bf16.msra.mxu0 0
      %1142 = vmatpush.bf16.msra.mxu0 %v1133
      %1143 = vmatmul.bf16.gmra.mxu0 %v1084
      %v1144 = vpop.f32.mrf.mxu0
      %v1145 = vadd.f32 0.0, %v1144
      %v1146 = vpop.f32.mrf.mxu0
      %v1147 = vadd.f32 0.0, %v1146
      %1148 = vmatmul.bf16.gmra.mxu0 %v1087
      %v1149 = vpop.f32.mrf.mxu0
      %v1150 = vadd.f32 0.0, %v1149
      %v1151 = vpop.f32.mrf.mxu0
      %v1152 = vadd.f32 0.0, %v1151
      %1153 = vmatmul.bf16.gmra.mxu0 %v1090
      %v1154 = vpop.f32.mrf.mxu0
      %v1155 = vadd.f32 0.0, %v1154
      %v1156 = vpop.f32.mrf.mxu0
      %v1157 = vadd.f32 0.0, %v1156
      %1158 = vmatmul.bf16.gmra.mxu0 %v1093
      %v1159 = vpop.f32.mrf.mxu0
      %v1160 = vadd.f32 0.0, %v1159
      %v1161 = vpop.f32.mrf.mxu0
      %v1162 = vadd.f32 0.0, %v1161
      %1163 = vmatmul.bf16.gmra.mxu0 %v1096
      %v1164 = vpop.f32.mrf.mxu0
      %v1165 = vadd.f32 0.0, %v1164
      %v1166 = vpop.f32.mrf.mxu0
      %v1167 = vadd.f32 0.0, %v1166
      %1168 = vmatmul.bf16.gmra.mxu0 %v1099
      %v1169 = vpop.f32.mrf.mxu0
      %v1170 = vadd.f32 0.0, %v1169
      %v1171 = vpop.f32.mrf.mxu0
      %v1172 = vadd.f32 0.0, %v1171
      %1173 = vmatmul.bf16.gmra.mxu0 %v1102
      %v1174 = vpop.f32.mrf.mxu0
      %v1175 = vadd.f32 0.0, %v1174
      %v1176 = vpop.f32.mrf.mxu0
      %v1177 = vadd.f32 0.0, %v1176
      %1178 = vmatmul.bf16.gmra.mxu0 %v1105
      %v1179 = vpop.f32.mrf.mxu0
      %v1180 = vadd.f32 0.0, %v1179
      %v1181 = vpop.f32.mrf.mxu0
      %v1182 = vadd.f32 0.0, %v1181
      %1183 = vmatmul.bf16.gmra.mxu0 %v1108
      %v1184 = vpop.f32.mrf.mxu0
      %v1185 = vadd.f32 0.0, %v1184
      %v1186 = vpop.f32.mrf.mxu0
      %v1187 = vadd.f32 0.0, %v1186
      %1188 = vmatmul.bf16.gmra.mxu0 %v1111
      %v1189 = vpop.f32.mrf.mxu0
      %v1190 = vadd.f32 0.0, %v1189
      %v1191 = vpop.f32.mrf.mxu0
      %v1192 = vadd.f32 0.0, %v1191
      %1193 = vmatmul.bf16.gmra.mxu0 %v1114
      %v1194 = vpop.f32.mrf.mxu0
      %v1195 = vadd.f32 0.0, %v1194
      %v1196 = vpop.f32.mrf.mxu0
      %v1197 = vadd.f32 0.0, %v1196
      %1198 = vmatmul.bf16.gmra.mxu0 %v1117
      %v1199 = vpop.f32.mrf.mxu0
      %v1200 = vadd.f32 0.0, %v1199
      %v1201 = vpop.f32.mrf.mxu0
      %v1202 = vadd.f32 0.0, %v1201
      %1203 = vmatmul.bf16.gmra.mxu0 %v1120
      %v1204 = vpop.f32.mrf.mxu0
      %v1205 = vadd.f32 0.0, %v1204
      %v1206 = vpop.f32.mrf.mxu0
      %v1207 = vadd.f32 0.0, %v1206
      %1208 = vmatmul.bf16.gmra.mxu0 %v1123
      %v1209 = vpop.f32.mrf.mxu0
      %v1210 = vadd.f32 0.0, %v1209
      %v1211 = vpop.f32.mrf.mxu0
      %v1212 = vadd.f32 0.0, %v1211
      %1213 = vmatmul.bf16.gmra.mxu0 %v1126
      %v1214 = vpop.f32.mrf.mxu0
      %v1215 = vadd.f32 0.0, %v1214
      %v1216 = vpop.f32.mrf.mxu0
      %v1217 = vadd.f32 0.0, %v1216
      %1218 = vmatmul.bf16.gmra.mxu0 %v1129
      %v1219 = vpop.f32.mrf.mxu0
      %v1220 = vadd.f32 0.0, %v1219
      %v1221 = vpop.f32.mrf.mxu0
      %v1222 = vadd.f32 0.0, %v1221
      %1223 = vdwg.mxu0
      %v1224 = vadd.f32 %v1049, %v1145
      %v1225 = vadd.f32 %v1050, %v1147
      %v1226 = vadd.f32 %v1051, %v1150
      %v1227 = vadd.f32 %v1052, %v1152
      %v1228 = vadd.f32 %v1053, %v1155
      %v1229 = vadd.f32 %v1054, %v1157
      %v1230 = vadd.f32 %v1055, %v1160
      %v1231 = vadd.f32 %v1056, %v1162
      %v1232 = vadd.f32 %v1057, %v1165
      %v1233 = vadd.f32 %v1058, %v1167
      %v1234 = vadd.f32 %v1059, %v1170
      %v1235 = vadd.f32 %v1060, %v1172
      %v1236 = vadd.f32 %v1061, %v1175
      %v1237 = vadd.f32 %v1062, %v1177
      %v1238 = vadd.f32 %v1063, %v1180
      %v1239 = vadd.f32 %v1064, %v1182
      %v1240 = vadd.f32 %v1065, %v1185
      %v1241 = vadd.f32 %v1066, %v1187
      %v1242 = vadd.f32 %v1067, %v1190
      %v1243 = vadd.f32 %v1068, %v1192
      %v1244 = vadd.f32 %v1069, %v1195
      %v1245 = vadd.f32 %v1070, %v1197
      %v1246 = vadd.f32 %v1071, %v1200
      %v1247 = vadd.f32 %v1072, %v1202
      %v1248 = vadd.f32 %v1073, %v1205
      %v1249 = vadd.f32 %v1074, %v1207
      %v1250 = vadd.f32 %v1075, %v1210
      %v1251 = vadd.f32 %v1076, %v1212
      %v1252 = vadd.f32 %v1077, %v1215
      %v1253 = vadd.f32 %v1078, %v1217
      %v1254 = vadd.f32 %v1079, %v1220
      %v1255 = vadd.f32 %v1080, %v1222
      %v1256 = vld [vmem:[%s5] sm:$0x3]
      %v1258 = vsel %vm1082, %v904, 0
      %v1261 = vsel %vm1082, %v905, 0
      %v1264 = vsel %vm1082, %v906, 0
      %v1267 = vsel %vm1082, %v907, 0
      %v1270 = vsel %vm1082, %v908, 0
      %v1273 = vsel %vm1082, %v909, 0
      %v1276 = vsel %vm1082, %v910, 0
      %v1279 = vsel %vm1082, %v911, 0
      %v1282 = vsel %vm1082, %v912, 0
      %v1285 = vsel %vm1082, %v913, 0
      %v1288 = vsel %vm1082, %v914, 0
      %v1291 = vsel %vm1082, %v915, 0
      %v1294 = vsel %vm1082, %v916, 0
      %v1297 = vsel %vm1082, %v917, 0
      %v1300 = vsel %vm1082, %v918, 0
      %v1303 = vsel %vm1082, %v919, 0
      %v1306 = vsel %vm1131, %v1256, 0
      %1308 = vmatpush.bf16.msra.mxu0 0
      %1309 = vmatpush.bf16.msra.mxu0 0
      %1310 = vmatpush.bf16.msra.mxu0 0
      %1311 = vmatpush.bf16.msra.mxu0 0
      %1312 = vmatpush.bf16.msra.mxu0 0
      %1313 = vmatpush.bf16.msra.mxu0 0
      %1314 = vmatpush.bf16.msra.mxu0 0
      %1315 = vmatpush.bf16.msra.mxu0 %v1306
      %1316 = vmatmul.bf16.gmra.mxu0 %v1258
      %v1317 = vpop.f32.mrf.mxu0
      %v1318 = vadd.f32 0.0, %v1317
      %v1319 = vpop.f32.mrf.mxu0
      %v1320 = vadd.f32 0.0, %v1319
      %1321 = vmatmul.bf16.gmra.mxu0 %v1261
      %v1322 = vpop.f32.mrf.mxu0
      %v1323 = vadd.f32 0.0, %v1322
      %v1324 = vpop.f32.mrf.mxu0
      %v1325 = vadd.f32 0.0, %v1324
      %1326 = vmatmul.bf16.gmra.mxu0 %v1264
      %v1327 = vpop.f32.mrf.mxu0
      %v1328 = vadd.f32 0.0, %v1327
      %v1329 = vpop.f32.mrf.mxu0
      %v1330 = vadd.f32 0.0, %v1329
      %1331 = vmatmul.bf16.gmra.mxu0 %v1267
      %v1332 = vpop.f32.mrf.mxu0
      %v1333 = vadd.f32 0.0, %v1332
      %v1334 = vpop.f32.mrf.mxu0
      %v1335 = vadd.f32 0.0, %v1334
      %1336 = vmatmul.bf16.gmra.mxu0 %v1270
      %v1337 = vpop.f32.mrf.mxu0
      %v1338 = vadd.f32 0.0, %v1337
      %v1339 = vpop.f32.mrf.mxu0
      %v1340 = vadd.f32 0.0, %v1339
      %1341 = vmatmul.bf16.gmra.mxu0 %v1273
      %v1342 = vpop.f32.mrf.mxu0
      %v1343 = vadd.f32 0.0, %v1342
      %v1344 = vpop.f32.mrf.mxu0
      %v1345 = vadd.f32 0.0, %v1344
      %1346 = vmatmul.bf16.gmra.mxu0 %v1276
      %v1347 = vpop.f32.mrf.mxu0
      %v1348 = vadd.f32 0.0, %v1347
      %v1349 = vpop.f32.mrf.mxu0
      %v1350 = vadd.f32 0.0, %v1349
      %1351 = vmatmul.bf16.gmra.mxu0 %v1279
      %v1352 = vpop.f32.mrf.mxu0
      %v1353 = vadd.f32 0.0, %v1352
      %v1354 = vpop.f32.mrf.mxu0
      %v1355 = vadd.f32 0.0, %v1354
      %1356 = vmatmul.bf16.gmra.mxu0 %v1282
      %v1357 = vpop.f32.mrf.mxu0
      %v1358 = vadd.f32 0.0, %v1357
      %v1359 = vpop.f32.mrf.mxu0
      %v1360 = vadd.f32 0.0, %v1359
      %1361 = vmatmul.bf16.gmra.mxu0 %v1285
      %v1362 = vpop.f32.mrf.mxu0
      %v1363 = vadd.f32 0.0, %v1362
      %v1364 = vpop.f32.mrf.mxu0
      %v1365 = vadd.f32 0.0, %v1364
      %1366 = vmatmul.bf16.gmra.mxu0 %v1288
      %v1367 = vpop.f32.mrf.mxu0
      %v1368 = vadd.f32 0.0, %v1367
      %v1369 = vpop.f32.mrf.mxu0
      %v1370 = vadd.f32 0.0, %v1369
      %1371 = vmatmul.bf16.gmra.mxu0 %v1291
      %v1372 = vpop.f32.mrf.mxu0
      %v1373 = vadd.f32 0.0, %v1372
      %v1374 = vpop.f32.mrf.mxu0
      %v1375 = vadd.f32 0.0, %v1374
      %1376 = vmatmul.bf16.gmra.mxu0 %v1294
      %v1377 = vpop.f32.mrf.mxu0
      %v1378 = vadd.f32 0.0, %v1377
      %v1379 = vpop.f32.mrf.mxu0
      %v1380 = vadd.f32 0.0, %v1379
      %1381 = vmatmul.bf16.gmra.mxu0 %v1297
      %v1382 = vpop.f32.mrf.mxu0
      %v1383 = vadd.f32 0.0, %v1382
      %v1384 = vpop.f32.mrf.mxu0
      %v1385 = vadd.f32 0.0, %v1384
      %1386 = vmatmul.bf16.gmra.mxu0 %v1300
      %v1387 = vpop.f32.mrf.mxu0
      %v1388 = vadd.f32 0.0, %v1387
      %v1389 = vpop.f32.mrf.mxu0
      %v1390 = vadd.f32 0.0, %v1389
      %1391 = vmatmul.bf16.gmra.mxu0 %v1303
      %v1392 = vpop.f32.mrf.mxu0
      %v1393 = vadd.f32 0.0, %v1392
      %v1394 = vpop.f32.mrf.mxu0
      %v1395 = vadd.f32 0.0, %v1394
      %1396 = vdwg.mxu0
      %1429 = vrot.lane.b32.xlu0 %v1318, 4
      %v1430 = vpop.permute.xlu0 %1429
      %1431 = vrot.lane.b32.xlu0 %v1320, 4
      %v1432 = vpop.permute.xlu0 %1431
      %1433 = vrot.lane.b32.xlu0 %v1323, 4
      %v1434 = vpop.permute.xlu0 %1433
      %1435 = vrot.lane.b32.xlu0 %v1325, 4
      %v1436 = vpop.permute.xlu0 %1435
      %1437 = vrot.lane.b32.xlu0 %v1328, 4
      %v1438 = vpop.permute.xlu0 %1437
      %1439 = vrot.lane.b32.xlu0 %v1330, 4
      %v1440 = vpop.permute.xlu0 %1439
      %1441 = vrot.lane.b32.xlu0 %v1333, 4
      %v1442 = vpop.permute.xlu0 %1441
      %1443 = vrot.lane.b32.xlu0 %v1335, 4
      %v1444 = vpop.permute.xlu0 %1443
      %1445 = vrot.lane.b32.xlu0 %v1338, 4
      %v1446 = vpop.permute.xlu0 %1445
      %1447 = vrot.lane.b32.xlu0 %v1340, 4
      %v1448 = vpop.permute.xlu0 %1447
      %1449 = vrot.lane.b32.xlu0 %v1343, 4
      %v1450 = vpop.permute.xlu0 %1449
      %1451 = vrot.lane.b32.xlu0 %v1345, 4
      %v1452 = vpop.permute.xlu0 %1451
      %1453 = vrot.lane.b32.xlu0 %v1348, 4
      %v1454 = vpop.permute.xlu0 %1453
      %1455 = vrot.lane.b32.xlu0 %v1350, 4
      %v1456 = vpop.permute.xlu0 %1455
      %1457 = vrot.lane.b32.xlu0 %v1353, 4
      %v1458 = vpop.permute.xlu0 %1457
      %1459 = vrot.lane.b32.xlu0 %v1355, 4
      %v1460 = vpop.permute.xlu0 %1459
      %1461 = vrot.lane.b32.xlu0 %v1358, 4
      %v1462 = vpop.permute.xlu0 %1461
      %1463 = vrot.lane.b32.xlu0 %v1360, 4
      %v1464 = vpop.permute.xlu0 %1463
      %1465 = vrot.lane.b32.xlu0 %v1363, 4
      %v1466 = vpop.permute.xlu0 %1465
      %1467 = vrot.lane.b32.xlu0 %v1365, 4
      %v1468 = vpop.permute.xlu0 %1467
      %1469 = vrot.lane.b32.xlu0 %v1368, 4
      %v1470 = vpop.permute.xlu0 %1469
      %1471 = vrot.lane.b32.xlu0 %v1370, 4
      %v1472 = vpop.permute.xlu0 %1471
      %1473 = vrot.lane.b32.xlu0 %v1373, 4
      %v1474 = vpop.permute.xlu0 %1473
      %1475 = vrot.lane.b32.xlu0 %v1375, 4
      %v1476 = vpop.permute.xlu0 %1475
      %1477 = vrot.lane.b32.xlu0 %v1378, 4
      %v1478 = vpop.permute.xlu0 %1477
      %1479 = vrot.lane.b32.xlu0 %v1380, 4
      %v1480 = vpop.permute.xlu0 %1479
      %1481 = vrot.lane.b32.xlu0 %v1383, 4
      %v1482 = vpop.permute.xlu0 %1481
      %1483 = vrot.lane.b32.xlu0 %v1385, 4
      %v1484 = vpop.permute.xlu0 %1483
      %1485 = vrot.lane.b32.xlu0 %v1388, 4
      %v1486 = vpop.permute.xlu0 %1485
      %1487 = vrot.lane.b32.xlu0 %v1390, 4
      %v1488 = vpop.permute.xlu0 %1487
      %1489 = vrot.lane.b32.xlu0 %v1393, 4
      %v1490 = vpop.permute.xlu0 %1489
      %1491 = vrot.lane.b32.xlu0 %v1395, 4
      %v1492 = vpop.permute.xlu0 %1491
      %v1525 = vadd.f32 %v1049, %v1430
      %v1526 = vadd.f32 %v1050, %v1432
      %v1527 = vadd.f32 %v1051, %v1434
      %v1528 = vadd.f32 %v1052, %v1436
      %v1529 = vadd.f32 %v1053, %v1438
      %v1530 = vadd.f32 %v1054, %v1440
      %v1531 = vadd.f32 %v1055, %v1442
      %v1532 = vadd.f32 %v1056, %v1444
      %v1533 = vadd.f32 %v1057, %v1446
      %v1534 = vadd.f32 %v1058, %v1448
      %v1535 = vadd.f32 %v1059, %v1450
      %v1536 = vadd.f32 %v1060, %v1452
      %v1537 = vadd.f32 %v1061, %v1454
      %v1538 = vadd.f32 %v1062, %v1456
      %v1539 = vadd.f32 %v1063, %v1458
      %v1540 = vadd.f32 %v1064, %v1460
      %v1541 = vadd.f32 %v1065, %v1462
      %v1542 = vadd.f32 %v1066, %v1464
      %v1543 = vadd.f32 %v1067, %v1466
      %v1544 = vadd.f32 %v1068, %v1468
      %v1545 = vadd.f32 %v1069, %v1470
      %v1546 = vadd.f32 %v1070, %v1472
      %v1547 = vadd.f32 %v1071, %v1474
      %v1548 = vadd.f32 %v1072, %v1476
      %v1549 = vadd.f32 %v1073, %v1478
      %v1550 = vadd.f32 %v1074, %v1480
      %v1551 = vadd.f32 %v1075, %v1482
      %v1552 = vadd.f32 %v1076, %v1484
      %v1553 = vadd.f32 %v1077, %v1486
      %v1554 = vadd.f32 %v1078, %v1488
      %v1555 = vadd.f32 %v1079, %v1490
      %v1556 = vadd.f32 %v1080, %v1492
      %s1557 = scalar_lea.vmem %s3, 4
      %v1558 = vld [vmem:[%s1557] sm:$0xf]
      %v1559 = vsel %vm923, %v644, 0
      %v1562 = vsel %vm956, %v1558, 0
      %1564 = vmatpush.bf16.msra.mxu0 0
      %1565 = vmatpush.bf16.msra.mxu0 0
      %1566 = vmatpush.bf16.msra.mxu0 0
      %1567 = vmatpush.bf16.msra.mxu0 0
      %1568 = vmatpush.bf16.msra.mxu0 0
      %1569 = vmatpush.bf16.msra.mxu0 0
      %1570 = vmatpush.bf16.msra.mxu0 0
      %1571 = vmatpush.bf16.msra.mxu0 %v1562
      %1572 = vmatmul.bf16.gmra.mxu0 %v926
      %v1573 = vpop.f32.mrf.mxu0
      %v1574 = vadd.f32 0.0, %v1573
      %v1575 = vpop.f32.mrf.mxu0
      %v1576 = vadd.f32 0.0, %v1575
      %1577 = vmatmul.bf16.gmra.mxu0 %v928
      %v1578 = vpop.f32.mrf.mxu0
      %v1579 = vadd.f32 0.0, %v1578
      %v1580 = vpop.f32.mrf.mxu0
      %v1581 = vadd.f32 0.0, %v1580
      %1582 = vmatmul.bf16.gmra.mxu0 %v930
      %v1583 = vpop.f32.mrf.mxu0
      %v1584 = vadd.f32 0.0, %v1583
      %v1585 = vpop.f32.mrf.mxu0
      %v1586 = vadd.f32 0.0, %v1585
      %1587 = vmatmul.bf16.gmra.mxu0 %v932
      %v1588 = vpop.f32.mrf.mxu0
      %v1589 = vadd.f32 0.0, %v1588
      %v1590 = vpop.f32.mrf.mxu0
      %v1591 = vadd.f32 0.0, %v1590
      %1592 = vmatmul.bf16.gmra.mxu0 %v934
      %v1593 = vpop.f32.mrf.mxu0
      %v1594 = vadd.f32 0.0, %v1593
      %v1595 = vpop.f32.mrf.mxu0
      %v1596 = vadd.f32 0.0, %v1595
      %1597 = vmatmul.bf16.gmra.mxu0 %v936
      %v1598 = vpop.f32.mrf.mxu0
      %v1599 = vadd.f32 0.0, %v1598
      %v1600 = vpop.f32.mrf.mxu0
      %v1601 = vadd.f32 0.0, %v1600
      %1602 = vmatmul.bf16.gmra.mxu0 %v938
      %v1603 = vpop.f32.mrf.mxu0
      %v1604 = vadd.f32 0.0, %v1603
      %v1605 = vpop.f32.mrf.mxu0
      %v1606 = vadd.f32 0.0, %v1605
      %1607 = vmatmul.bf16.gmra.mxu0 %v940
      %v1608 = vpop.f32.mrf.mxu0
      %v1609 = vadd.f32 0.0, %v1608
      %v1610 = vpop.f32.mrf.mxu0
      %v1611 = vadd.f32 0.0, %v1610
      %1612 = vmatmul.bf16.gmra.mxu0 %v942
      %v1613 = vpop.f32.mrf.mxu0
      %v1614 = vadd.f32 0.0, %v1613
      %v1615 = vpop.f32.mrf.mxu0
      %v1616 = vadd.f32 0.0, %v1615
      %1617 = vmatmul.bf16.gmra.mxu0 %v944
      %v1618 = vpop.f32.mrf.mxu0
      %v1619 = vadd.f32 0.0, %v1618
      %v1620 = vpop.f32.mrf.mxu0
      %v1621 = vadd.f32 0.0, %v1620
      %1622 = vmatmul.bf16.gmra.mxu0 %v946
      %v1623 = vpop.f32.mrf.mxu0
      %v1624 = vadd.f32 0.0, %v1623
      %v1625 = vpop.f32.mrf.mxu0
      %v1626 = vadd.f32 0.0, %v1625
      %1627 = vmatmul.bf16.gmra.mxu0 %v948
      %v1628 = vpop.f32.mrf.mxu0
      %v1629 = vadd.f32 0.0, %v1628
      %v1630 = vpop.f32.mrf.mxu0
      %v1631 = vadd.f32 0.0, %v1630
      %1632 = vmatmul.bf16.gmra.mxu0 %v950
      %v1633 = vpop.f32.mrf.mxu0
      %v1634 = vadd.f32 0.0, %v1633
      %v1635 = vpop.f32.mrf.mxu0
      %v1636 = vadd.f32 0.0, %v1635
      %1637 = vmatmul.bf16.gmra.mxu0 %v952
      %v1638 = vpop.f32.mrf.mxu0
      %v1639 = vadd.f32 0.0, %v1638
      %v1640 = vpop.f32.mrf.mxu0
      %v1641 = vadd.f32 0.0, %v1640
      %1642 = vmatmul.bf16.gmra.mxu0 %v954
      %v1643 = vpop.f32.mrf.mxu0
      %v1644 = vadd.f32 0.0, %v1643
      %v1645 = vpop.f32.mrf.mxu0
      %v1646 = vadd.f32 0.0, %v1645
      %1647 = vmatmul.bf16.gmra.mxu0 %v1559
      %v1648 = vpop.f32.mrf.mxu0
      %v1649 = vadd.f32 0.0, %v1648
      %v1650 = vpop.f32.mrf.mxu0
      %v1651 = vadd.f32 0.0, %v1650
      %1652 = vdwg.mxu0
      %v1653 = vadd.f32 %v1224, %v1574
      %v1654 = vadd.f32 %v1225, %v1576
      %v1655 = vadd.f32 %v1226, %v1579
      %v1656 = vadd.f32 %v1227, %v1581
      %v1657 = vadd.f32 %v1228, %v1584
      %v1658 = vadd.f32 %v1229, %v1586
      %v1659 = vadd.f32 %v1230, %v1589
      %v1660 = vadd.f32 %v1231, %v1591
      %v1661 = vadd.f32 %v1232, %v1594
      %v1662 = vadd.f32 %v1233, %v1596
      %v1663 = vadd.f32 %v1234, %v1599
      %v1664 = vadd.f32 %v1235, %v1601
      %v1665 = vadd.f32 %v1236, %v1604
      %v1666 = vadd.f32 %v1237, %v1606
      %v1667 = vadd.f32 %v1238, %v1609
      %v1668 = vadd.f32 %v1239, %v1611
      %v1669 = vadd.f32 %v1240, %v1614
      %v1670 = vadd.f32 %v1241, %v1616
      %v1671 = vadd.f32 %v1242, %v1619
      %v1672 = vadd.f32 %v1243, %v1621
      %v1673 = vadd.f32 %v1244, %v1624
      %v1674 = vadd.f32 %v1245, %v1626
      %v1675 = vadd.f32 %v1246, %v1629
      %v1676 = vadd.f32 %v1247, %v1631
      %v1677 = vadd.f32 %v1248, %v1634
      %v1678 = vadd.f32 %v1249, %v1636
      %v1679 = vadd.f32 %v1250, %v1639
      %v1680 = vadd.f32 %v1251, %v1641
      %v1681 = vadd.f32 %v1252, %v1644
      %v1682 = vadd.f32 %v1253, %v1646
      %v1683 = vadd.f32 %v1254, %v1649
      %v1684 = vadd.f32 %v1255, %v1651
      %s1685 = scalar_lea.vmem %s4, 2
      %v1686 = vld [vmem:[%s1685] sm:$0x3]
      %v1688 = vsel %vm1082, %v845, 0
      %v1691 = vsel %vm1131, %v1686, 0
      %1693 = vmatpush.bf16.msra.mxu0 0
      %1694 = vmatpush.bf16.msra.mxu0 0
      %1695 = vmatpush.bf16.msra.mxu0 0
      %1696 = vmatpush.bf16.msra.mxu0 0
      %1697 = vmatpush.bf16.msra.mxu0 0
      %1698 = vmatpush.bf16.msra.mxu0 0
      %1699 = vmatpush.bf16.msra.mxu0 0
      %1700 = vmatpush.bf16.msra.mxu0 %v1691
      %1701 = vmatmul.bf16.gmra.mxu0 %v1087
      %v1702 = vpop.f32.mrf.mxu0
      %v1703 = vadd.f32 0.0, %v1702
      %v1704 = vpop.f32.mrf.mxu0
      %v1705 = vadd.f32 0.0, %v1704
      %1706 = vmatmul.bf16.gmra.mxu0 %v1090
      %v1707 = vpop.f32.mrf.mxu0
      %v1708 = vadd.f32 0.0, %v1707
      %v1709 = vpop.f32.mrf.mxu0
      %v1710 = vadd.f32 0.0, %v1709
      %1711 = vmatmul.bf16.gmra.mxu0 %v1093
      %v1712 = vpop.f32.mrf.mxu0
      %v1713 = vadd.f32 0.0, %v1712
      %v1714 = vpop.f32.mrf.mxu0
      %v1715 = vadd.f32 0.0, %v1714
      %1716 = vmatmul.bf16.gmra.mxu0 %v1096
      %v1717 = vpop.f32.mrf.mxu0
      %v1718 = vadd.f32 0.0, %v1717
      %v1719 = vpop.f32.mrf.mxu0
      %v1720 = vadd.f32 0.0, %v1719
      %1721 = vmatmul.bf16.gmra.mxu0 %v1099
      %v1722 = vpop.f32.mrf.mxu0
      %v1723 = vadd.f32 0.0, %v1722
      %v1724 = vpop.f32.mrf.mxu0
      %v1725 = vadd.f32 0.0, %v1724
      %1726 = vmatmul.bf16.gmra.mxu0 %v1102
      %v1727 = vpop.f32.mrf.mxu0
      %v1728 = vadd.f32 0.0, %v1727
      %v1729 = vpop.f32.mrf.mxu0
      %v1730 = vadd.f32 0.0, %v1729
      %1731 = vmatmul.bf16.gmra.mxu0 %v1105
      %v1732 = vpop.f32.mrf.mxu0
      %v1733 = vadd.f32 0.0, %v1732
      %v1734 = vpop.f32.mrf.mxu0
      %v1735 = vadd.f32 0.0, %v1734
      %1736 = vmatmul.bf16.gmra.mxu0 %v1108
      %v1737 = vpop.f32.mrf.mxu0
      %v1738 = vadd.f32 0.0, %v1737
      %v1739 = vpop.f32.mrf.mxu0
      %v1740 = vadd.f32 0.0, %v1739
      %1741 = vmatmul.bf16.gmra.mxu0 %v1111
      %v1742 = vpop.f32.mrf.mxu0
      %v1743 = vadd.f32 0.0, %v1742
      %v1744 = vpop.f32.mrf.mxu0
      %v1745 = vadd.f32 0.0, %v1744
      %1746 = vmatmul.bf16.gmra.mxu0 %v1114
      %v1747 = vpop.f32.mrf.mxu0
      %v1748 = vadd.f32 0.0, %v1747
      %v1749 = vpop.f32.mrf.mxu0
      %v1750 = vadd.f32 0.0, %v1749
      %1751 = vmatmul.bf16.gmra.mxu0 %v1117
      %v1752 = vpop.f32.mrf.mxu0
      %v1753 = vadd.f32 0.0, %v1752
      %v1754 = vpop.f32.mrf.mxu0
      %v1755 = vadd.f32 0.0, %v1754
      %1756 = vmatmul.bf16.gmra.mxu0 %v1120
      %v1757 = vpop.f32.mrf.mxu0
      %v1758 = vadd.f32 0.0, %v1757
      %v1759 = vpop.f32.mrf.mxu0
      %v1760 = vadd.f32 0.0, %v1759
      %1761 = vmatmul.bf16.gmra.mxu0 %v1123
      %v1762 = vpop.f32.mrf.mxu0
      %v1763 = vadd.f32 0.0, %v1762
      %v1764 = vpop.f32.mrf.mxu0
      %v1765 = vadd.f32 0.0, %v1764
      %1766 = vmatmul.bf16.gmra.mxu0 %v1126
      %v1767 = vpop.f32.mrf.mxu0
      %v1768 = vadd.f32 0.0, %v1767
      %v1769 = vpop.f32.mrf.mxu0
      %v1770 = vadd.f32 0.0, %v1769
      %1771 = vmatmul.bf16.gmra.mxu0 %v1129
      %v1772 = vpop.f32.mrf.mxu0
      %v1773 = vadd.f32 0.0, %v1772
      %v1774 = vpop.f32.mrf.mxu0
      %v1775 = vadd.f32 0.0, %v1774
      %1776 = vmatmul.bf16.gmra.mxu0 %v1688
      %v1777 = vpop.f32.mrf.mxu0
      %v1778 = vadd.f32 0.0, %v1777
      %v1779 = vpop.f32.mrf.mxu0
      %v1780 = vadd.f32 0.0, %v1779
      %1781 = vdwg.mxu0
      %v1782 = vadd.f32 %v1653, %v1703
      %v1783 = vadd.f32 %v1654, %v1705
      %v1784 = vadd.f32 %v1655, %v1708
      %v1785 = vadd.f32 %v1656, %v1710
      %v1786 = vadd.f32 %v1657, %v1713
      %v1787 = vadd.f32 %v1658, %v1715
      %v1788 = vadd.f32 %v1659, %v1718
      %v1789 = vadd.f32 %v1660, %v1720
      %v1790 = vadd.f32 %v1661, %v1723
      %v1791 = vadd.f32 %v1662, %v1725
      %v1792 = vadd.f32 %v1663, %v1728
      %v1793 = vadd.f32 %v1664, %v1730
      %v1794 = vadd.f32 %v1665, %v1733
      %v1795 = vadd.f32 %v1666, %v1735
      %v1796 = vadd.f32 %v1667, %v1738
      %v1797 = vadd.f32 %v1668, %v1740
      %v1798 = vadd.f32 %v1669, %v1743
      %v1799 = vadd.f32 %v1670, %v1745
      %v1800 = vadd.f32 %v1671, %v1748
      %v1801 = vadd.f32 %v1672, %v1750
      %v1802 = vadd.f32 %v1673, %v1753
      %v1803 = vadd.f32 %v1674, %v1755
      %v1804 = vadd.f32 %v1675, %v1758
      %v1805 = vadd.f32 %v1676, %v1760
      %v1806 = vadd.f32 %v1677, %v1763
      %v1807 = vadd.f32 %v1678, %v1765
      %v1808 = vadd.f32 %v1679, %v1768
      %v1809 = vadd.f32 %v1680, %v1770
      %v1810 = vadd.f32 %v1681, %v1773
      %v1811 = vadd.f32 %v1682, %v1775
      %v1812 = vadd.f32 %v1683, %v1778
      %v1813 = vadd.f32 %v1684, %v1780
      %v1814 = vadd.f32 %v1525, %v1574
      %v1815 = vadd.f32 %v1526, %v1576
      %v1816 = vadd.f32 %v1527, %v1579
      %v1817 = vadd.f32 %v1528, %v1581
      %v1818 = vadd.f32 %v1529, %v1584
      %v1819 = vadd.f32 %v1530, %v1586
      %v1820 = vadd.f32 %v1531, %v1589
      %v1821 = vadd.f32 %v1532, %v1591
      %v1822 = vadd.f32 %v1533, %v1594
      %v1823 = vadd.f32 %v1534, %v1596
      %v1824 = vadd.f32 %v1535, %v1599
      %v1825 = vadd.f32 %v1536, %v1601
      %v1826 = vadd.f32 %v1537, %v1604
      %v1827 = vadd.f32 %v1538, %v1606
      %v1828 = vadd.f32 %v1539, %v1609
      %v1829 = vadd.f32 %v1540, %v1611
      %v1830 = vadd.f32 %v1541, %v1614
      %v1831 = vadd.f32 %v1542, %v1616
      %v1832 = vadd.f32 %v1543, %v1619
      %v1833 = vadd.f32 %v1544, %v1621
      %v1834 = vadd.f32 %v1545, %v1624
      %v1835 = vadd.f32 %v1546, %v1626
      %v1836 = vadd.f32 %v1547, %v1629
      %v1837 = vadd.f32 %v1548, %v1631
      %v1838 = vadd.f32 %v1549, %v1634
      %v1839 = vadd.f32 %v1550, %v1636
      %v1840 = vadd.f32 %v1551, %v1639
      %v1841 = vadd.f32 %v1552, %v1641
      %v1842 = vadd.f32 %v1553, %v1644
      %v1843 = vadd.f32 %v1554, %v1646
      %v1844 = vadd.f32 %v1555, %v1649
      %v1845 = vadd.f32 %v1556, %v1651
      %s1846 = scalar_lea.vmem %s5, 2
      %v1847 = vld [vmem:[%s1846] sm:$0x3]
      %v1849 = vsel %vm1082, %v920, 0
      %v1852 = vsel %vm1131, %v1847, 0
      %1854 = vmatpush.bf16.msra.mxu0 0
      %1855 = vmatpush.bf16.msra.mxu0 0
      %1856 = vmatpush.bf16.msra.mxu0 0
      %1857 = vmatpush.bf16.msra.mxu0 0
      %1858 = vmatpush.bf16.msra.mxu0 0
      %1859 = vmatpush.bf16.msra.mxu0 0
      %1860 = vmatpush.bf16.msra.mxu0 0
      %1861 = vmatpush.bf16.msra.mxu0 %v1852
      %1862 = vmatmul.bf16.gmra.mxu0 %v1261
      %v1863 = vpop.f32.mrf.mxu0
      %v1864 = vadd.f32 0.0, %v1863
      %v1865 = vpop.f32.mrf.mxu0
      %v1866 = vadd.f32 0.0, %v1865
      %1867 = vmatmul.bf16.gmra.mxu0 %v1264
      %v1868 = vpop.f32.mrf.mxu0
      %v1869 = vadd.f32 0.0, %v1868
      %v1870 = vpop.f32.mrf.mxu0
      %v1871 = vadd.f32 0.0, %v1870
      %1872 = vmatmul.bf16.gmra.mxu0 %v1267
      %v1873 = vpop.f32.mrf.mxu0
      %v1874 = vadd.f32 0.0, %v1873
      %v1875 = vpop.f32.mrf.mxu0
      %v1876 = vadd.f32 0.0, %v1875
      %1877 = vmatmul.bf16.gmra.mxu0 %v1270
      %v1878 = vpop.f32.mrf.mxu0
      %v1879 = vadd.f32 0.0, %v1878
      %v1880 = vpop.f32.mrf.mxu0
      %v1881 = vadd.f32 0.0, %v1880
      %1882 = vmatmul.bf16.gmra.mxu0 %v1273
      %v1883 = vpop.f32.mrf.mxu0
      %v1884 = vadd.f32 0.0, %v1883
      %v1885 = vpop.f32.mrf.mxu0
      %v1886 = vadd.f32 0.0, %v1885
      %1887 = vmatmul.bf16.gmra.mxu0 %v1276
      %v1888 = vpop.f32.mrf.mxu0
      %v1889 = vadd.f32 0.0, %v1888
      %v1890 = vpop.f32.mrf.mxu0
      %v1891 = vadd.f32 0.0, %v1890
      %1892 = vmatmul.bf16.gmra.mxu0 %v1279
      %v1893 = vpop.f32.mrf.mxu0
      %v1894 = vadd.f32 0.0, %v1893
      %v1895 = vpop.f32.mrf.mxu0
      %v1896 = vadd.f32 0.0, %v1895
      %1897 = vmatmul.bf16.gmra.mxu0 %v1282
      %v1898 = vpop.f32.mrf.mxu0
      %v1899 = vadd.f32 0.0, %v1898
      %v1900 = vpop.f32.mrf.mxu0
      %v1901 = vadd.f32 0.0, %v1900
      %1902 = vmatmul.bf16.gmra.mxu0 %v1285
      %v1903 = vpop.f32.mrf.mxu0
      %v1904 = vadd.f32 0.0, %v1903
      %v1905 = vpop.f32.mrf.mxu0
      %v1906 = vadd.f32 0.0, %v1905
      %1907 = vmatmul.bf16.gmra.mxu0 %v1288
      %v1908 = vpop.f32.mrf.mxu0
      %v1909 = vadd.f32 0.0, %v1908
      %v1910 = vpop.f32.mrf.mxu0
      %v1911 = vadd.f32 0.0, %v1910
      %1912 = vmatmul.bf16.gmra.mxu0 %v1291
      %v1913 = vpop.f32.mrf.mxu0
      %v1914 = vadd.f32 0.0, %v1913
      %v1915 = vpop.f32.mrf.mxu0
      %v1916 = vadd.f32 0.0, %v1915
      %1917 = vmatmul.bf16.gmra.mxu0 %v1294
      %v1918 = vpop.f32.mrf.mxu0
      %v1919 = vadd.f32 0.0, %v1918
      %v1920 = vpop.f32.mrf.mxu0
      %v1921 = vadd.f32 0.0, %v1920
      %1922 = vmatmul.bf16.gmra.mxu0 %v1297
      %v1923 = vpop.f32.mrf.mxu0
      %v1924 = vadd.f32 0.0, %v1923
      %v1925 = vpop.f32.mrf.mxu0
      %v1926 = vadd.f32 0.0, %v1925
      %1927 = vmatmul.bf16.gmra.mxu0 %v1300
      %v1928 = vpop.f32.mrf.mxu0
      %v1929 = vadd.f32 0.0, %v1928
      %v1930 = vpop.f32.mrf.mxu0
      %v1931 = vadd.f32 0.0, %v1930
      %1932 = vmatmul.bf16.gmra.mxu0 %v1303
      %v1933 = vpop.f32.mrf.mxu0
      %v1934 = vadd.f32 0.0, %v1933
      %v1935 = vpop.f32.mrf.mxu0
      %v1936 = vadd.f32 0.0, %v1935
      %1937 = vmatmul.bf16.gmra.mxu0 %v1849
      %v1938 = vpop.f32.mrf.mxu0
      %v1939 = vadd.f32 0.0, %v1938
      %v1940 = vpop.f32.mrf.mxu0
      %v1941 = vadd.f32 0.0, %v1940
      %1942 = vdwg.mxu0
      %1975 = vrot.lane.b32.xlu0 %v1864, 4
      %v1976 = vpop.permute.xlu0 %1975
      %1977 = vrot.lane.b32.xlu0 %v1866, 4
      %v1978 = vpop.permute.xlu0 %1977
      %1979 = vrot.lane.b32.xlu0 %v1869, 4
      %v1980 = vpop.permute.xlu0 %1979
      %1981 = vrot.lane.b32.xlu0 %v1871, 4
      %v1982 = vpop.permute.xlu0 %1981
      %1983 = vrot.lane.b32.xlu0 %v1874, 4
      %v1984 = vpop.permute.xlu0 %1983
      %1985 = vrot.lane.b32.xlu0 %v1876, 4
      %v1986 = vpop.permute.xlu0 %1985
      %1987 = vrot.lane.b32.xlu0 %v1879, 4
      %v1988 = vpop.permute.xlu0 %1987
      %1989 = vrot.lane.b32.xlu0 %v1881, 4
      %v1990 = vpop.permute.xlu0 %1989
      %1991 = vrot.lane.b32.xlu0 %v1884, 4
      %v1992 = vpop.permute.xlu0 %1991
      %1993 = vrot.lane.b32.xlu0 %v1886, 4
      %v1994 = vpop.permute.xlu0 %1993
      %1995 = vrot.lane.b32.xlu0 %v1889, 4
      %v1996 = vpop.permute.xlu0 %1995
      %1997 = vrot.lane.b32.xlu0 %v1891, 4
      %v1998 = vpop.permute.xlu0 %1997
      %1999 = vrot.lane.b32.xlu0 %v1894, 4
      %v2000 = vpop.permute.xlu0 %1999
      %2001 = vrot.lane.b32.xlu0 %v1896, 4
      %v2002 = vpop.permute.xlu0 %2001
      %2003 = vrot.lane.b32.xlu0 %v1899, 4
      %v2004 = vpop.permute.xlu0 %2003
      %2005 = vrot.lane.b32.xlu0 %v1901, 4
      %v2006 = vpop.permute.xlu0 %2005
      %2007 = vrot.lane.b32.xlu0 %v1904, 4
      %v2008 = vpop.permute.xlu0 %2007
      %2009 = vrot.lane.b32.xlu0 %v1906, 4
      %v2010 = vpop.permute.xlu0 %2009
      %2011 = vrot.lane.b32.xlu0 %v1909, 4
      %v2012 = vpop.permute.xlu0 %2011
      %2013 = vrot.lane.b32.xlu0 %v1911, 4
      %v2014 = vpop.permute.xlu0 %2013
      %2015 = vrot.lane.b32.xlu0 %v1914, 4
      %v2016 = vpop.permute.xlu0 %2015
      %2017 = vrot.lane.b32.xlu0 %v1916, 4
      %v2018 = vpop.permute.xlu0 %2017
      %2019 = vrot.lane.b32.xlu0 %v1919, 4
      %v2020 = vpop.permute.xlu0 %2019
      %2021 = vrot.lane.b32.xlu0 %v1921, 4
      %v2022 = vpop.permute.xlu0 %2021
      %2023 = vrot.lane.b32.xlu0 %v1924, 4
      %v2024 = vpop.permute.xlu0 %2023
      %2025 = vrot.lane.b32.xlu0 %v1926, 4
      %v2026 = vpop.permute.xlu0 %2025
      %2027 = vrot.lane.b32.xlu0 %v1929, 4
      %v2028 = vpop.permute.xlu0 %2027
      %2029 = vrot.lane.b32.xlu0 %v1931, 4
      %v2030 = vpop.permute.xlu0 %2029
      %2031 = vrot.lane.b32.xlu0 %v1934, 4
      %v2032 = vpop.permute.xlu0 %2031
      %2033 = vrot.lane.b32.xlu0 %v1936, 4
      %v2034 = vpop.permute.xlu0 %2033
      %2035 = vrot.lane.b32.xlu0 %v1939, 4
      %v2036 = vpop.permute.xlu0 %2035
      %2037 = vrot.lane.b32.xlu0 %v1941, 4
      %v2038 = vpop.permute.xlu0 %2037
      %v2071 = vadd.f32 %v1814, %v1976
      %v2072 = vadd.f32 %v1815, %v1978
      %v2073 = vadd.f32 %v1816, %v1980
      %v2074 = vadd.f32 %v1817, %v1982
      %v2075 = vadd.f32 %v1818, %v1984
      %v2076 = vadd.f32 %v1819, %v1986
      %v2077 = vadd.f32 %v1820, %v1988
      %v2078 = vadd.f32 %v1821, %v1990
      %v2079 = vadd.f32 %v1822, %v1992
      %v2080 = vadd.f32 %v1823, %v1994
      %v2081 = vadd.f32 %v1824, %v1996
      %v2082 = vadd.f32 %v1825, %v1998
      %v2083 = vadd.f32 %v1826, %v2000
      %v2084 = vadd.f32 %v1827, %v2002
      %v2085 = vadd.f32 %v1828, %v2004
      %v2086 = vadd.f32 %v1829, %v2006
      %v2087 = vadd.f32 %v1830, %v2008
      %v2088 = vadd.f32 %v1831, %v2010
      %v2089 = vadd.f32 %v1832, %v2012
      %v2090 = vadd.f32 %v1833, %v2014
      %v2091 = vadd.f32 %v1834, %v2016
      %v2092 = vadd.f32 %v1835, %v2018
      %v2093 = vadd.f32 %v1836, %v2020
      %v2094 = vadd.f32 %v1837, %v2022
      %v2095 = vadd.f32 %v1838, %v2024
      %v2096 = vadd.f32 %v1839, %v2026
      %v2097 = vadd.f32 %v1840, %v2028
      %v2098 = vadd.f32 %v1841, %v2030
      %v2099 = vadd.f32 %v1842, %v2032
      %v2100 = vadd.f32 %v1843, %v2034
      %v2101 = vadd.f32 %v1844, %v2036
      %v2102 = vadd.f32 %v1845, %v2038
      %s2103 = scalar_lea.vmem %s3, 8
      %v2104 = vld [vmem:[%s2103] sm:$0xf]
      %v2105 = vsel %vm923, %v645, 0
      %v2108 = vsel %vm956, %v2104, 0
      %2110 = vmatpush.bf16.msra.mxu0 0
      %2111 = vmatpush.bf16.msra.mxu0 0
      %2112 = vmatpush.bf16.msra.mxu0 0
      %2113 = vmatpush.bf16.msra.mxu0 0
      %2114 = vmatpush.bf16.msra.mxu0 0
      %2115 = vmatpush.bf16.msra.mxu0 0
      %2116 = vmatpush.bf16.msra.mxu0 0
      %2117 = vmatpush.bf16.msra.mxu0 %v2108
      %2118 = vmatmul.bf16.gmra.mxu0 %v928
      %v2119 = vpop.f32.mrf.mxu0
      %v2120 = vadd.f32 0.0, %v2119
      %v2121 = vpop.f32.mrf.mxu0
      %v2122 = vadd.f32 0.0, %v2121
      %2123 = vmatmul.bf16.gmra.mxu0 %v930
      %v2124 = vpop.f32.mrf.mxu0
      %v2125 = vadd.f32 0.0, %v2124
      %v2126 = vpop.f32.mrf.mxu0
      %v2127 = vadd.f32 0.0, %v2126
      %2128 = vmatmul.bf16.gmra.mxu0 %v932
      %v2129 = vpop.f32.mrf.mxu0
      %v2130 = vadd.f32 0.0, %v2129
      %v2131 = vpop.f32.mrf.mxu0
      %v2132 = vadd.f32 0.0, %v2131
      %2133 = vmatmul.bf16.gmra.mxu0 %v934
      %v2134 = vpop.f32.mrf.mxu0
      %v2135 = vadd.f32 0.0, %v2134
      %v2136 = vpop.f32.mrf.mxu0
      %v2137 = vadd.f32 0.0, %v2136
      %2138 = vmatmul.bf16.gmra.mxu0 %v936
      %v2139 = vpop.f32.mrf.mxu0
      %v2140 = vadd.f32 0.0, %v2139
      %v2141 = vpop.f32.mrf.mxu0
      %v2142 = vadd.f32 0.0, %v2141
      %2143 = vmatmul.bf16.gmra.mxu0 %v938
      %v2144 = vpop.f32.mrf.mxu0
      %v2145 = vadd.f32 0.0, %v2144
      %v2146 = vpop.f32.mrf.mxu0
      %v2147 = vadd.f32 0.0, %v2146
      %2148 = vmatmul.bf16.gmra.mxu0 %v940
      %v2149 = vpop.f32.mrf.mxu0
      %v2150 = vadd.f32 0.0, %v2149
      %v2151 = vpop.f32.mrf.mxu0
      %v2152 = vadd.f32 0.0, %v2151
      %2153 = vmatmul.bf16.gmra.mxu0 %v942
      %v2154 = vpop.f32.mrf.mxu0
      %v2155 = vadd.f32 0.0, %v2154
      %v2156 = vpop.f32.mrf.mxu0
      %v2157 = vadd.f32 0.0, %v2156
      %2158 = vmatmul.bf16.gmra.mxu0 %v944
      %v2159 = vpop.f32.mrf.mxu0
      %v2160 = vadd.f32 0.0, %v2159
      %v2161 = vpop.f32.mrf.mxu0
      %v2162 = vadd.f32 0.0, %v2161
      %2163 = vmatmul.bf16.gmra.mxu0 %v946
      %v2164 = vpop.f32.mrf.mxu0
      %v2165 = vadd.f32 0.0, %v2164
      %v2166 = vpop.f32.mrf.mxu0
      %v2167 = vadd.f32 0.0, %v2166
      %2168 = vmatmul.bf16.gmra.mxu0 %v948
      %v2169 = vpop.f32.mrf.mxu0
      %v2170 = vadd.f32 0.0, %v2169
      %v2171 = vpop.f32.mrf.mxu0
      %v2172 = vadd.f32 0.0, %v2171
      %2173 = vmatmul.bf16.gmra.mxu0 %v950
      %v2174 = vpop.f32.mrf.mxu0
      %v2175 = vadd.f32 0.0, %v2174
      %v2176 = vpop.f32.mrf.mxu0
      %v2177 = vadd.f32 0.0, %v2176
      %2178 = vmatmul.bf16.gmra.mxu0 %v952
      %v2179 = vpop.f32.mrf.mxu0
      %v2180 = vadd.f32 0.0, %v2179
      %v2181 = vpop.f32.mrf.mxu0
      %v2182 = vadd.f32 0.0, %v2181
      %2183 = vmatmul.bf16.gmra.mxu0 %v954
      %v2184 = vpop.f32.mrf.mxu0
      %v2185 = vadd.f32 0.0, %v2184
      %v2186 = vpop.f32.mrf.mxu0
      %v2187 = vadd.f32 0.0, %v2186
      %2188 = vmatmul.bf16.gmra.mxu0 %v1559
      %v2189 = vpop.f32.mrf.mxu0
      %v2190 = vadd.f32 0.0, %v2189
      %v2191 = vpop.f32.mrf.mxu0
      %v2192 = vadd.f32 0.0, %v2191
      %2193 = vmatmul.bf16.gmra.mxu0 %v2105
      %v2194 = vpop.f32.mrf.mxu0
      %v2195 = vadd.f32 0.0, %v2194
      %v2196 = vpop.f32.mrf.mxu0
      %v2197 = vadd.f32 0.0, %v2196
      %2198 = vdwg.mxu0
      %v2199 = vadd.f32 %v1782, %v2120
      %v2200 = vadd.f32 %v1783, %v2122
      %v2201 = vadd.f32 %v1784, %v2125
      %v2202 = vadd.f32 %v1785, %v2127
      %v2203 = vadd.f32 %v1786, %v2130
      %v2204 = vadd.f32 %v1787, %v2132
      %v2205 = vadd.f32 %v1788, %v2135
      %v2206 = vadd.f32 %v1789, %v2137
      %v2207 = vadd.f32 %v1790, %v2140
      %v2208 = vadd.f32 %v1791, %v2142
      %v2209 = vadd.f32 %v1792, %v2145
      %v2210 = vadd.f32 %v1793, %v2147
      %v2211 = vadd.f32 %v1794, %v2150
      %v2212 = vadd.f32 %v1795, %v2152
      %v2213 = vadd.f32 %v1796, %v2155
      %v2214 = vadd.f32 %v1797, %v2157
      %v2215 = vadd.f32 %v1798, %v2160
      %v2216 = vadd.f32 %v1799, %v2162
      %v2217 = vadd.f32 %v1800, %v2165
      %v2218 = vadd.f32 %v1801, %v2167
      %v2219 = vadd.f32 %v1802, %v2170
      %v2220 = vadd.f32 %v1803, %v2172
      %v2221 = vadd.f32 %v1804, %v2175
      %v2222 = vadd.f32 %v1805, %v2177
      %v2223 = vadd.f32 %v1806, %v2180
      %v2224 = vadd.f32 %v1807, %v2182
      %v2225 = vadd.f32 %v1808, %v2185
      %v2226 = vadd.f32 %v1809, %v2187
      %v2227 = vadd.f32 %v1810, %v2190
      %v2228 = vadd.f32 %v1811, %v2192
      %v2229 = vadd.f32 %v1812, %v2195
      %v2230 = vadd.f32 %v1813, %v2197
      %s2231 = scalar_lea.vmem %s4, 4
      %v2232 = vld [vmem:[%s2231] sm:$0x3]
      %v2234 = vsel %vm1082, %v846, 0
      %v2237 = vsel %vm1131, %v2232, 0
      %2239 = vmatpush.bf16.msra.mxu0 0
      %2240 = vmatpush.bf16.msra.mxu0 0
      %2241 = vmatpush.bf16.msra.mxu0 0
      %2242 = vmatpush.bf16.msra.mxu0 0
      %2243 = vmatpush.bf16.msra.mxu0 0
      %2244 = vmatpush.bf16.msra.mxu0 0
      %2245 = vmatpush.bf16.msra.mxu0 0
      %2246 = vmatpush.bf16.msra.mxu0 %v2237
      %2247 = vmatmul.bf16.gmra.mxu0 %v1090
      %v2248 = vpop.f32.mrf.mxu0
      %v2249 = vadd.f32 0.0, %v2248
      %v2250 = vpop.f32.mrf.mxu0
      %v2251 = vadd.f32 0.0, %v2250
      %2252 = vmatmul.bf16.gmra.mxu0 %v1093
      %v2253 = vpop.f32.mrf.mxu0
      %v2254 = vadd.f32 0.0, %v2253
      %v2255 = vpop.f32.mrf.mxu0
      %v2256 = vadd.f32 0.0, %v2255
      %2257 = vmatmul.bf16.gmra.mxu0 %v1096
      %v2258 = vpop.f32.mrf.mxu0
      %v2259 = vadd.f32 0.0, %v2258
      %v2260 = vpop.f32.mrf.mxu0
      %v2261 = vadd.f32 0.0, %v2260
      %2262 = vmatmul.bf16.gmra.mxu0 %v1099
      %v2263 = vpop.f32.mrf.mxu0
      %v2264 = vadd.f32 0.0, %v2263
      %v2265 = vpop.f32.mrf.mxu0
      %v2266 = vadd.f32 0.0, %v2265
      %2267 = vmatmul.bf16.gmra.mxu0 %v1102
      %v2268 = vpop.f32.mrf.mxu0
      %v2269 = vadd.f32 0.0, %v2268
      %v2270 = vpop.f32.mrf.mxu0
      %v2271 = vadd.f32 0.0, %v2270
      %2272 = vmatmul.bf16.gmra.mxu0 %v1105
      %v2273 = vpop.f32.mrf.mxu0
      %v2274 = vadd.f32 0.0, %v2273
      %v2275 = vpop.f32.mrf.mxu0
      %v2276 = vadd.f32 0.0, %v2275
      %2277 = vmatmul.bf16.gmra.mxu0 %v1108
      %v2278 = vpop.f32.mrf.mxu0
      %v2279 = vadd.f32 0.0, %v2278
      %v2280 = vpop.f32.mrf.mxu0
      %v2281 = vadd.f32 0.0, %v2280
      %2282 = vmatmul.bf16.gmra.mxu0 %v1111
      %v2283 = vpop.f32.mrf.mxu0
      %v2284 = vadd.f32 0.0, %v2283
      %v2285 = vpop.f32.mrf.mxu0
      %v2286 = vadd.f32 0.0, %v2285
      %2287 = vmatmul.bf16.gmra.mxu0 %v1114
      %v2288 = vpop.f32.mrf.mxu0
      %v2289 = vadd.f32 0.0, %v2288
      %v2290 = vpop.f32.mrf.mxu0
      %v2291 = vadd.f32 0.0, %v2290
      %2292 = vmatmul.bf16.gmra.mxu0 %v1117
      %v2293 = vpop.f32.mrf.mxu0
      %v2294 = vadd.f32 0.0, %v2293
      %v2295 = vpop.f32.mrf.mxu0
      %v2296 = vadd.f32 0.0, %v2295
      %2297 = vmatmul.bf16.gmra.mxu0 %v1120
      %v2298 = vpop.f32.mrf.mxu0
      %v2299 = vadd.f32 0.0, %v2298
      %v2300 = vpop.f32.mrf.mxu0
      %v2301 = vadd.f32 0.0, %v2300
      %2302 = vmatmul.bf16.gmra.mxu0 %v1123
      %v2303 = vpop.f32.mrf.mxu0
      %v2304 = vadd.f32 0.0, %v2303
      %v2305 = vpop.f32.mrf.mxu0
      %v2306 = vadd.f32 0.0, %v2305
      %2307 = vmatmul.bf16.gmra.mxu0 %v1126
      %v2308 = vpop.f32.mrf.mxu0
      %v2309 = vadd.f32 0.0, %v2308
      %v2310 = vpop.f32.mrf.mxu0
      %v2311 = vadd.f32 0.0, %v2310
      %2312 = vmatmul.bf16.gmra.mxu0 %v1129
      %v2313 = vpop.f32.mrf.mxu0
      %v2314 = vadd.f32 0.0, %v2313
      %v2315 = vpop.f32.mrf.mxu0
      %v2316 = vadd.f32 0.0, %v2315
      %2317 = vmatmul.bf16.gmra.mxu0 %v1688
      %v2318 = vpop.f32.mrf.mxu0
      %v2319 = vadd.f32 0.0, %v2318
      %v2320 = vpop.f32.mrf.mxu0
      %v2321 = vadd.f32 0.0, %v2320
      %2322 = vmatmul.bf16.gmra.mxu0 %v2234
      %v2323 = vpop.f32.mrf.mxu0
      %v2324 = vadd.f32 0.0, %v2323
      %v2325 = vpop.f32.mrf.mxu0
      %v2326 = vadd.f32 0.0, %v2325
      %2327 = vdwg.mxu0
      %v2328 = vadd.f32 %v2199, %v2249
      %v2329 = vadd.f32 %v2200, %v2251
      %v2330 = vadd.f32 %v2201, %v2254
      %v2331 = vadd.f32 %v2202, %v2256
      %v2332 = vadd.f32 %v2203, %v2259
      %v2333 = vadd.f32 %v2204, %v2261
      %v2334 = vadd.f32 %v2205, %v2264
      %v2335 = vadd.f32 %v2206, %v2266
      %v2336 = vadd.f32 %v2207, %v2269
      %v2337 = vadd.f32 %v2208, %v2271
      %v2338 = vadd.f32 %v2209, %v2274
      %v2339 = vadd.f32 %v2210, %v2276
      %v2340 = vadd.f32 %v2211, %v2279
      %v2341 = vadd.f32 %v2212, %v2281
      %v2342 = vadd.f32 %v2213, %v2284
      %v2343 = vadd.f32 %v2214, %v2286
      %v2344 = vadd.f32 %v2215, %v2289
      %v2345 = vadd.f32 %v2216, %v2291
      %v2346 = vadd.f32 %v2217, %v2294
      %v2347 = vadd.f32 %v2218, %v2296
      %v2348 = vadd.f32 %v2219, %v2299
      %v2349 = vadd.f32 %v2220, %v2301
      %v2350 = vadd.f32 %v2221, %v2304
      %v2351 = vadd.f32 %v2222, %v2306
      %v2352 = vadd.f32 %v2223, %v2309
      %v2353 = vadd.f32 %v2224, %v2311
      %v2354 = vadd.f32 %v2225, %v2314
      %v2355 = vadd.f32 %v2226, %v2316
      %v2356 = vadd.f32 %v2227, %v2319
      %v2357 = vadd.f32 %v2228, %v2321
      %v2358 = vadd.f32 %v2229, %v2324
      %v2359 = vadd.f32 %v2230, %v2326
      %v2360 = vadd.f32 %v2071, %v2120
      %v2361 = vadd.f32 %v2072, %v2122
      %v2362 = vadd.f32 %v2073, %v2125
      %v2363 = vadd.f32 %v2074, %v2127
      %v2364 = vadd.f32 %v2075, %v2130
      %v2365 = vadd.f32 %v2076, %v2132
      %v2366 = vadd.f32 %v2077, %v2135
      %v2367 = vadd.f32 %v2078, %v2137
      %v2368 = vadd.f32 %v2079, %v2140
      %v2369 = vadd.f32 %v2080, %v2142
      %v2370 = vadd.f32 %v2081, %v2145
      %v2371 = vadd.f32 %v2082, %v2147
      %v2372 = vadd.f32 %v2083, %v2150
      %v2373 = vadd.f32 %v2084, %v2152
      %v2374 = vadd.f32 %v2085, %v2155
      %v2375 = vadd.f32 %v2086, %v2157
      %v2376 = vadd.f32 %v2087, %v2160
      %v2377 = vadd.f32 %v2088, %v2162
      %v2378 = vadd.f32 %v2089, %v2165
      %v2379 = vadd.f32 %v2090, %v2167
      %v2380 = vadd.f32 %v2091, %v2170
      %v2381 = vadd.f32 %v2092, %v2172
      %v2382 = vadd.f32 %v2093, %v2175
      %v2383 = vadd.f32 %v2094, %v2177
      %v2384 = vadd.f32 %v2095, %v2180
      %v2385 = vadd.f32 %v2096, %v2182
      %v2386 = vadd.f32 %v2097, %v2185
      %v2387 = vadd.f32 %v2098, %v2187
      %v2388 = vadd.f32 %v2099, %v2190
      %v2389 = vadd.f32 %v2100, %v2192
      %v2390 = vadd.f32 %v2101, %v2195
      %v2391 = vadd.f32 %v2102, %v2197
      %s2392 = scalar_lea.vmem %s5, 4
      %v2393 = vld [vmem:[%s2392] sm:$0x3]
      %v2395 = vsel %vm1082, %v921, 0
      %v2398 = vsel %vm1131, %v2393, 0
      %2400 = vmatpush.bf16.msra.mxu0 0
      %2401 = vmatpush.bf16.msra.mxu0 0
      %2402 = vmatpush.bf16.msra.mxu0 0
      %2403 = vmatpush.bf16.msra.mxu0 0
      %2404 = vmatpush.bf16.msra.mxu0 0
      %2405 = vmatpush.bf16.msra.mxu0 0
      %2406 = vmatpush.bf16.msra.mxu0 0
      %2407 = vmatpush.bf16.msra.mxu0 %v2398
      %2408 = vmatmul.bf16.gmra.mxu0 %v1264
      %v2409 = vpop.f32.mrf.mxu0
      %v2410 = vadd.f32 0.0, %v2409
      %v2411 = vpop.f32.mrf.mxu0
      %v2412 = vadd.f32 0.0, %v2411
      %2413 = vmatmul.bf16.gmra.mxu0 %v1267
      %v2414 = vpop.f32.mrf.mxu0
      %v2415 = vadd.f32 0.0, %v2414
      %v2416 = vpop.f32.mrf.mxu0
      %v2417 = vadd.f32 0.0, %v2416
      %2418 = vmatmul.bf16.gmra.mxu0 %v1270
      %v2419 = vpop.f32.mrf.mxu0
      %v2420 = vadd.f32 0.0, %v2419
      %v2421 = vpop.f32.mrf.mxu0
      %v2422 = vadd.f32 0.0, %v2421
      %2423 = vmatmul.bf16.gmra.mxu0 %v1273
      %v2424 = vpop.f32.mrf.mxu0
      %v2425 = vadd.f32 0.0, %v2424
      %v2426 = vpop.f32.mrf.mxu0
      %v2427 = vadd.f32 0.0, %v2426
      %2428 = vmatmul.bf16.gmra.mxu0 %v1276
      %v2429 = vpop.f32.mrf.mxu0
      %v2430 = vadd.f32 0.0, %v2429
      %v2431 = vpop.f32.mrf.mxu0
      %v2432 = vadd.f32 0.0, %v2431
      %2433 = vmatmul.bf16.gmra.mxu0 %v1279
      %v2434 = vpop.f32.mrf.mxu0
      %v2435 = vadd.f32 0.0, %v2434
      %v2436 = vpop.f32.mrf.mxu0
      %v2437 = vadd.f32 0.0, %v2436
      %2438 = vmatmul.bf16.gmra.mxu0 %v1282
      %v2439 = vpop.f32.mrf.mxu0
      %v2440 = vadd.f32 0.0, %v2439
      %v2441 = vpop.f32.mrf.mxu0
      %v2442 = vadd.f32 0.0, %v2441
      %2443 = vmatmul.bf16.gmra.mxu0 %v1285
      %v2444 = vpop.f32.mrf.mxu0
      %v2445 = vadd.f32 0.0, %v2444
      %v2446 = vpop.f32.mrf.mxu0
      %v2447 = vadd.f32 0.0, %v2446
      %2448 = vmatmul.bf16.gmra.mxu0 %v1288
      %v2449 = vpop.f32.mrf.mxu0
      %v2450 = vadd.f32 0.0, %v2449
      %v2451 = vpop.f32.mrf.mxu0
      %v2452 = vadd.f32 0.0, %v2451
      %2453 = vmatmul.bf16.gmra.mxu0 %v1291
      %v2454 = vpop.f32.mrf.mxu0
      %v2455 = vadd.f32 0.0, %v2454
      %v2456 = vpop.f32.mrf.mxu0
      %v2457 = vadd.f32 0.0, %v2456
      %2458 = vmatmul.bf16.gmra.mxu0 %v1294
      %v2459 = vpop.f32.mrf.mxu0
      %v2460 = vadd.f32 0.0, %v2459
      %v2461 = vpop.f32.mrf.mxu0
      %v2462 = vadd.f32 0.0, %v2461
      %2463 = vmatmul.bf16.gmra.mxu0 %v1297
      %v2464 = vpop.f32.mrf.mxu0
      %v2465 = vadd.f32 0.0, %v2464
      %v2466 = vpop.f32.mrf.mxu0
      %v2467 = vadd.f32 0.0, %v2466
      %2468 = vmatmul.bf16.gmra.mxu0 %v1300
      %v2469 = vpop.f32.mrf.mxu0
      %v2470 = vadd.f32 0.0, %v2469
      %v2471 = vpop.f32.mrf.mxu0
      %v2472 = vadd.f32 0.0, %v2471
      %2473 = vmatmul.bf16.gmra.mxu0 %v1303
      %v2474 = vpop.f32.mrf.mxu0
      %v2475 = vadd.f32 0.0, %v2474
      %v2476 = vpop.f32.mrf.mxu0
      %v2477 = vadd.f32 0.0, %v2476
      %2478 = vmatmul.bf16.gmra.mxu0 %v1849
      %v2479 = vpop.f32.mrf.mxu0
      %v2480 = vadd.f32 0.0, %v2479
      %v2481 = vpop.f32.mrf.mxu0
      %v2482 = vadd.f32 0.0, %v2481
      %2483 = vmatmul.bf16.gmra.mxu0 %v2395
      %v2484 = vpop.f32.mrf.mxu0
      %v2485 = vadd.f32 0.0, %v2484
      %v2486 = vpop.f32.mrf.mxu0
      %v2487 = vadd.f32 0.0, %v2486
      %2488 = vdwg.mxu0
      %2521 = vrot.lane.b32.xlu0 %v2410, 4
      %v2522 = vpop.permute.xlu0 %2521
      %2523 = vrot.lane.b32.xlu0 %v2412, 4
      %v2524 = vpop.permute.xlu0 %2523
      %2525 = vrot.lane.b32.xlu0 %v2415, 4
      %v2526 = vpop.permute.xlu0 %2525
      %2527 = vrot.lane.b32.xlu0 %v2417, 4
      %v2528 = vpop.permute.xlu0 %2527
      %2529 = vrot.lane.b32.xlu0 %v2420, 4
      %v2530 = vpop.permute.xlu0 %2529
      %2531 = vrot.lane.b32.xlu0 %v2422, 4
      %v2532 = vpop.permute.xlu0 %2531
      %2533 = vrot.lane.b32.xlu0 %v2425, 4
      %v2534 = vpop.permute.xlu0 %2533
      %2535 = vrot.lane.b32.xlu0 %v2427, 4
      %v2536 = vpop.permute.xlu0 %2535
      %2537 = vrot.lane.b32.xlu0 %v2430, 4
      %v2538 = vpop.permute.xlu0 %2537
      %2539 = vrot.lane.b32.xlu0 %v2432, 4
      %v2540 = vpop.permute.xlu0 %2539
      %2541 = vrot.lane.b32.xlu0 %v2435, 4
      %v2542 = vpop.permute.xlu0 %2541
      %2543 = vrot.lane.b32.xlu0 %v2437, 4
      %v2544 = vpop.permute.xlu0 %2543
      %2545 = vrot.lane.b32.xlu0 %v2440, 4
      %v2546 = vpop.permute.xlu0 %2545
      %2547 = vrot.lane.b32.xlu0 %v2442, 4
      %v2548 = vpop.permute.xlu0 %2547
      %2549 = vrot.lane.b32.xlu0 %v2445, 4
      %v2550 = vpop.permute.xlu0 %2549
      %2551 = vrot.lane.b32.xlu0 %v2447, 4
      %v2552 = vpop.permute.xlu0 %2551
      %2553 = vrot.lane.b32.xlu0 %v2450, 4
      %v2554 = vpop.permute.xlu0 %2553
      %2555 = vrot.lane.b32.xlu0 %v2452, 4
      %v2556 = vpop.permute.xlu0 %2555
      %2557 = vrot.lane.b32.xlu0 %v2455, 4
      %v2558 = vpop.permute.xlu0 %2557
      %2559 = vrot.lane.b32.xlu0 %v2457, 4
      %v2560 = vpop.permute.xlu0 %2559
      %2561 = vrot.lane.b32.xlu0 %v2460, 4
      %v2562 = vpop.permute.xlu0 %2561
      %2563 = vrot.lane.b32.xlu0 %v2462, 4
      %v2564 = vpop.permute.xlu0 %2563
      %2565 = vrot.lane.b32.xlu0 %v2465, 4
      %v2566 = vpop.permute.xlu0 %2565
      %2567 = vrot.lane.b32.xlu0 %v2467, 4
      %v2568 = vpop.permute.xlu0 %2567
      %2569 = vrot.lane.b32.xlu0 %v2470, 4
      %v2570 = vpop.permute.xlu0 %2569
      %2571 = vrot.lane.b32.xlu0 %v2472, 4
      %v2572 = vpop.permute.xlu0 %2571
      %2573 = vrot.lane.b32.xlu0 %v2475, 4
      %v2574 = vpop.permute.xlu0 %2573
      %2575 = vrot.lane.b32.xlu0 %v2477, 4
      %v2576 = vpop.permute.xlu0 %2575
      %2577 = vrot.lane.b32.xlu0 %v2480, 4
      %v2578 = vpop.permute.xlu0 %2577
      %2579 = vrot.lane.b32.xlu0 %v2482, 4
      %v2580 = vpop.permute.xlu0 %2579
      %2581 = vrot.lane.b32.xlu0 %v2485, 4
      %v2582 = vpop.permute.xlu0 %2581
      %2583 = vrot.lane.b32.xlu0 %v2487, 4
      %v2584 = vpop.permute.xlu0 %2583
      %v2617 = vadd.f32 %v2360, %v2522
      %v2618 = vadd.f32 %v2361, %v2524
      %v2619 = vadd.f32 %v2362, %v2526
      %v2620 = vadd.f32 %v2363, %v2528
      %v2621 = vadd.f32 %v2364, %v2530
      %v2622 = vadd.f32 %v2365, %v2532
      %v2623 = vadd.f32 %v2366, %v2534
      %v2624 = vadd.f32 %v2367, %v2536
      %v2625 = vadd.f32 %v2368, %v2538
      %v2626 = vadd.f32 %v2369, %v2540
      %v2627 = vadd.f32 %v2370, %v2542
      %v2628 = vadd.f32 %v2371, %v2544
      %v2629 = vadd.f32 %v2372, %v2546
      %v2630 = vadd.f32 %v2373, %v2548
      %v2631 = vadd.f32 %v2374, %v2550
      %v2632 = vadd.f32 %v2375, %v2552
      %v2633 = vadd.f32 %v2376, %v2554
      %v2634 = vadd.f32 %v2377, %v2556
      %v2635 = vadd.f32 %v2378, %v2558
      %v2636 = vadd.f32 %v2379, %v2560
      %v2637 = vadd.f32 %v2380, %v2562
      %v2638 = vadd.f32 %v2381, %v2564
      %v2639 = vadd.f32 %v2382, %v2566
      %v2640 = vadd.f32 %v2383, %v2568
      %v2641 = vadd.f32 %v2384, %v2570
      %v2642 = vadd.f32 %v2385, %v2572
      %v2643 = vadd.f32 %v2386, %v2574
      %v2644 = vadd.f32 %v2387, %v2576
      %v2645 = vadd.f32 %v2388, %v2578
      %v2646 = vadd.f32 %v2389, %v2580
      %v2647 = vadd.f32 %v2390, %v2582
      %v2648 = vadd.f32 %v2391, %v2584
      %v2649 = vld [vmem:[%s6] sm:$0x1]
      %v2651 = vperm.slane %v2649, 0
      %v2653 = vadd.f32 %v2328, %v2651
      %v2654 = vadd.f32 %v2329, %v2651
      %v2655 = vadd.f32 %v2330, %v2651
      %v2656 = vadd.f32 %v2331, %v2651
      %v2657 = vadd.f32 %v2332, %v2651
      %v2658 = vadd.f32 %v2333, %v2651
      %v2659 = vadd.f32 %v2334, %v2651
      %v2660 = vadd.f32 %v2335, %v2651
      %v2661 = vadd.f32 %v2336, %v2651
      %v2662 = vadd.f32 %v2337, %v2651
      %v2663 = vadd.f32 %v2338, %v2651
      %v2664 = vadd.f32 %v2339, %v2651
      %v2665 = vadd.f32 %v2340, %v2651
      %v2666 = vadd.f32 %v2341, %v2651
      %v2667 = vadd.f32 %v2342, %v2651
      %v2668 = vadd.f32 %v2343, %v2651
      %v2669 = vadd.f32 %v2344, %v2651
      %v2670 = vadd.f32 %v2345, %v2651
      %v2671 = vadd.f32 %v2346, %v2651
      %v2672 = vadd.f32 %v2347, %v2651
      %v2673 = vadd.f32 %v2348, %v2651
      %v2674 = vadd.f32 %v2349, %v2651
      %v2675 = vadd.f32 %v2350, %v2651
      %v2676 = vadd.f32 %v2351, %v2651
      %v2677 = vadd.f32 %v2352, %v2651
      %v2678 = vadd.f32 %v2353, %v2651
      %v2679 = vadd.f32 %v2354, %v2651
      %v2680 = vadd.f32 %v2355, %v2651
      %v2681 = vadd.f32 %v2356, %v2651
      %v2682 = vadd.f32 %v2357, %v2651
      %v2683 = vadd.f32 %v2358, %v2651
      %v2684 = vadd.f32 %v2359, %v2651
      %vm2685 = vcmp.ge.f32.partialorder %v2653, 0.0
      %vm2686 = vcmp.ge.f32.partialorder %v2654, 0.0
      %vm2687 = vcmp.ge.f32.partialorder %v2655, 0.0
      %vm2688 = vcmp.ge.f32.partialorder %v2656, 0.0
      %vm2689 = vcmp.ge.f32.partialorder %v2657, 0.0
      %vm2690 = vcmp.ge.f32.partialorder %v2658, 0.0
      %vm2691 = vcmp.ge.f32.partialorder %v2659, 0.0
      %vm2692 = vcmp.ge.f32.partialorder %v2660, 0.0
      %vm2693 = vcmp.ge.f32.partialorder %v2661, 0.0
      %vm2694 = vcmp.ge.f32.partialorder %v2662, 0.0
      %vm2695 = vcmp.ge.f32.partialorder %v2663, 0.0
      %vm2696 = vcmp.ge.f32.partialorder %v2664, 0.0
      %vm2697 = vcmp.ge.f32.partialorder %v2665, 0.0
      %vm2698 = vcmp.ge.f32.partialorder %v2666, 0.0
      %vm2699 = vcmp.ge.f32.partialorder %v2667, 0.0
      %vm2700 = vcmp.ge.f32.partialorder %v2668, 0.0
      %vm2701 = vcmp.ge.f32.partialorder %v2669, 0.0
      %vm2702 = vcmp.ge.f32.partialorder %v2670, 0.0
      %vm2703 = vcmp.ge.f32.partialorder %v2671, 0.0
      %vm2704 = vcmp.ge.f32.partialorder %v2672, 0.0
      %vm2705 = vcmp.ge.f32.partialorder %v2673, 0.0
      %vm2706 = vcmp.ge.f32.partialorder %v2674, 0.0
      %vm2707 = vcmp.ge.f32.partialorder %v2675, 0.0
      %vm2708 = vcmp.ge.f32.partialorder %v2676, 0.0
      %vm2709 = vcmp.ge.f32.partialorder %v2677, 0.0
      %vm2710 = vcmp.ge.f32.partialorder %v2678, 0.0
      %vm2711 = vcmp.ge.f32.partialorder %v2679, 0.0
      %vm2712 = vcmp.ge.f32.partialorder %v2680, 0.0
      %vm2713 = vcmp.ge.f32.partialorder %v2681, 0.0
      %vm2714 = vcmp.ge.f32.partialorder %v2682, 0.0
      %vm2715 = vcmp.ge.f32.partialorder %v2683, 0.0
      %vm2716 = vcmp.ge.f32.partialorder %v2684, 0.0
      %v2717 = vmul.f32 %v2653, 0.2
      %v2718 = vmul.f32 %v2654, 0.2
      %v2719 = vmul.f32 %v2655, 0.2
      %v2720 = vmul.f32 %v2656, 0.2
      %v2721 = vmul.f32 %v2657, 0.2
      %v2722 = vmul.f32 %v2658, 0.2
      %v2723 = vmul.f32 %v2659, 0.2
      %v2724 = vmul.f32 %v2660, 0.2
      %v2725 = vmul.f32 %v2661, 0.2
      %v2726 = vmul.f32 %v2662, 0.2
      %v2727 = vmul.f32 %v2663, 0.2
      %v2728 = vmul.f32 %v2664, 0.2
      %v2729 = vmul.f32 %v2665, 0.2
      %v2730 = vmul.f32 %v2666, 0.2
      %v2731 = vmul.f32 %v2667, 0.2
      %v2732 = vmul.f32 %v2668, 0.2
      %v2733 = vmul.f32 %v2669, 0.2
      %v2734 = vmul.f32 %v2670, 0.2
      %v2735 = vmul.f32 %v2671, 0.2
      %v2736 = vmul.f32 %v2672, 0.2
      %v2737 = vmul.f32 %v2673, 0.2
      %v2738 = vmul.f32 %v2674, 0.2
      %v2739 = vmul.f32 %v2675, 0.2
      %v2740 = vmul.f32 %v2676, 0.2
      %v2741 = vmul.f32 %v2677, 0.2
      %v2742 = vmul.f32 %v2678, 0.2
      %v2743 = vmul.f32 %v2679, 0.2
      %v2744 = vmul.f32 %v2680, 0.2
      %v2745 = vmul.f32 %v2681, 0.2
      %v2746 = vmul.f32 %v2682, 0.2
      %v2747 = vmul.f32 %v2683, 0.2
      %v2748 = vmul.f32 %v2684, 0.2
      %v2749 = vsel %vm2685, %v2653, %v2717
      %v2750 = vsel %vm2686, %v2654, %v2718
      %v2751 = vsel %vm2687, %v2655, %v2719
      %v2752 = vsel %vm2688, %v2656, %v2720
      %v2753 = vsel %vm2689, %v2657, %v2721
      %v2754 = vsel %vm2690, %v2658, %v2722
      %v2755 = vsel %vm2691, %v2659, %v2723
      %v2756 = vsel %vm2692, %v2660, %v2724
      %v2757 = vsel %vm2693, %v2661, %v2725
      %v2758 = vsel %vm2694, %v2662, %v2726
      %v2759 = vsel %vm2695, %v2663, %v2727
      %v2760 = vsel %vm2696, %v2664, %v2728
      %v2761 = vsel %vm2697, %v2665, %v2729
      %v2762 = vsel %vm2698, %v2666, %v2730
      %v2763 = vsel %vm2699, %v2667, %v2731
      %v2764 = vsel %vm2700, %v2668, %v2732
      %v2765 = vsel %vm2701, %v2669, %v2733
      %v2766 = vsel %vm2702, %v2670, %v2734
      %v2767 = vsel %vm2703, %v2671, %v2735
      %v2768 = vsel %vm2704, %v2672, %v2736
      %v2769 = vsel %vm2705, %v2673, %v2737
      %v2770 = vsel %vm2706, %v2674, %v2738
      %v2771 = vsel %vm2707, %v2675, %v2739
      %v2772 = vsel %vm2708, %v2676, %v2740
      %v2773 = vsel %vm2709, %v2677, %v2741
      %v2774 = vsel %vm2710, %v2678, %v2742
      %v2775 = vsel %vm2711, %v2679, %v2743
      %v2776 = vsel %vm2712, %v2680, %v2744
      %v2777 = vsel %vm2713, %v2681, %v2745
      %v2778 = vsel %vm2714, %v2682, %v2746
      %v2779 = vsel %vm2715, %v2683, %v2747
      %v2780 = vsel %vm2716, %v2684, %v2748
      %2781 = vrot.lane.b32.xlu0 %v2651, 4
      %v2782 = vpop.permute.xlu0 %2781
      %v2784 = vadd.f32 %v2617, %v2782
      %v2785 = vadd.f32 %v2618, %v2782
      %v2786 = vadd.f32 %v2619, %v2782
      %v2787 = vadd.f32 %v2620, %v2782
      %v2788 = vadd.f32 %v2621, %v2782
      %v2789 = vadd.f32 %v2622, %v2782
      %v2790 = vadd.f32 %v2623, %v2782
      %v2791 = vadd.f32 %v2624, %v2782
      %v2792 = vadd.f32 %v2625, %v2782
      %v2793 = vadd.f32 %v2626, %v2782
      %v2794 = vadd.f32 %v2627, %v2782
      %v2795 = vadd.f32 %v2628, %v2782
      %v2796 = vadd.f32 %v2629, %v2782
      %v2797 = vadd.f32 %v2630, %v2782
      %v2798 = vadd.f32 %v2631, %v2782
      %v2799 = vadd.f32 %v2632, %v2782
      %v2800 = vadd.f32 %v2633, %v2782
      %v2801 = vadd.f32 %v2634, %v2782
      %v2802 = vadd.f32 %v2635, %v2782
      %v2803 = vadd.f32 %v2636, %v2782
      %v2804 = vadd.f32 %v2637, %v2782
      %v2805 = vadd.f32 %v2638, %v2782
      %v2806 = vadd.f32 %v2639, %v2782
      %v2807 = vadd.f32 %v2640, %v2782
      %v2808 = vadd.f32 %v2641, %v2782
      %v2809 = vadd.f32 %v2642, %v2782
      %v2810 = vadd.f32 %v2643, %v2782
      %v2811 = vadd.f32 %v2644, %v2782
      %v2812 = vadd.f32 %v2645, %v2782
      %v2813 = vadd.f32 %v2646, %v2782
      %v2814 = vadd.f32 %v2647, %v2782
      %v2815 = vadd.f32 %v2648, %v2782
      %vm2816 = vcmp.ge.f32.partialorder %v2784, 0.0
      %vm2817 = vcmp.ge.f32.partialorder %v2785, 0.0
      %vm2818 = vcmp.ge.f32.partialorder %v2786, 0.0
      %vm2819 = vcmp.ge.f32.partialorder %v2787, 0.0
      %vm2820 = vcmp.ge.f32.partialorder %v2788, 0.0
      %vm2821 = vcmp.ge.f32.partialorder %v2789, 0.0
      %vm2822 = vcmp.ge.f32.partialorder %v2790, 0.0
      %vm2823 = vcmp.ge.f32.partialorder %v2791, 0.0
      %vm2824 = vcmp.ge.f32.partialorder %v2792, 0.0
      %vm2825 = vcmp.ge.f32.partialorder %v2793, 0.0
      %vm2826 = vcmp.ge.f32.partialorder %v2794, 0.0
      %vm2827 = vcmp.ge.f32.partialorder %v2795, 0.0
      %vm2828 = vcmp.ge.f32.partialorder %v2796, 0.0
      %vm2829 = vcmp.ge.f32.partialorder %v2797, 0.0
      %vm2830 = vcmp.ge.f32.partialorder %v2798, 0.0
      %vm2831 = vcmp.ge.f32.partialorder %v2799, 0.0
      %vm2832 = vcmp.ge.f32.partialorder %v2800, 0.0
      %vm2833 = vcmp.ge.f32.partialorder %v2801, 0.0
      %vm2834 = vcmp.ge.f32.partialorder %v2802, 0.0
      %vm2835 = vcmp.ge.f32.partialorder %v2803, 0.0
      %vm2836 = vcmp.ge.f32.partialorder %v2804, 0.0
      %vm2837 = vcmp.ge.f32.partialorder %v2805, 0.0
      %vm2838 = vcmp.ge.f32.partialorder %v2806, 0.0
      %vm2839 = vcmp.ge.f32.partialorder %v2807, 0.0
      %vm2840 = vcmp.ge.f32.partialorder %v2808, 0.0
      %vm2841 = vcmp.ge.f32.partialorder %v2809, 0.0
      %vm2842 = vcmp.ge.f32.partialorder %v2810, 0.0
      %vm2843 = vcmp.ge.f32.partialorder %v2811, 0.0
      %vm2844 = vcmp.ge.f32.partialorder %v2812, 0.0
      %vm2845 = vcmp.ge.f32.partialorder %v2813, 0.0
      %vm2846 = vcmp.ge.f32.partialorder %v2814, 0.0
      %vm2847 = vcmp.ge.f32.partialorder %v2815, 0.0
      %v2848 = vmul.f32 %v2784, 0.2
      %v2849 = vmul.f32 %v2785, 0.2
      %v2850 = vmul.f32 %v2786, 0.2
      %v2851 = vmul.f32 %v2787, 0.2
      %v2852 = vmul.f32 %v2788, 0.2
      %v2853 = vmul.f32 %v2789, 0.2
      %v2854 = vmul.f32 %v2790, 0.2
      %v2855 = vmul.f32 %v2791, 0.2
      %v2856 = vmul.f32 %v2792, 0.2
      %v2857 = vmul.f32 %v2793, 0.2
      %v2858 = vmul.f32 %v2794, 0.2
      %v2859 = vmul.f32 %v2795, 0.2
      %v2860 = vmul.f32 %v2796, 0.2
      %v2861 = vmul.f32 %v2797, 0.2
      %v2862 = vmul.f32 %v2798, 0.2
      %v2863 = vmul.f32 %v2799, 0.2
      %v2864 = vmul.f32 %v2800, 0.2
      %v2865 = vmul.f32 %v2801, 0.2
      %v2866 = vmul.f32 %v2802, 0.2
      %v2867 = vmul.f32 %v2803, 0.2
      %v2868 = vmul.f32 %v2804, 0.2
      %v2869 = vmul.f32 %v2805, 0.2
      %v2870 = vmul.f32 %v2806, 0.2
      %v2871 = vmul.f32 %v2807, 0.2
      %v2872 = vmul.f32 %v2808, 0.2
      %v2873 = vmul.f32 %v2809, 0.2
      %v2874 = vmul.f32 %v2810, 0.2
      %v2875 = vmul.f32 %v2811, 0.2
      %v2876 = vmul.f32 %v2812, 0.2
      %v2877 = vmul.f32 %v2813, 0.2
      %v2878 = vmul.f32 %v2814, 0.2
      %v2879 = vmul.f32 %v2815, 0.2
      %v2880 = vsel %vm2816, %v2784, %v2848
      %v2881 = vsel %vm2817, %v2785, %v2849
      %v2882 = vsel %vm2818, %v2786, %v2850
      %v2883 = vsel %vm2819, %v2787, %v2851
      %v2884 = vsel %vm2820, %v2788, %v2852
      %v2885 = vsel %vm2821, %v2789, %v2853
      %v2886 = vsel %vm2822, %v2790, %v2854
      %v2887 = vsel %vm2823, %v2791, %v2855
      %v2888 = vsel %vm2824, %v2792, %v2856
      %v2889 = vsel %vm2825, %v2793, %v2857
      %v2890 = vsel %vm2826, %v2794, %v2858
      %v2891 = vsel %vm2827, %v2795, %v2859
      %v2892 = vsel %vm2828, %v2796, %v2860
      %v2893 = vsel %vm2829, %v2797, %v2861
      %v2894 = vsel %vm2830, %v2798, %v2862
      %v2895 = vsel %vm2831, %v2799, %v2863
      %v2896 = vsel %vm2832, %v2800, %v2864
      %v2897 = vsel %vm2833, %v2801, %v2865
      %v2898 = vsel %vm2834, %v2802, %v2866
      %v2899 = vsel %vm2835, %v2803, %v2867
      %v2900 = vsel %vm2836, %v2804, %v2868
      %v2901 = vsel %vm2837, %v2805, %v2869
      %v2902 = vsel %vm2838, %v2806, %v2870
      %v2903 = vsel %vm2839, %v2807, %v2871
      %v2904 = vsel %vm2840, %v2808, %v2872
      %v2905 = vsel %vm2841, %v2809, %v2873
      %v2906 = vsel %vm2842, %v2810, %v2874
      %v2907 = vsel %vm2843, %v2811, %v2875
      %v2908 = vsel %vm2844, %v2812, %v2876
      %v2909 = vsel %vm2845, %v2813, %v2877
      %v2910 = vsel %vm2846, %v2814, %v2878
      %v2911 = vsel %vm2847, %v2815, %v2879
      %2944 = vrot.lane.b32.xlu0 %v2880, 124
      %v2945 = vpop.permute.xlu0 %2944
      %2946 = vrot.lane.b32.xlu0 %v2881, 124
      %v2947 = vpop.permute.xlu0 %2946
      %2948 = vrot.lane.b32.xlu0 %v2882, 124
      %v2949 = vpop.permute.xlu0 %2948
      %2950 = vrot.lane.b32.xlu0 %v2883, 124
      %v2951 = vpop.permute.xlu0 %2950
      %2952 = vrot.lane.b32.xlu0 %v2884, 124
      %v2953 = vpop.permute.xlu0 %2952
      %2954 = vrot.lane.b32.xlu0 %v2885, 124
      %v2955 = vpop.permute.xlu0 %2954
      %2956 = vrot.lane.b32.xlu0 %v2886, 124
      %v2957 = vpop.permute.xlu0 %2956
      %2958 = vrot.lane.b32.xlu0 %v2887, 124
      %v2959 = vpop.permute.xlu0 %2958
      %2960 = vrot.lane.b32.xlu0 %v2888, 124
      %v2961 = vpop.permute.xlu0 %2960
      %2962 = vrot.lane.b32.xlu0 %v2889, 124
      %v2963 = vpop.permute.xlu0 %2962
      %2964 = vrot.lane.b32.xlu0 %v2890, 124
      %v2965 = vpop.permute.xlu0 %2964
      %2966 = vrot.lane.b32.xlu0 %v2891, 124
      %v2967 = vpop.permute.xlu0 %2966
      %2968 = vrot.lane.b32.xlu0 %v2892, 124
      %v2969 = vpop.permute.xlu0 %2968
      %2970 = vrot.lane.b32.xlu0 %v2893, 124
      %v2971 = vpop.permute.xlu0 %2970
      %2972 = vrot.lane.b32.xlu0 %v2894, 124
      %v2973 = vpop.permute.xlu0 %2972
      %2974 = vrot.lane.b32.xlu0 %v2895, 124
      %v2975 = vpop.permute.xlu0 %2974
      %2976 = vrot.lane.b32.xlu0 %v2896, 124
      %v2977 = vpop.permute.xlu0 %2976
      %2978 = vrot.lane.b32.xlu0 %v2897, 124
      %v2979 = vpop.permute.xlu0 %2978
      %2980 = vrot.lane.b32.xlu0 %v2898, 124
      %v2981 = vpop.permute.xlu0 %2980
      %2982 = vrot.lane.b32.xlu0 %v2899, 124
      %v2983 = vpop.permute.xlu0 %2982
      %2984 = vrot.lane.b32.xlu0 %v2900, 124
      %v2985 = vpop.permute.xlu0 %2984
      %2986 = vrot.lane.b32.xlu0 %v2901, 124
      %v2987 = vpop.permute.xlu0 %2986
      %2988 = vrot.lane.b32.xlu0 %v2902, 124
      %v2989 = vpop.permute.xlu0 %2988
      %2990 = vrot.lane.b32.xlu0 %v2903, 124
      %v2991 = vpop.permute.xlu0 %2990
      %2992 = vrot.lane.b32.xlu0 %v2904, 124
      %v2993 = vpop.permute.xlu0 %2992
      %2994 = vrot.lane.b32.xlu0 %v2905, 124
      %v2995 = vpop.permute.xlu0 %2994
      %2996 = vrot.lane.b32.xlu0 %v2906, 124
      %v2997 = vpop.permute.xlu0 %2996
      %2998 = vrot.lane.b32.xlu0 %v2907, 124
      %v2999 = vpop.permute.xlu0 %2998
      %3000 = vrot.lane.b32.xlu0 %v2908, 124
      %v3001 = vpop.permute.xlu0 %3000
      %3002 = vrot.lane.b32.xlu0 %v2909, 124
      %v3003 = vpop.permute.xlu0 %3002
      %3004 = vrot.lane.b32.xlu0 %v2910, 124
      %v3005 = vpop.permute.xlu0 %3004
      %3006 = vrot.lane.b32.xlu0 %v2911, 124
      %v3007 = vpop.permute.xlu0 %3006
      %v3040 = vadd.f32 %v2749, %v2945
      %v3041 = vadd.f32 %v2750, %v2947
      %v3042 = vadd.f32 %v2751, %v2949
      %v3043 = vadd.f32 %v2752, %v2951
      %v3044 = vadd.f32 %v2753, %v2953
      %v3045 = vadd.f32 %v2754, %v2955
      %v3046 = vadd.f32 %v2755, %v2957
      %v3047 = vadd.f32 %v2756, %v2959
      %v3048 = vadd.f32 %v2757, %v2961
      %v3049 = vadd.f32 %v2758, %v2963
      %v3050 = vadd.f32 %v2759, %v2965
      %v3051 = vadd.f32 %v2760, %v2967
      %v3052 = vadd.f32 %v2761, %v2969
      %v3053 = vadd.f32 %v2762, %v2971
      %v3054 = vadd.f32 %v2763, %v2973
      %v3055 = vadd.f32 %v2764, %v2975
      %v3056 = vadd.f32 %v2765, %v2977
      %v3057 = vadd.f32 %v2766, %v2979
      %v3058 = vadd.f32 %v2767, %v2981
      %v3059 = vadd.f32 %v2768, %v2983
      %v3060 = vadd.f32 %v2769, %v2985
      %v3061 = vadd.f32 %v2770, %v2987
      %v3062 = vadd.f32 %v2771, %v2989
      %v3063 = vadd.f32 %v2772, %v2991
      %v3064 = vadd.f32 %v2773, %v2993
      %v3065 = vadd.f32 %v2774, %v2995
      %v3066 = vadd.f32 %v2775, %v2997
      %v3067 = vadd.f32 %v2776, %v2999
      %v3068 = vadd.f32 %v2777, %v3001
      %v3069 = vadd.f32 %v2778, %v3003
      %v3070 = vadd.f32 %v2779, %v3005
      %v3071 = vadd.f32 %v2780, %v3007
      %v3072 = vadd.f32 %v3040, %v3042
      %v3073 = vadd.f32 %v3041, %v3043
      %v3074 = vadd.f32 %v3044, %v3046
      %v3075 = vadd.f32 %v3045, %v3047
      %v3076 = vadd.f32 %v3048, %v3050
      %v3077 = vadd.f32 %v3049, %v3051
      %v3078 = vadd.f32 %v3052, %v3054
      %v3079 = vadd.f32 %v3053, %v3055
      %v3080 = vadd.f32 %v3056, %v3058
      %v3081 = vadd.f32 %v3057, %v3059
      %v3082 = vadd.f32 %v3060, %v3062
      %v3083 = vadd.f32 %v3061, %v3063
      %v3084 = vadd.f32 %v3064, %v3066
      %v3085 = vadd.f32 %v3065, %v3067
      %v3086 = vadd.f32 %v3068, %v3070
      %v3087 = vadd.f32 %v3069, %v3071
      %v3088 = vmul.f32 %v3072, 0.25
      %v3089 = vmul.f32 %v3073, 0.25
      %v3090 = vmul.f32 %v3074, 0.25
      %v3091 = vmul.f32 %v3075, 0.25
      %v3092 = vmul.f32 %v3076, 0.25
      %v3093 = vmul.f32 %v3077, 0.25
      %v3094 = vmul.f32 %v3078, 0.25
      %v3095 = vmul.f32 %v3079, 0.25
      %v3096 = vmul.f32 %v3080, 0.25
      %v3097 = vmul.f32 %v3081, 0.25
      %v3098 = vmul.f32 %v3082, 0.25
      %v3099 = vmul.f32 %v3083, 0.25
      %v3100 = vmul.f32 %v3084, 0.25
      %v3101 = vmul.f32 %v3085, 0.25
      %v3102 = vmul.f32 %v3086, 0.25
      %v3103 = vmul.f32 %v3087, 0.25
      %v3104 = vpack.c.bf16 %v3088, %v3088
      %v3105 = vpack.c.bf16 %v3089, %v3089
      %v3106 = vpack.c.bf16 %v3090, %v3090
      %v3107 = vpack.c.bf16 %v3091, %v3091
      %v3108 = vpack.c.bf16 %v3092, %v3092
      %v3109 = vpack.c.bf16 %v3093, %v3093
      %v3110 = vpack.c.bf16 %v3094, %v3094
      %v3111 = vpack.c.bf16 %v3095, %v3095
      %v3112 = vpack.c.bf16 %v3096, %v3096
      %v3113 = vpack.c.bf16 %v3097, %v3097
      %v3114 = vpack.c.bf16 %v3098, %v3098
      %v3115 = vpack.c.bf16 %v3099, %v3099
      %v3116 = vpack.c.bf16 %v3100, %v3100
      %v3117 = vpack.c.bf16 %v3101, %v3101
      %v3118 = vpack.c.bf16 %v3102, %v3102
      %v3119 = vpack.c.bf16 %v3103, %v3103
      %vm3120 = vcmask 27648
      %3121 = vst.msk [vmem:[%s497] sm:$0xf] %vm3120, %v3104
      %3122 = vst.msk [vmem:[%s497 + $0x4] sm:$0xf] %vm3120, %v3105
      %3123 = vst.msk [vmem:[%s497 + $0x8] sm:$0xf] %vm3120, %v3106
      %3124 = vst.msk [vmem:[%s497 + $0xc] sm:$0xf] %vm3120, %v3107
      %3125 = vst.msk [vmem:[%s497 + $0x10] sm:$0xf] %vm3120, %v3108
      %3126 = vst.msk [vmem:[%s497 + $0x14] sm:$0xf] %vm3120, %v3109
      %3127 = vst.msk [vmem:[%s497 + $0x18] sm:$0xf] %vm3120, %v3110
      %3128 = vst.msk [vmem:[%s497 + $0x1c] sm:$0xf] %vm3120, %v3111
      %3129 = vst.msk [vmem:[%s497 + $0x20] sm:$0xf] %vm3120, %v3112
      %3130 = vst.msk [vmem:[%s497 + $0x24] sm:$0xf] %vm3120, %v3113
      %3131 = vst.msk [vmem:[%s497 + $0x28] sm:$0xf] %vm3120, %v3114
      %3132 = vst.msk [vmem:[%s497 + $0x2c] sm:$0xf] %vm3120, %v3115
      %3133 = vst.msk [vmem:[%s497 + $0x30] sm:$0xf] %vm3120, %v3116
      %3134 = vst.msk [vmem:[%s497 + $0x34] sm:$0xf] %vm3120, %v3117
      %3135 = vst.msk [vmem:[%s497 + $0x38] sm:$0xf] %vm3120, %v3118
      %3136 = vst.msk [vmem:[%s497 + $0x3c] sm:$0xf] %vm3120, %v3119
      %v3137 = vunpack.c.l.bf16 %v511
      %v3138 = vunpack.c.l.bf16 %v512
      %v3139 = vunpack.c.l.bf16 %v513
      %v3140 = vunpack.c.l.bf16 %v514
      %v3141 = vunpack.c.l.bf16 %v515
      %v3142 = vunpack.c.l.bf16 %v516
      %v3143 = vunpack.c.l.bf16 %v517
      %v3144 = vunpack.c.l.bf16 %v518
      %v3145 = vunpack.c.l.bf16 %v519
      %v3146 = vunpack.c.l.bf16 %v520
      %v3147 = vunpack.c.l.bf16 %v521
      %v3148 = vunpack.c.l.bf16 %v522
      %v3149 = vunpack.c.l.bf16 %v523
      %v3150 = vunpack.c.l.bf16 %v524
      %v3151 = vunpack.c.l.bf16 %v525
      %v3152 = vunpack.c.l.bf16 %v526
      %v3153 = vunpack.c.l.bf16 %v527
      %v3154 = vunpack.c.l.bf16 %v528
      %v3155 = vunpack.c.l.bf16 %v529
      %v3156 = vunpack.c.l.bf16 %v530
      %v3157 = vunpack.c.l.bf16 %v531
      %v3158 = vunpack.c.l.bf16 %v532
      %v3159 = vunpack.c.l.bf16 %v533
      %v3160 = vunpack.c.l.bf16 %v534
      %v3161 = vunpack.c.l.bf16 %v535
      %v3162 = vunpack.c.l.bf16 %v536
      %v3163 = vunpack.c.l.bf16 %v537
      %v3164 = vunpack.c.l.bf16 %v538
      %v3165 = vunpack.c.l.bf16 %v539
      %v3166 = vunpack.c.l.bf16 %v540
      %v3167 = vunpack.c.l.bf16 %v541
      %v3168 = vunpack.c.l.bf16 %v542
      %3201 = vrot.lane.b32.xlu0 %v3137, 124
      %v3202 = vpop.permute.xlu0 %3201
      %3203 = vrot.lane.b32.xlu0 %v3138, 124
      %v3204 = vpop.permute.xlu0 %3203
      %3205 = vrot.lane.b32.xlu0 %v3139, 124
      %v3206 = vpop.permute.xlu0 %3205
      %3207 = vrot.lane.b32.xlu0 %v3140, 124
      %v3208 = vpop.permute.xlu0 %3207
      %3209 = vrot.lane.b32.xlu0 %v3141, 124
      %v3210 = vpop.permute.xlu0 %3209
      %3211 = vrot.lane.b32.xlu0 %v3142, 124
      %v3212 = vpop.permute.xlu0 %3211
      %3213 = vrot.lane.b32.xlu0 %v3143, 124
      %v3214 = vpop.permute.xlu0 %3213
      %3215 = vrot.lane.b32.xlu0 %v3144, 124
      %v3216 = vpop.permute.xlu0 %3215
      %3217 = vrot.lane.b32.xlu0 %v3145, 124
      %v3218 = vpop.permute.xlu0 %3217
      %3219 = vrot.lane.b32.xlu0 %v3146, 124
      %v3220 = vpop.permute.xlu0 %3219
      %3221 = vrot.lane.b32.xlu0 %v3147, 124
      %v3222 = vpop.permute.xlu0 %3221
      %3223 = vrot.lane.b32.xlu0 %v3148, 124
      %v3224 = vpop.permute.xlu0 %3223
      %3225 = vrot.lane.b32.xlu0 %v3149, 124
      %v3226 = vpop.permute.xlu0 %3225
      %3227 = vrot.lane.b32.xlu0 %v3150, 124
      %v3228 = vpop.permute.xlu0 %3227
      %3229 = vrot.lane.b32.xlu0 %v3151, 124
      %v3230 = vpop.permute.xlu0 %3229
      %3231 = vrot.lane.b32.xlu0 %v3152, 124
      %v3232 = vpop.permute.xlu0 %3231
      %3233 = vrot.lane.b32.xlu0 %v3153, 124
      %v3234 = vpop.permute.xlu0 %3233
      %3235 = vrot.lane.b32.xlu0 %v3154, 124
      %v3236 = vpop.permute.xlu0 %3235
      %3237 = vrot.lane.b32.xlu0 %v3155, 124
      %v3238 = vpop.permute.xlu0 %3237
      %3239 = vrot.lane.b32.xlu0 %v3156, 124
      %v3240 = vpop.permute.xlu0 %3239
      %3241 = vrot.lane.b32.xlu0 %v3157, 124
      %v3242 = vpop.permute.xlu0 %3241
      %3243 = vrot.lane.b32.xlu0 %v3158, 124
      %v3244 = vpop.permute.xlu0 %3243
      %3245 = vrot.lane.b32.xlu0 %v3159, 124
      %v3246 = vpop.permute.xlu0 %3245
      %3247 = vrot.lane.b32.xlu0 %v3160, 124
      %v3248 = vpop.permute.xlu0 %3247
      %3249 = vrot.lane.b32.xlu0 %v3161, 124
      %v3250 = vpop.permute.xlu0 %3249
      %3251 = vrot.lane.b32.xlu0 %v3162, 124
      %v3252 = vpop.permute.xlu0 %3251
      %3253 = vrot.lane.b32.xlu0 %v3163, 124
      %v3254 = vpop.permute.xlu0 %3253
      %3255 = vrot.lane.b32.xlu0 %v3164, 124
      %v3256 = vpop.permute.xlu0 %3255
      %3257 = vrot.lane.b32.xlu0 %v3165, 124
      %v3258 = vpop.permute.xlu0 %3257
      %3259 = vrot.lane.b32.xlu0 %v3166, 124
      %v3260 = vpop.permute.xlu0 %3259
      %3261 = vrot.lane.b32.xlu0 %v3167, 124
      %v3262 = vpop.permute.xlu0 %3261
      %3263 = vrot.lane.b32.xlu0 %v3168, 124
      %v3264 = vpop.permute.xlu0 %3263
      %v3297 = vadd.f32 %v3137, %v3202
      %v3298 = vadd.f32 %v3138, %v3204
      %v3299 = vadd.f32 %v3139, %v3206
      %v3300 = vadd.f32 %v3140, %v3208
      %v3301 = vadd.f32 %v3141, %v3210
      %v3302 = vadd.f32 %v3142, %v3212
      %v3303 = vadd.f32 %v3143, %v3214
      %v3304 = vadd.f32 %v3144, %v3216
      %v3305 = vadd.f32 %v3145, %v3218
      %v3306 = vadd.f32 %v3146, %v3220
      %v3307 = vadd.f32 %v3147, %v3222
      %v3308 = vadd.f32 %v3148, %v3224
      %v3309 = vadd.f32 %v3149, %v3226
      %v3310 = vadd.f32 %v3150, %v3228
      %v3311 = vadd.f32 %v3151, %v3230
      %v3312 = vadd.f32 %v3152, %v3232
      %v3313 = vadd.f32 %v3153, %v3234
      %v3314 = vadd.f32 %v3154, %v3236
      %v3315 = vadd.f32 %v3155, %v3238
      %v3316 = vadd.f32 %v3156, %v3240
      %v3317 = vadd.f32 %v3157, %v3242
      %v3318 = vadd.f32 %v3158, %v3244
      %v3319 = vadd.f32 %v3159, %v3246
      %v3320 = vadd.f32 %v3160, %v3248
      %v3321 = vadd.f32 %v3161, %v3250
      %v3322 = vadd.f32 %v3162, %v3252
      %v3323 = vadd.f32 %v3163, %v3254
      %v3324 = vadd.f32 %v3164, %v3256
      %v3325 = vadd.f32 %v3165, %v3258
      %v3326 = vadd.f32 %v3166, %v3260
      %v3327 = vadd.f32 %v3167, %v3262
      %v3328 = vadd.f32 %v3168, %v3264
      %v3329 = vadd.f32 %v3297, %v3299
      %v3330 = vadd.f32 %v3298, %v3300
      %v3331 = vadd.f32 %v3301, %v3303
      %v3332 = vadd.f32 %v3302, %v3304
      %v3333 = vadd.f32 %v3305, %v3307
      %v3334 = vadd.f32 %v3306, %v3308
      %v3335 = vadd.f32 %v3309, %v3311
      %v3336 = vadd.f32 %v3310, %v3312
      %v3337 = vadd.f32 %v3313, %v3315
      %v3338 = vadd.f32 %v3314, %v3316
      %v3339 = vadd.f32 %v3317, %v3319
      %v3340 = vadd.f32 %v3318, %v3320
      %v3341 = vadd.f32 %v3321, %v3323
      %v3342 = vadd.f32 %v3322, %v3324
      %v3343 = vadd.f32 %v3325, %v3327
      %v3344 = vadd.f32 %v3326, %v3328
      %v3345 = vmul.f32 %v3329, 0.25
      %v3346 = vmul.f32 %v3330, 0.25
      %v3347 = vmul.f32 %v3331, 0.25
      %v3348 = vmul.f32 %v3332, 0.25
      %v3349 = vmul.f32 %v3333, 0.25
      %v3350 = vmul.f32 %v3334, 0.25
      %v3351 = vmul.f32 %v3335, 0.25
      %v3352 = vmul.f32 %v3336, 0.25
      %v3353 = vmul.f32 %v3337, 0.25
      %v3354 = vmul.f32 %v3338, 0.25
      %v3355 = vmul.f32 %v3339, 0.25
      %v3356 = vmul.f32 %v3340, 0.25
      %v3357 = vmul.f32 %v3341, 0.25
      %v3358 = vmul.f32 %v3342, 0.25
      %v3359 = vmul.f32 %v3343, 0.25
      %v3360 = vmul.f32 %v3344, 0.25
      %v3361 = vpack.c.bf16 %v3345, %v3345
      %v3362 = vpack.c.bf16 %v3346, %v3346
      %v3363 = vpack.c.bf16 %v3347, %v3347
      %v3364 = vpack.c.bf16 %v3348, %v3348
      %v3365 = vpack.c.bf16 %v3349, %v3349
      %v3366 = vpack.c.bf16 %v3350, %v3350
      %v3367 = vpack.c.bf16 %v3351, %v3351
      %v3368 = vpack.c.bf16 %v3352, %v3352
      %v3369 = vpack.c.bf16 %v3353, %v3353
      %v3370 = vpack.c.bf16 %v3354, %v3354
      %v3371 = vpack.c.bf16 %v3355, %v3355
      %v3372 = vpack.c.bf16 %v3356, %v3356
      %v3373 = vpack.c.bf16 %v3357, %v3357
      %v3374 = vpack.c.bf16 %v3358, %v3358
      %v3375 = vpack.c.bf16 %v3359, %v3359
      %v3376 = vpack.c.bf16 %v3360, %v3360
      %3377 = vst.msk [vmem:[%s508] sm:$0xf] %vm3120, %v3361
      %3378 = vst.msk [vmem:[%s508 + $0x4] sm:$0xf] %vm3120, %v3362
      %3379 = vst.msk [vmem:[%s508 + $0x8] sm:$0xf] %vm3120, %v3363
      %3380 = vst.msk [vmem:[%s508 + $0xc] sm:$0xf] %vm3120, %v3364
      %3381 = vst.msk [vmem:[%s508 + $0x10] sm:$0xf] %vm3120, %v3365
      %3382 = vst.msk [vmem:[%s508 + $0x14] sm:$0xf] %vm3120, %v3366
      %3383 = vst.msk [vmem:[%s508 + $0x18] sm:$0xf] %vm3120, %v3367
      %3384 = vst.msk [vmem:[%s508 + $0x1c] sm:$0xf] %vm3120, %v3368
      %3385 = vst.msk [vmem:[%s508 + $0x20] sm:$0xf] %vm3120, %v3369
      %3386 = vst.msk [vmem:[%s508 + $0x24] sm:$0xf] %vm3120, %v3370
      %3387 = vst.msk [vmem:[%s508 + $0x28] sm:$0xf] %vm3120, %v3371
      %3388 = vst.msk [vmem:[%s508 + $0x2c] sm:$0xf] %vm3120, %v3372
      %3389 = vst.msk [vmem:[%s508 + $0x30] sm:$0xf] %vm3120, %v3373
      %3390 = vst.msk [vmem:[%s508 + $0x34] sm:$0xf] %vm3120, %v3374
      %3391 = vst.msk [vmem:[%s508 + $0x38] sm:$0xf] %vm3120, %v3375
      %3392 = vst.msk [vmem:[%s508 + $0x3c] sm:$0xf] %vm3120, %v3376
      %s3393 = smul.u32 8, %s25
      %p3394 = scmp.lt.s32.totalorder %s24, 1
      %s3395 = scalar_select %p3394, %s24, 1
      %p3396 = scmp.lt.s32.totalorder %s3393, 7
      %s3397 = scalar_select %p3396, %s3393, 7
      %s3398 = smul.addr %s3397, 2
      %s3399 = smul.addr %s3395, 16
      %s3400 = sadd.s32 %s3398, %s3399
      %s3401 = smul.addr %s3400, 4
      %s3402 = scalar_lea.vmem %s7, %s3401
      %s3403 = smul.u32 8, %s25
      %p3404 = scmp.lt.s32.totalorder %s24, 1
      %s3405 = scalar_select %p3404, %s24, 1
      %p3406 = scmp.lt.s32.totalorder %s3403, 7
      %s3407 = scalar_select %p3406, %s3403, 7
      %s3408 = smul.addr %s3407, 2
      %s3409 = smul.addr %s3405, 16
      %s3410 = sadd.s32 %s3408, %s3409
      %s3411 = smul.addr %s3410, 4
      %s3412 = scalar_lea.vmem %s8, %s3411
      // Predicated region
      $region49: #{tpu_custom_call.1} parent=47 // pred_check
        %p3413 = pneg %p236
      $region50: #{tpu_custom_call.1} parent=47 // pred_check_branch
        %3415 = sbr.rel (%p3413) target = $region52
      $region51: #{tpu_custom_call.1} parent=47 // pred_region
        %s3416 = smul.u32 8, %s25
      $region52: #{tpu_custom_call.1} parent=47 // pred_fallthru
        _
      // Predicated region
      $region53: #{tpu_custom_call.1} parent=47 // pred_check
        %p3417 = pneg %p264
      $region54: #{tpu_custom_call.1} parent=47 // pred_check_branch
        %3419 = sbr.rel (%p3417) target = $region56
      $region55: #{tpu_custom_call.1} parent=47 // pred_region
        %s3420 = smul.u32 8, %s25
      $region56: #{tpu_custom_call.1} parent=47 // pred_fallthru
        _
    $region48: #{tpu_custom_call.1} parent=5 // pred_fallthru
      _
    %p3421 = scmp.le.s32.totalorder 2, %s15
    // Predicated region
    $region57: #{tpu_custom_call.1} parent=5 // pred_check
      %p3422 = pneg %p3421
    $region58: #{tpu_custom_call.1} parent=5 // pred_check_branch
      %3424 = sbr.rel (%p3422) target = $region60
    $region59: #{tpu_custom_call.1} parent=5 // pred_region
      %s3425 = ssub.s32 %s15, 2
      // Predicated region
      $region61: #{tpu_custom_call.1} parent=59 // pred_check
        %p3426 = pneg %p242
      $region62: #{tpu_custom_call.1} parent=59 // pred_check_branch
        %3428 = sbr.rel (%p3426) target = $region64
      $region63: #{tpu_custom_call.1} parent=59 // pred_region
        %s3429 = smul.u32 8, %s27
        %p3430 = scmp.lt.s32.totalorder %s26, 1
        %s3431 = scalar_select %p3430, %s26, 1
        %p3432 = scmp.lt.s32.totalorder %s3429, 7
        %s3433 = scalar_select %p3432, %s3429, 7
        %s3434 = smul.addr %s3433, 2
        %s3435 = smul.addr %s3431, 16
        %s3436 = sadd.s32 %s3434, %s3435
        %s3437 = smul.addr %s3436, 4
        %s3438 = scalar_lea.vmem %s7, %s3437
      $region64: #{tpu_custom_call.1} parent=59 // pred_fallthru
        _
      // Predicated region
      $region65: #{tpu_custom_call.1} parent=59 // pred_check
        %p3439 = pneg %p270
      $region66: #{tpu_custom_call.1} parent=59 // pred_check_branch
        %3441 = sbr.rel (%p3439) target = $region68
      $region67: #{tpu_custom_call.1} parent=59 // pred_region
        %s3442 = smul.u32 8, %s27
        %p3443 = scmp.lt.s32.totalorder %s26, 1
        %s3444 = scalar_select %p3443, %s26, 1
        %p3445 = scmp.lt.s32.totalorder %s3442, 7
        %s3446 = scalar_select %p3445, %s3442, 7
        %s3447 = smul.addr %s3446, 2
        %s3448 = smul.addr %s3444, 16
        %s3449 = sadd.s32 %s3447, %s3448
        %s3450 = smul.addr %s3449, 4
        %s3451 = scalar_lea.vmem %s8, %s3450
      $region68: #{tpu_custom_call.1} parent=59 // pred_fallthru
        _
    $region60: #{tpu_custom_call.1} parent=5 // pred_fallthru
      _
  $region6: #{tpu_custom_call.1} parent=0 // loop_footer
    %s19 = sadd.s32 1, %s15
  $region7: #{tpu_custom_call.1} parent=0 // loop_footer_branch
    %14 = sbr.rel target = $region3
  $region8: #{tpu_custom_call.1} parent=0 // loop_exit
    _

</llo_original>
